<compile_context>
chip_gen: v5e
topology: v5e:2x2
jax: 0.10.0
libtpu: 0.0.40
codegen_flags: <defaults>
</compile_context>

<pallas_src>
import jax
import jax.numpy as jnp
from jax.experimental import pallas as pl
from jax.experimental.pallas import tpu as pltpu

EPS = 1e-8


def dain_full_kernel(x_ref, wm_t_ref, ws_t_ref, wg_t_ref, bg_ref,
                     out_ref, gate_ref):
    """One grid step owns Bb batch elements: x block is (Bb, D, T)."""
    x = x_ref[...].astype(jnp.float32)            # (Bb, D, T)
    inv_T = jnp.float32(1.0 / x.shape[-1])

    # ---- single statistics pass over the big tensor -------------------------
    m = jnp.sum(x, axis=-1) * inv_T               # (Bb, D)  E[x]
    q = jnp.sum(x * x, axis=-1) * inv_T           # (Bb, D)  E[x^2]

    wm_t = wm_t_ref[...]                          # (D, D)  mean_layer.weight.T
    ws_t = ws_t_ref[...]                          # (D, D)  scaling_layer.weight.T
    wg_t = wg_t_ref[...]                          # (D, D)  gating_layer.weight.T
    bg = bg_ref[...]                              # (1, D)  gating_layer.bias

    # ---- stage 1: adaptive mean removal (small (Bb,D)@(D,D) matmul) ---------
    a = jnp.dot(m, wm_t, preferred_element_type=jnp.float32)        # (Bb, D)

    # ---- stage 2: adaptive scaling ------------------------------------------
    # mean((x - a)^2 over T) == E[x^2] - 2*a*E[x] + a^2 (a constant across T).
    var = q - 2.0 * a * m + a * a
    var = jnp.maximum(var, 0.0)                   # guard against cancellation
    std = jnp.sqrt(var + EPS)
    s = jnp.dot(std, ws_t, preferred_element_type=jnp.float32)      # (Bb, D)
    s = jnp.where(s <= EPS, jnp.float32(1.0), s)
    inv_s = pl.reciprocal(s, approx=False)        # small (Bb,D) reciprocal only

    # ---- stage 3: adaptive gating --------------------------------------------
    # mean of the normalized tensor over T is (E[x] - a) * inv_s.
    avg2 = (m - a) * inv_s
    gate = jax.nn.sigmoid(
        jnp.dot(avg2, wg_t, preferred_element_type=jnp.float32) + bg)  # (Bb, D)

    # ---- fused output pass: out = (x - a) * inv_s * gate ---------------------
    scale = inv_s * gate                          # (Bb, D)
    shift = a * scale                             # (Bb, D)
    out_ref[...] = (x * scale[:, :, None] - shift[:, :, None]).astype(out_ref.dtype)
    gate_ref[...] = gate.astype(gate_ref.dtype)


def _pick_batch_block(B, per_batch_bytes, budget_bytes=4 << 20):
    """Largest divisor of B whose x-block fits the per-buffer budget.

    Prefer blocks that leave >=2 grid steps (v7x megacore) and are
    sublane-friendly (multiple of 8); otherwise take the largest that fits.
    """
    candidates = [bb for bb in range(1, B + 1)
                  if B % bb == 0 and bb * per_batch_bytes <= budget_bytes]
    if not candidates:
        return 1
    preferred = [bb for bb in candidates if (B // bb) >= 2 and bb % 8 == 0]
    return max(preferred) if preferred else max(candidates)


def dain_layer_full(x, w_mean, w_scale, w_gate, b_gate):
    """Pallas wrapper.  x: (B, D, T).  Returns (x_out (B,D,T), gate (B,D))."""
    B, D, T = x.shape
    itemsize = jnp.dtype(x.dtype).itemsize
    Bb = _pick_batch_block(B, D * T * itemsize)

    # Pre-transpose weights so the kernel does stats @ W.T directly (no in-
    # kernel transpose), and pass the gate bias as a lane-dense (1, D) row.
    wm_t = jnp.asarray(w_mean, jnp.float32).T
    ws_t = jnp.asarray(w_scale, jnp.float32).T
    wg_t = jnp.asarray(w_gate, jnp.float32).T
    bg_row = jnp.asarray(b_gate, jnp.float32).reshape(1, D)

    out, gate = pl.pallas_call(
        dain_full_kernel,
        out_shape=(
            jax.ShapeDtypeStruct((B, D, T), x.dtype),
            jax.ShapeDtypeStruct((B, D), x.dtype),
        ),
        grid=(B // Bb,),
        in_specs=[
            pl.BlockSpec((Bb, D, T), lambda b: (b, 0, 0)),   # x
            pl.BlockSpec((D, D), lambda b: (0, 0)),          # mean weight (T)
            pl.BlockSpec((D, D), lambda b: (0, 0)),          # scale weight (T)
            pl.BlockSpec((D, D), lambda b: (0, 0)),          # gate weight (T)
            pl.BlockSpec((1, D), lambda b: (0, 0)),          # gate bias row
        ],
        out_specs=(
            pl.BlockSpec((Bb, D, T), lambda b: (b, 0, 0)),   # x_out
            pl.BlockSpec((Bb, D), lambda b: (b, 0)),         # gate (lane-dense)
        ),
        compiler_params=pltpu.CompilerParams(
            dimension_semantics=("parallel",)),
    )(x, wm_t, ws_t, wg_t, bg_row)

    return out, gate


def dain_layer_ref(x, w_mean, w_scale, w_gate, b_gate):
    """Pure-JAX reference mirroring the PyTorch 'full' mode forward."""
    avg = jnp.mean(x, axis=2)                              # (B, D)
    adaptive_avg = avg @ w_mean.T
    x = x - adaptive_avg[:, :, None]
    std = jnp.sqrt(jnp.mean(x ** 2, axis=2) + EPS)
    adaptive_std = std @ w_scale.T
    adaptive_std = jnp.where(adaptive_std <= EPS, 1.0, adaptive_std)
    x = x / adaptive_std[:, :, None]
    avg2 = jnp.mean(x, axis=2)
    gate = jax.nn.sigmoid(avg2 @ w_gate.T + b_gate)
    x = x * gate[:, :, None]
    return x, gate


if __name__ == "__main__":
    B, D, T = 2, 144, 32   # input_dim=144 per module default; small batch/seq

    key = jax.random.PRNGKey(0)
    kx, kw, kb = jax.random.split(key, 3)

    x = jax.random.normal(kx, (B, D, T), dtype=jnp.float32) * 2.0 + 0.5

    # Deterministic parameter init (matching __init__ shapes):
    w_mean = jnp.eye(D, dtype=jnp.float32)       # identity init
    w_scale = jnp.eye(D, dtype=jnp.float32)      # identity init
    bound = 1.0 / jnp.sqrt(jnp.float32(D))
    w_gate = jax.random.uniform(kw, (D, D), jnp.float32, -bound, bound)
    b_gate = jax.random.uniform(kb, (D,), jnp.float32, -bound, bound)

    out, gate = dain_layer_full(x, w_mean, w_scale, w_gate, b_gate)
    out = jax.block_until_ready(out)
    gate = jax.block_until_ready(gate)

    out_ref, gate_ref = dain_layer_ref(x, w_mean, w_scale, w_gate, b_gate)

    assert out.shape == (B, D, T) and gate.shape == (B, D)
    assert jnp.allclose(out, out_ref, atol=3e-5, rtol=3e-5)
    assert jnp.allclose(gate, gate_ref, atol=3e-5, rtol=3e-5)

    print("KERNEL_OK")
</pallas_src>

<mosaic_0001>
module attributes {stable_mosaic.version = 11 : i64} {
  func.func @dain_full_kernel(%arg0: i32, %arg1: memref<2x144x32xf32, #tpu.memory_space<vmem>>, %arg2: memref<144x144xf32, #tpu.memory_space<vmem>>, %arg3: memref<144x144xf32, #tpu.memory_space<vmem>>, %arg4: memref<144x144xf32, #tpu.memory_space<vmem>>, %arg5: memref<1x144xf32, #tpu.memory_space<vmem>>, %arg6: memref<2x144x32xf32, #tpu.memory_space<vmem>>, %arg7: memref<2x144xf32, #tpu.memory_space<vmem>>) attributes {dimension_semantics = [#tpu.dimension_semantics<parallel>], iteration_bounds = array<i64: 1>, scalar_prefetch = 0 : i64, scratch_operands = 0 : i64, tpu.core_type = #tpu.core_type<tc>, window_params = [{transform_indices = @transform_0, window_bounds = array<i64: 2, 144, 32>}, {pipeline_mode = #tpu.pipeline_mode<synchronous>, transform_indices = @transform_1, window_bounds = array<i64: 144, 144>}, {pipeline_mode = #tpu.pipeline_mode<synchronous>, transform_indices = @transform_2, window_bounds = array<i64: 144, 144>}, {pipeline_mode = #tpu.pipeline_mode<synchronous>, transform_indices = @transform_3, window_bounds = array<i64: 144, 144>}, {pipeline_mode = #tpu.pipeline_mode<synchronous>, transform_indices = @transform_4, window_bounds = array<i64: 1, 144>}, {transform_indices = @transform_5, window_bounds = array<i64: 2, 144, 32>}, {transform_indices = @transform_6, window_bounds = array<i64: 2, 144>}]} {
    %c0 = arith.constant 0 : index
    %c0_0 = arith.constant 0 : index
    %c0_1 = arith.constant 0 : index
    %0 = vector.load %arg1[%c0, %c0_0, %c0_1] : memref<2x144x32xf32, #tpu.memory_space<vmem>>, vector<2x144x32xf32>
    %cst = arith.constant dense<0.000000e+00> : vector<2x144xf32>
    %1 = vector.multi_reduction <add>, %0, %cst [2] : vector<2x144x32xf32> to vector<2x144xf32>
    %cst_2 = arith.constant 3.125000e-02 : f32
    %2 = vector.broadcast %cst_2 : f32 to vector<2x144xf32>
    %3 = arith.mulf %1, %2 : vector<2x144xf32>
    %4 = arith.mulf %0, %0 : vector<2x144x32xf32>
    %cst_3 = arith.constant dense<0.000000e+00> : vector<2x144xf32>
    %5 = vector.multi_reduction <add>, %4, %cst_3 [2] : vector<2x144x32xf32> to vector<2x144xf32>
    %cst_4 = arith.constant 3.125000e-02 : f32
    %6 = vector.broadcast %cst_4 : f32 to vector<2x144xf32>
    %7 = arith.mulf %5, %6 : vector<2x144xf32>
    %c0_5 = arith.constant 0 : index
    %c0_6 = arith.constant 0 : index
    %8 = vector.load %arg2[%c0_5, %c0_6] : memref<144x144xf32, #tpu.memory_space<vmem>>, vector<144x144xf32>
    %c0_7 = arith.constant 0 : index
    %c0_8 = arith.constant 0 : index
    %9 = vector.load %arg3[%c0_7, %c0_8] : memref<144x144xf32, #tpu.memory_space<vmem>>, vector<144x144xf32>
    %c0_9 = arith.constant 0 : index
    %c0_10 = arith.constant 0 : index
    %10 = vector.load %arg4[%c0_9, %c0_10] : memref<144x144xf32, #tpu.memory_space<vmem>>, vector<144x144xf32>
    %c0_11 = arith.constant 0 : index
    %c0_12 = arith.constant 0 : index
    %11 = vector.load %arg5[%c0_11, %c0_12] : memref<1x144xf32, #tpu.memory_space<vmem>>, vector<1x144xf32>
    %cst_13 = arith.constant dense<0.000000e+00> : vector<2x144xf32>
    %12 = tpu.matmul %3, %8, %cst_13 {dimension_numbers = #tpu.dot_dimension_numbers<[1], [0], [0], [1], [0, 0, 1, 1], [], []>} : vector<2x144xf32>, vector<144x144xf32>, vector<2x144xf32> -> vector<2x144xf32>
    %cst_14 = arith.constant 2.000000e+00 : f32
    %13 = vector.broadcast %cst_14 : f32 to vector<2x144xf32>
    %14 = arith.mulf %13, %12 : vector<2x144xf32>
    %15 = arith.mulf %14, %3 : vector<2x144xf32>
    %16 = arith.subf %7, %15 : vector<2x144xf32>
    %17 = arith.mulf %12, %12 : vector<2x144xf32>
    %18 = arith.addf %16, %17 : vector<2x144xf32>
    %cst_15 = arith.constant 0.000000e+00 : f32
    %19 = vector.broadcast %cst_15 : f32 to vector<2x144xf32>
    %20 = arith.maximumf %18, %19 : vector<2x144xf32>
    %cst_16 = arith.constant 9.99999993E-9 : f32
    %21 = vector.broadcast %cst_16 : f32 to vector<2x144xf32>
    %22 = arith.addf %20, %21 : vector<2x144xf32>
    %23 = math.sqrt %22 : vector<2x144xf32>
    %cst_17 = arith.constant dense<0.000000e+00> : vector<2x144xf32>
    %24 = tpu.matmul %23, %9, %cst_17 {dimension_numbers = #tpu.dot_dimension_numbers<[1], [0], [0], [1], [0, 0, 1, 1], [], []>} : vector<2x144xf32>, vector<144x144xf32>, vector<2x144xf32> -> vector<2x144xf32>
    %cst_18 = arith.constant 9.99999993E-9 : f32
    %25 = vector.broadcast %cst_18 : f32 to vector<2x144xf32>
    %26 = arith.cmpf ole, %24, %25 : vector<2x144xf32>
    %cst_19 = arith.constant 1.000000e+00 : f32
    %27 = vector.broadcast %cst_19 : f32 to vector<2x144xf32>
    %28 = arith.select %26, %27, %24 : vector<2x144xi1>, vector<2x144xf32>
    %29 = tpu.reciprocal %28 : vector<2x144xf32> -> vector<2x144xf32>
    %30 = arith.subf %3, %12 : vector<2x144xf32>
    %31 = arith.mulf %30, %29 : vector<2x144xf32>
    %cst_20 = arith.constant dense<0.000000e+00> : vector<2x144xf32>
    %32 = tpu.matmul %31, %10, %cst_20 {dimension_numbers = #tpu.dot_dimension_numbers<[1], [0], [0], [1], [0, 0, 1, 1], [], []>} : vector<2x144xf32>, vector<144x144xf32>, vector<2x144xf32> -> vector<2x144xf32>
    %33 = vector.broadcast %11 : vector<1x144xf32> to vector<2x144xf32>
    %34 = arith.addf %32, %33 : vector<2x144xf32>
    %35 = arith.negf %34 : vector<2x144xf32>
    %36 = math.exp %35 : vector<2x144xf32>
    %cst_21 = arith.constant 1.000000e+00 : f32
    %37 = vector.broadcast %cst_21 : f32 to vector<2x144xf32>
    %38 = arith.addf %37, %36 : vector<2x144xf32>
    %39 = arith.divf %37, %38 : vector<2x144xf32>
    %40 = arith.mulf %29, %39 : vector<2x144xf32>
    %41 = arith.mulf %12, %40 : vector<2x144xf32>
    %42 = vector.shape_cast %40 : vector<2x144xf32> to vector<2x144x1xf32>
    %43 = vector.broadcast %42 : vector<2x144x1xf32> to vector<2x144x32xf32>
    %44 = arith.mulf %0, %43 : vector<2x144x32xf32>
    %45 = vector.shape_cast %41 : vector<2x144xf32> to vector<2x144x1xf32>
    %46 = vector.broadcast %45 : vector<2x144x1xf32> to vector<2x144x32xf32>
    %47 = arith.subf %44, %46 : vector<2x144x32xf32>
    %c0_22 = arith.constant 0 : index
    %c0_23 = arith.constant 0 : index
    %c0_24 = arith.constant 0 : index
    %48 = vector.load %arg6[%c0_22, %c0_23, %c0_24] : memref<2x144x32xf32, #tpu.memory_space<vmem>>, vector<2x144x32xf32>
    tpu.vector_store %arg6[%c0_22, %c0_23, %c0_24], %47 {strides = array<i32>} : memref<2x144x32xf32, #tpu.memory_space<vmem>>, vector<2x144x32xf32>,
    %c0_25 = arith.constant 0 : index
    %c0_26 = arith.constant 0 : index
    %49 = vector.load %arg7[%c0_25, %c0_26] : memref<2x144xf32, #tpu.memory_space<vmem>>, vector<2x144xf32>
    tpu.vector_store %arg7[%c0_25, %c0_26], %39 {strides = array<i32>} : memref<2x144xf32, #tpu.memory_space<vmem>>, vector<2x144xf32>,
    return
  }
  func.func @transform_0(%arg0: i32) -> (i32, i32, i32) {
    %c0_i32 = arith.constant 0 : i32
    %c0_i32_0 = arith.constant 0 : i32
    %c0_i32_1 = arith.constant 0 : i32
    return %arg0, %c0_i32, %c0_i32_0 : i32, i32, i32
  }
  func.func @transform_1(%arg0: i32) -> (i32, i32) {
    %c0_i32 = arith.constant 0 : i32
    %c0_i32_0 = arith.constant 0 : i32
    %c0_i32_1 = arith.constant 0 : i32
    return %c0_i32, %c0_i32_0 : i32, i32
  }
  func.func @transform_2(%arg0: i32) -> (i32, i32) {
    %c0_i32 = arith.constant 0 : i32
    %c0_i32_0 = arith.constant 0 : i32
    %c0_i32_1 = arith.constant 0 : i32
    return %c0_i32, %c0_i32_0 : i32, i32
  }
  func.func @transform_3(%arg0: i32) -> (i32, i32) {
    %c0_i32 = arith.constant 0 : i32
    %c0_i32_0 = arith.constant 0 : i32
    %c0_i32_1 = arith.constant 0 : i32
    return %c0_i32, %c0_i32_0 : i32, i32
  }
  func.func @transform_4(%arg0: i32) -> (i32, i32) {
    %c0_i32 = arith.constant 0 : i32
    %c0_i32_0 = arith.constant 0 : i32
    %c0_i32_1 = arith.constant 0 : i32
    return %c0_i32, %c0_i32_0 : i32, i32
  }
  func.func @transform_5(%arg0: i32) -> (i32, i32, i32) {
    %c0_i32 = arith.constant 0 : i32
    %c0_i32_0 = arith.constant 0 : i32
    %c0_i32_1 = arith.constant 0 : i32
    return %arg0, %c0_i32, %c0_i32_0 : i32, i32, i32
  }
  func.func @transform_6(%arg0: i32) -> (i32, i32) {
    %c0_i32 = arith.constant 0 : i32
    %c0_i32_0 = arith.constant 0 : i32
    return %arg0, %c0_i32 : i32, i32
  }
}

</mosaic_0001>

<llo_original>
// kernel: tpu_custom_call.1
$region0: #{tpu_custom_call.1}
  #allocation0 [shape = 'u32[]', space=smem, size = 0x4, offset = 0x4, fixed_abs, tag = 'smem constant byte address 0x4 - core index']
  #allocation1 [shape = 'u32[72,128]{1,0:T(1,128)}', space=vmem, size = 0x9000, scoped, tag = 'internal scratch']
  %s0 = inlined_call_operand.vmem [shape: f32[2,144,32], index: 0, kind: input, shape index: {}]
  %s1 = inlined_call_operand.vmem [shape: f32[144,144], index: 1, kind: input, shape index: {}]
  %s2 = inlined_call_operand.hbm [shape: f32[144,144], index: 2, kind: input, shape index: {}]
  %s3 = inlined_call_operand.hbm [shape: f32[144,144], index: 3, kind: input, shape index: {}]
  %s4 = inlined_call_operand.vmem [shape: f32[1,144], index: 4, kind: input, shape index: {}]
  %s5 = inlined_call_operand.vmem [shape: f32[2,144,32], index: 5, kind: output, shape index: {0}]
  %s6 = inlined_call_operand.hbm [shape: f32[2,144], index: 6, kind: output, shape index: {1}]
  %7 = xla_tuple %s5, %s6
  %s8 = sld [smem:[#allocation0]]
  $region46: #{tpu_custom_call.1} parent=0
    _
  %s10 = ssub.s32 1, %s8
  %s11 = scalar_select 0, %s10, %s8
  $region1: #{tpu_custom_call.1} parent=0
    #allocation2 [shape = 'u8[147456]{0}', space=vmem, size = 0x24000, scoped, tag = 'input window, operand 2, single buffered']
    #allocation3 [shape = 's32[1]{0}', space=sflag, size = 0x4, scoped, tag = 'scoped memory for tpu_custom_call.1']
    #allocation4 [shape = 's32[1]{0}', space=sflag, size = 0x4, scoped, tag = 'scoped memory for tpu_custom_call.1']
    #allocation5 [shape = 'u8[147456]{0}', space=vmem, size = 0x24000, scoped, tag = 'input window, operand 3, single buffered']
    #allocation6 [shape = 's32[1]{0}', space=sflag, size = 0x4, scoped, tag = 'scoped memory for tpu_custom_call.1']
    #allocation7 [shape = 'u8[2048]{0}', space=vmem, size = 0x800, scoped, tag = 'output window, operand 1, single buffered']
    %12 = vsyncpa [#allocation3], 0
    %13 = vsyncpa [#allocation6], 0
    %14 = vsyncpa [#allocation4], 0
    // Predicated region
    $region2: #{tpu_custom_call.1} parent=1 // pred_check
      _
    $region3: #{tpu_custom_call.1} parent=1 // pred_check_branch
      %16 = sbr.rel (0) target = $region5
    $region4: #{tpu_custom_call.1} parent=1 // pred_region
      _
    $region5: #{tpu_custom_call.1} parent=1 // pred_fallthru
      _
    // Predicated region
    $region6: #{tpu_custom_call.1} parent=1 // pred_check
      _
    $region7: #{tpu_custom_call.1} parent=1 // pred_check_branch
      %18 = sbr.rel (0) target = $region9
    $region8: #{tpu_custom_call.1} parent=1 // pred_region
      _
    $region9: #{tpu_custom_call.1} parent=1 // pred_fallthru
      _
    // Predicated region
    $region10: #{tpu_custom_call.1} parent=1 // pred_check
      _
    $region11: #{tpu_custom_call.1} parent=1 // pred_check_branch
      %20 = sbr.rel (0) target = $region13
    $region12: #{tpu_custom_call.1} parent=1 // pred_region
      %22 = vsyncadd [#allocation3], 0
      %s23 = sshll.u32 %s2, 4
      %s24 = int_to_ptr.hbm [resolvable:$true] %s23
      %s25 = sshll.u32 [#allocation2], 4
      %s26 = int_to_ptr.vmem [resolvable:$true] %s25
      %31 = dma.hbm_to_vmem [thread:$0]  %s24, 4608, %s26, [#allocation3], 256, 256, 16
    $region13: #{tpu_custom_call.1} parent=1 // pred_fallthru
      _
    // Predicated region
    $region14: #{tpu_custom_call.1} parent=1 // pred_check
      _
    $region15: #{tpu_custom_call.1} parent=1 // pred_check_branch
      %33 = sbr.rel (0) target = $region17
    $region16: #{tpu_custom_call.1} parent=1 // pred_region
      %35 = vsyncadd [#allocation6], 0
      %s36 = sshll.u32 %s3, 4
      %s37 = int_to_ptr.hbm [resolvable:$true] %s36
      %s38 = sshll.u32 [#allocation5], 4
      %s39 = int_to_ptr.vmem [resolvable:$true] %s38
      %44 = dma.hbm_to_vmem [thread:$0]  %s37, 4608, %s39, [#allocation6], 256, 256, 16
    $region17: #{tpu_custom_call.1} parent=1 // pred_fallthru
      _
    // Predicated region
    $region18: #{tpu_custom_call.1} parent=1 // pred_check
      _
    $region19: #{tpu_custom_call.1} parent=1 // pred_check_branch
      %46 = sbr.rel (0) target = $region21
    $region20: #{tpu_custom_call.1} parent=1 // pred_region
      _
    $region21: #{tpu_custom_call.1} parent=1 // pred_fallthru
      _
    // Predicated region
    $region22: #{tpu_custom_call.1} parent=1 // pred_check
      _
    $region23: #{tpu_custom_call.1} parent=1 // pred_check_branch
      %48 = sbr.rel (0) target = $region25
    $region24: #{tpu_custom_call.1} parent=1 // pred_region
      %50 = dma.done [#allocation3], 4608
    $region25: #{tpu_custom_call.1} parent=1 // pred_fallthru
      _
    // Predicated region
    $region26: #{tpu_custom_call.1} parent=1 // pred_check
      _
    $region27: #{tpu_custom_call.1} parent=1 // pred_check_branch
      %52 = sbr.rel (0) target = $region29
    $region28: #{tpu_custom_call.1} parent=1 // pred_region
      %54 = dma.done [#allocation6], 4608
    $region29: #{tpu_custom_call.1} parent=1 // pred_fallthru
      _
    %v55 = vld [vmem:[%s0] sm:$0xff]
    %v56 = vld [vmem:[%s0 + $0x8] sm:$0xff]
    %v57 = vld [vmem:[%s0 + $0x10] sm:$0xff]
    %v58 = vld [vmem:[%s0 + $0x18] sm:$0xff]
    %v59 = vld [vmem:[%s0 + $0x20] sm:$0xff]
    %v60 = vld [vmem:[%s0 + $0x28] sm:$0xff]
    %v61 = vld [vmem:[%s0 + $0x30] sm:$0xff]
    %v62 = vld [vmem:[%s0 + $0x38] sm:$0xff]
    %v63 = vld [vmem:[%s0 + $0x40] sm:$0xff]
    %v64 = vld [vmem:[%s0 + $0x48] sm:$0xff]
    %v65 = vld [vmem:[%s0 + $0x50] sm:$0xff]
    %v66 = vld [vmem:[%s0 + $0x58] sm:$0xff]
    %v67 = vld [vmem:[%s0 + $0x60] sm:$0xff]
    %v68 = vld [vmem:[%s0 + $0x68] sm:$0xff]
    %v69 = vld [vmem:[%s0 + $0x70] sm:$0xff]
    %v70 = vld [vmem:[%s0 + $0x78] sm:$0xff]
    %v71 = vld [vmem:[%s0 + $0x80] sm:$0xff]
    %v72 = vld [vmem:[%s0 + $0x88] sm:$0xff]
    %v73 = vld [vmem:[%s0 + $0x90] sm:$0xff]
    %v74 = vld [vmem:[%s0 + $0x98] sm:$0xff]
    %v75 = vld [vmem:[%s0 + $0xa0] sm:$0xff]
    %v76 = vld [vmem:[%s0 + $0xa8] sm:$0xff]
    %v77 = vld [vmem:[%s0 + $0xb0] sm:$0xff]
    %v78 = vld [vmem:[%s0 + $0xb8] sm:$0xff]
    %v79 = vld [vmem:[%s0 + $0xc0] sm:$0xff]
    %v80 = vld [vmem:[%s0 + $0xc8] sm:$0xff]
    %v81 = vld [vmem:[%s0 + $0xd0] sm:$0xff]
    %v82 = vld [vmem:[%s0 + $0xd8] sm:$0xff]
    %v83 = vld [vmem:[%s0 + $0xe0] sm:$0xff]
    %v84 = vld [vmem:[%s0 + $0xe8] sm:$0xff]
    %v85 = vld [vmem:[%s0 + $0xf0] sm:$0xff]
    %v86 = vld [vmem:[%s0 + $0xf8] sm:$0xff]
    %v87 = vld [vmem:[%s0 + $0x100] sm:$0xff]
    %v88 = vld [vmem:[%s0 + $0x108] sm:$0xff]
    %v89 = vld [vmem:[%s0 + $0x110] sm:$0xff]
    %v90 = vld [vmem:[%s0 + $0x118] sm:$0xff]
    %vm91 = vcmask 261120
    %v92 = vsel %vm91, %v55, 0.0
    %93 = vadd.xlane.f32.xlu0 %v92
    %v94 = vpop.xlane.xlu0 %93
    %v95 = vsel %vm91, %v56, 0.0
    %96 = vadd.xlane.f32.xlu0 %v95
    %v97 = vpop.xlane.xlu0 %96
    %v98 = vsel %vm91, %v57, 0.0
    %99 = vadd.xlane.f32.xlu0 %v98
    %v100 = vpop.xlane.xlu0 %99
    %v101 = vsel %vm91, %v58, 0.0
    %102 = vadd.xlane.f32.xlu0 %v101
    %v103 = vpop.xlane.xlu0 %102
    %v104 = vsel %vm91, %v59, 0.0
    %105 = vadd.xlane.f32.xlu0 %v104
    %v106 = vpop.xlane.xlu0 %105
    %v107 = vsel %vm91, %v60, 0.0
    %108 = vadd.xlane.f32.xlu0 %v107
    %v109 = vpop.xlane.xlu0 %108
    %v110 = vsel %vm91, %v61, 0.0
    %111 = vadd.xlane.f32.xlu0 %v110
    %v112 = vpop.xlane.xlu0 %111
    %v113 = vsel %vm91, %v62, 0.0
    %114 = vadd.xlane.f32.xlu0 %v113
    %v115 = vpop.xlane.xlu0 %114
    %v116 = vsel %vm91, %v63, 0.0
    %117 = vadd.xlane.f32.xlu0 %v116
    %v118 = vpop.xlane.xlu0 %117
    %v119 = vsel %vm91, %v64, 0.0
    %120 = vadd.xlane.f32.xlu0 %v119
    %v121 = vpop.xlane.xlu0 %120
    %v122 = vsel %vm91, %v65, 0.0
    %123 = vadd.xlane.f32.xlu0 %v122
    %v124 = vpop.xlane.xlu0 %123
    %v125 = vsel %vm91, %v66, 0.0
    %126 = vadd.xlane.f32.xlu0 %v125
    %v127 = vpop.xlane.xlu0 %126
    %v128 = vsel %vm91, %v67, 0.0
    %129 = vadd.xlane.f32.xlu0 %v128
    %v130 = vpop.xlane.xlu0 %129
    %v131 = vsel %vm91, %v68, 0.0
    %132 = vadd.xlane.f32.xlu0 %v131
    %v133 = vpop.xlane.xlu0 %132
    %v134 = vsel %vm91, %v69, 0.0
    %135 = vadd.xlane.f32.xlu0 %v134
    %v136 = vpop.xlane.xlu0 %135
    %v137 = vsel %vm91, %v70, 0.0
    %138 = vadd.xlane.f32.xlu0 %v137
    %v139 = vpop.xlane.xlu0 %138
    %v140 = vsel %vm91, %v71, 0.0
    %141 = vadd.xlane.f32.xlu0 %v140
    %v142 = vpop.xlane.xlu0 %141
    %v143 = vsel %vm91, %v72, 0.0
    %144 = vadd.xlane.f32.xlu0 %v143
    %v145 = vpop.xlane.xlu0 %144
    %v146 = vsel %vm91, %v73, 0.0
    %147 = vadd.xlane.f32.xlu0 %v146
    %v148 = vpop.xlane.xlu0 %147
    %v149 = vsel %vm91, %v74, 0.0
    %150 = vadd.xlane.f32.xlu0 %v149
    %v151 = vpop.xlane.xlu0 %150
    %v152 = vsel %vm91, %v75, 0.0
    %153 = vadd.xlane.f32.xlu0 %v152
    %v154 = vpop.xlane.xlu0 %153
    %v155 = vsel %vm91, %v76, 0.0
    %156 = vadd.xlane.f32.xlu0 %v155
    %v157 = vpop.xlane.xlu0 %156
    %v158 = vsel %vm91, %v77, 0.0
    %159 = vadd.xlane.f32.xlu0 %v158
    %v160 = vpop.xlane.xlu0 %159
    %v161 = vsel %vm91, %v78, 0.0
    %162 = vadd.xlane.f32.xlu0 %v161
    %v163 = vpop.xlane.xlu0 %162
    %v164 = vsel %vm91, %v79, 0.0
    %165 = vadd.xlane.f32.xlu0 %v164
    %v166 = vpop.xlane.xlu0 %165
    %v167 = vsel %vm91, %v80, 0.0
    %168 = vadd.xlane.f32.xlu0 %v167
    %v169 = vpop.xlane.xlu0 %168
    %v170 = vsel %vm91, %v81, 0.0
    %171 = vadd.xlane.f32.xlu0 %v170
    %v172 = vpop.xlane.xlu0 %171
    %v173 = vsel %vm91, %v82, 0.0
    %174 = vadd.xlane.f32.xlu0 %v173
    %v175 = vpop.xlane.xlu0 %174
    %v176 = vsel %vm91, %v83, 0.0
    %177 = vadd.xlane.f32.xlu0 %v176
    %v178 = vpop.xlane.xlu0 %177
    %v179 = vsel %vm91, %v84, 0.0
    %180 = vadd.xlane.f32.xlu0 %v179
    %v181 = vpop.xlane.xlu0 %180
    %v182 = vsel %vm91, %v85, 0.0
    %183 = vadd.xlane.f32.xlu0 %v182
    %v184 = vpop.xlane.xlu0 %183
    %v185 = vsel %vm91, %v86, 0.0
    %186 = vadd.xlane.f32.xlu0 %v185
    %v187 = vpop.xlane.xlu0 %186
    %v188 = vsel %vm91, %v87, 0.0
    %189 = vadd.xlane.f32.xlu0 %v188
    %v190 = vpop.xlane.xlu0 %189
    %v191 = vsel %vm91, %v88, 0.0
    %192 = vadd.xlane.f32.xlu0 %v191
    %v193 = vpop.xlane.xlu0 %192
    %v194 = vsel %vm91, %v89, 0.0
    %195 = vadd.xlane.f32.xlu0 %v194
    %v196 = vpop.xlane.xlu0 %195
    %v197 = vsel %vm91, %v90, 0.0
    %198 = vadd.xlane.f32.xlu0 %v197
    %v199 = vpop.xlane.xlu0 %198
    %v200 = vmul.f32 %v94, 0.03125
    %v201 = vmul.f32 %v97, 0.03125
    %v202 = vmul.f32 %v100, 0.03125
    %v203 = vmul.f32 %v103, 0.03125
    %v204 = vmul.f32 %v106, 0.03125
    %v205 = vmul.f32 %v109, 0.03125
    %v206 = vmul.f32 %v112, 0.03125
    %v207 = vmul.f32 %v115, 0.03125
    %v208 = vmul.f32 %v118, 0.03125
    %v209 = vmul.f32 %v121, 0.03125
    %v210 = vmul.f32 %v124, 0.03125
    %v211 = vmul.f32 %v127, 0.03125
    %v212 = vmul.f32 %v130, 0.03125
    %v213 = vmul.f32 %v133, 0.03125
    %v214 = vmul.f32 %v136, 0.03125
    %v215 = vmul.f32 %v139, 0.03125
    %v216 = vmul.f32 %v142, 0.03125
    %v217 = vmul.f32 %v145, 0.03125
    %v218 = vmul.f32 %v148, 0.03125
    %v219 = vmul.f32 %v151, 0.03125
    %v220 = vmul.f32 %v154, 0.03125
    %v221 = vmul.f32 %v157, 0.03125
    %v222 = vmul.f32 %v160, 0.03125
    %v223 = vmul.f32 %v163, 0.03125
    %v224 = vmul.f32 %v166, 0.03125
    %v225 = vmul.f32 %v169, 0.03125
    %v226 = vmul.f32 %v172, 0.03125
    %v227 = vmul.f32 %v175, 0.03125
    %v228 = vmul.f32 %v178, 0.03125
    %v229 = vmul.f32 %v181, 0.03125
    %v230 = vmul.f32 %v184, 0.03125
    %v231 = vmul.f32 %v187, 0.03125
    %v232 = vmul.f32 %v190, 0.03125
    %v233 = vmul.f32 %v193, 0.03125
    %v234 = vmul.f32 %v196, 0.03125
    %v235 = vmul.f32 %v199, 0.03125
    %v236 = vmul.f32 %v55, %v55
    %v237 = vmul.f32 %v56, %v56
    %v238 = vmul.f32 %v57, %v57
    %v239 = vmul.f32 %v58, %v58
    %v240 = vmul.f32 %v59, %v59
    %v241 = vmul.f32 %v60, %v60
    %v242 = vmul.f32 %v61, %v61
    %v243 = vmul.f32 %v62, %v62
    %v244 = vmul.f32 %v63, %v63
    %v245 = vmul.f32 %v64, %v64
    %v246 = vmul.f32 %v65, %v65
    %v247 = vmul.f32 %v66, %v66
    %v248 = vmul.f32 %v67, %v67
    %v249 = vmul.f32 %v68, %v68
    %v250 = vmul.f32 %v69, %v69
    %v251 = vmul.f32 %v70, %v70
    %v252 = vmul.f32 %v71, %v71
    %v253 = vmul.f32 %v72, %v72
    %v254 = vmul.f32 %v73, %v73
    %v255 = vmul.f32 %v74, %v74
    %v256 = vmul.f32 %v75, %v75
    %v257 = vmul.f32 %v76, %v76
    %v258 = vmul.f32 %v77, %v77
    %v259 = vmul.f32 %v78, %v78
    %v260 = vmul.f32 %v79, %v79
    %v261 = vmul.f32 %v80, %v80
    %v262 = vmul.f32 %v81, %v81
    %v263 = vmul.f32 %v82, %v82
    %v264 = vmul.f32 %v83, %v83
    %v265 = vmul.f32 %v84, %v84
    %v266 = vmul.f32 %v85, %v85
    %v267 = vmul.f32 %v86, %v86
    %v268 = vmul.f32 %v87, %v87
    %v269 = vmul.f32 %v88, %v88
    %v270 = vmul.f32 %v89, %v89
    %v271 = vmul.f32 %v90, %v90
    %v272 = vsel %vm91, %v236, 0.0
    %273 = vadd.xlane.f32.xlu0 %v272
    %v274 = vpop.xlane.xlu0 %273
    %v275 = vsel %vm91, %v237, 0.0
    %276 = vadd.xlane.f32.xlu0 %v275
    %v277 = vpop.xlane.xlu0 %276
    %v278 = vsel %vm91, %v238, 0.0
    %279 = vadd.xlane.f32.xlu0 %v278
    %v280 = vpop.xlane.xlu0 %279
    %v281 = vsel %vm91, %v239, 0.0
    %282 = vadd.xlane.f32.xlu0 %v281
    %v283 = vpop.xlane.xlu0 %282
    %v284 = vsel %vm91, %v240, 0.0
    %285 = vadd.xlane.f32.xlu0 %v284
    %v286 = vpop.xlane.xlu0 %285
    %v287 = vsel %vm91, %v241, 0.0
    %288 = vadd.xlane.f32.xlu0 %v287
    %v289 = vpop.xlane.xlu0 %288
    %v290 = vsel %vm91, %v242, 0.0
    %291 = vadd.xlane.f32.xlu0 %v290
    %v292 = vpop.xlane.xlu0 %291
    %v293 = vsel %vm91, %v243, 0.0
    %294 = vadd.xlane.f32.xlu0 %v293
    %v295 = vpop.xlane.xlu0 %294
    %v296 = vsel %vm91, %v244, 0.0
    %297 = vadd.xlane.f32.xlu0 %v296
    %v298 = vpop.xlane.xlu0 %297
    %v299 = vsel %vm91, %v245, 0.0
    %300 = vadd.xlane.f32.xlu0 %v299
    %v301 = vpop.xlane.xlu0 %300
    %v302 = vsel %vm91, %v246, 0.0
    %303 = vadd.xlane.f32.xlu0 %v302
    %v304 = vpop.xlane.xlu0 %303
    %v305 = vsel %vm91, %v247, 0.0
    %306 = vadd.xlane.f32.xlu0 %v305
    %v307 = vpop.xlane.xlu0 %306
    %v308 = vsel %vm91, %v248, 0.0
    %309 = vadd.xlane.f32.xlu0 %v308
    %v310 = vpop.xlane.xlu0 %309
    %v311 = vsel %vm91, %v249, 0.0
    %312 = vadd.xlane.f32.xlu0 %v311
    %v313 = vpop.xlane.xlu0 %312
    %v314 = vsel %vm91, %v250, 0.0
    %315 = vadd.xlane.f32.xlu0 %v314
    %v316 = vpop.xlane.xlu0 %315
    %v317 = vsel %vm91, %v251, 0.0
    %318 = vadd.xlane.f32.xlu0 %v317
    %v319 = vpop.xlane.xlu0 %318
    %v320 = vsel %vm91, %v252, 0.0
    %321 = vadd.xlane.f32.xlu0 %v320
    %v322 = vpop.xlane.xlu0 %321
    %v323 = vsel %vm91, %v253, 0.0
    %324 = vadd.xlane.f32.xlu0 %v323
    %v325 = vpop.xlane.xlu0 %324
    %v326 = vsel %vm91, %v254, 0.0
    %327 = vadd.xlane.f32.xlu0 %v326
    %v328 = vpop.xlane.xlu0 %327
    %v329 = vsel %vm91, %v255, 0.0
    %330 = vadd.xlane.f32.xlu0 %v329
    %v331 = vpop.xlane.xlu0 %330
    %v332 = vsel %vm91, %v256, 0.0
    %333 = vadd.xlane.f32.xlu0 %v332
    %v334 = vpop.xlane.xlu0 %333
    %v335 = vsel %vm91, %v257, 0.0
    %336 = vadd.xlane.f32.xlu0 %v335
    %v337 = vpop.xlane.xlu0 %336
    %v338 = vsel %vm91, %v258, 0.0
    %339 = vadd.xlane.f32.xlu0 %v338
    %v340 = vpop.xlane.xlu0 %339
    %v341 = vsel %vm91, %v259, 0.0
    %342 = vadd.xlane.f32.xlu0 %v341
    %v343 = vpop.xlane.xlu0 %342
    %v344 = vsel %vm91, %v260, 0.0
    %345 = vadd.xlane.f32.xlu0 %v344
    %v346 = vpop.xlane.xlu0 %345
    %v347 = vsel %vm91, %v261, 0.0
    %348 = vadd.xlane.f32.xlu0 %v347
    %v349 = vpop.xlane.xlu0 %348
    %v350 = vsel %vm91, %v262, 0.0
    %351 = vadd.xlane.f32.xlu0 %v350
    %v352 = vpop.xlane.xlu0 %351
    %v353 = vsel %vm91, %v263, 0.0
    %354 = vadd.xlane.f32.xlu0 %v353
    %v355 = vpop.xlane.xlu0 %354
    %v356 = vsel %vm91, %v264, 0.0
    %357 = vadd.xlane.f32.xlu0 %v356
    %v358 = vpop.xlane.xlu0 %357
    %v359 = vsel %vm91, %v265, 0.0
    %360 = vadd.xlane.f32.xlu0 %v359
    %v361 = vpop.xlane.xlu0 %360
    %v362 = vsel %vm91, %v266, 0.0
    %363 = vadd.xlane.f32.xlu0 %v362
    %v364 = vpop.xlane.xlu0 %363
    %v365 = vsel %vm91, %v267, 0.0
    %366 = vadd.xlane.f32.xlu0 %v365
    %v367 = vpop.xlane.xlu0 %366
    %v368 = vsel %vm91, %v268, 0.0
    %369 = vadd.xlane.f32.xlu0 %v368
    %v370 = vpop.xlane.xlu0 %369
    %v371 = vsel %vm91, %v269, 0.0
    %372 = vadd.xlane.f32.xlu0 %v371
    %v373 = vpop.xlane.xlu0 %372
    %v374 = vsel %vm91, %v270, 0.0
    %375 = vadd.xlane.f32.xlu0 %v374
    %v376 = vpop.xlane.xlu0 %375
    %v377 = vsel %vm91, %v271, 0.0
    %378 = vadd.xlane.f32.xlu0 %v377
    %v379 = vpop.xlane.xlu0 %378
    %v380 = vmul.f32 %v274, 0.03125
    %v381 = vmul.f32 %v277, 0.03125
    %v382 = vmul.f32 %v280, 0.03125
    %v383 = vmul.f32 %v283, 0.03125
    %v384 = vmul.f32 %v286, 0.03125
    %v385 = vmul.f32 %v289, 0.03125
    %v386 = vmul.f32 %v292, 0.03125
    %v387 = vmul.f32 %v295, 0.03125
    %v388 = vmul.f32 %v298, 0.03125
    %v389 = vmul.f32 %v301, 0.03125
    %v390 = vmul.f32 %v304, 0.03125
    %v391 = vmul.f32 %v307, 0.03125
    %v392 = vmul.f32 %v310, 0.03125
    %v393 = vmul.f32 %v313, 0.03125
    %v394 = vmul.f32 %v316, 0.03125
    %v395 = vmul.f32 %v319, 0.03125
    %v396 = vmul.f32 %v322, 0.03125
    %v397 = vmul.f32 %v325, 0.03125
    %v398 = vmul.f32 %v328, 0.03125
    %v399 = vmul.f32 %v331, 0.03125
    %v400 = vmul.f32 %v334, 0.03125
    %v401 = vmul.f32 %v337, 0.03125
    %v402 = vmul.f32 %v340, 0.03125
    %v403 = vmul.f32 %v343, 0.03125
    %v404 = vmul.f32 %v346, 0.03125
    %v405 = vmul.f32 %v349, 0.03125
    %v406 = vmul.f32 %v352, 0.03125
    %v407 = vmul.f32 %v355, 0.03125
    %v408 = vmul.f32 %v358, 0.03125
    %v409 = vmul.f32 %v361, 0.03125
    %v410 = vmul.f32 %v364, 0.03125
    %v411 = vmul.f32 %v367, 0.03125
    %v412 = vmul.f32 %v370, 0.03125
    %v413 = vmul.f32 %v373, 0.03125
    %v414 = vmul.f32 %v376, 0.03125
    %v415 = vmul.f32 %v379, 0.03125
    %v416 = vld [vmem:[%s1] sm:$0xff]
    %v417 = vld [vmem:[%s1 + $0x8] sm:$0xff]
    %v418 = vld [vmem:[%s1 + $0x10] sm:$0xff]
    %v419 = vld [vmem:[%s1 + $0x18] sm:$0xff]
    %v420 = vld [vmem:[%s1 + $0x20] sm:$0xff]
    %v421 = vld [vmem:[%s1 + $0x28] sm:$0xff]
    %v422 = vld [vmem:[%s1 + $0x30] sm:$0xff]
    %v423 = vld [vmem:[%s1 + $0x38] sm:$0xff]
    %v424 = vld [vmem:[%s1 + $0x40] sm:$0xff]
    %v425 = vld [vmem:[%s1 + $0x48] sm:$0xff]
    %v426 = vld [vmem:[%s1 + $0x50] sm:$0xff]
    %v427 = vld [vmem:[%s1 + $0x58] sm:$0xff]
    %v428 = vld [vmem:[%s1 + $0x60] sm:$0xff]
    %v429 = vld [vmem:[%s1 + $0x68] sm:$0xff]
    %v430 = vld [vmem:[%s1 + $0x70] sm:$0xff]
    %v431 = vld [vmem:[%s1 + $0x78] sm:$0xff]
    %v432 = vld [vmem:[%s1 + $0x80] sm:$0xff]
    %v433 = vld [vmem:[%s1 + $0x88] sm:$0xff]
    %v434 = vld [vmem:[%s1 + $0x90] sm:$0xff]
    %v435 = vld [vmem:[%s1 + $0x98] sm:$0xff]
    %v436 = vld [vmem:[%s1 + $0xa0] sm:$0xff]
    %v437 = vld [vmem:[%s1 + $0xa8] sm:$0xff]
    %v438 = vld [vmem:[%s1 + $0xb0] sm:$0xff]
    %v439 = vld [vmem:[%s1 + $0xb8] sm:$0xff]
    %v440 = vld [vmem:[%s1 + $0xc0] sm:$0xff]
    %v441 = vld [vmem:[%s1 + $0xc8] sm:$0xff]
    %v442 = vld [vmem:[%s1 + $0xd0] sm:$0xff]
    %v443 = vld [vmem:[%s1 + $0xd8] sm:$0xff]
    %v444 = vld [vmem:[%s1 + $0xe0] sm:$0xff]
    %v445 = vld [vmem:[%s1 + $0xe8] sm:$0xff]
    %v446 = vld [vmem:[%s1 + $0xf0] sm:$0xff]
    %v447 = vld [vmem:[%s1 + $0xf8] sm:$0xff]
    %v448 = vld [vmem:[%s1 + $0x100] sm:$0xff]
    %v449 = vld [vmem:[%s1 + $0x108] sm:$0xff]
    %v450 = vld [vmem:[%s1 + $0x110] sm:$0xff]
    %v451 = vld [vmem:[%s1 + $0x118] sm:$0xff]
    %v452 = vld [vmem:[#allocation2] sm:$0xff]
    %v453 = vld [vmem:[#allocation2 + $0x8] sm:$0xff]
    %v454 = vld [vmem:[#allocation2 + $0x10] sm:$0xff]
    %v455 = vld [vmem:[#allocation2 + $0x18] sm:$0xff]
    %v456 = vld [vmem:[#allocation2 + $0x20] sm:$0xff]
    %v457 = vld [vmem:[#allocation2 + $0x28] sm:$0xff]
    %v458 = vld [vmem:[#allocation2 + $0x30] sm:$0xff]
    %v459 = vld [vmem:[#allocation2 + $0x38] sm:$0xff]
    %v460 = vld [vmem:[#allocation2 + $0x40] sm:$0xff]
    %v461 = vld [vmem:[#allocation2 + $0x48] sm:$0xff]
    %v462 = vld [vmem:[#allocation2 + $0x50] sm:$0xff]
    %v463 = vld [vmem:[#allocation2 + $0x58] sm:$0xff]
    %v464 = vld [vmem:[#allocation2 + $0x60] sm:$0xff]
    %v465 = vld [vmem:[#allocation2 + $0x68] sm:$0xff]
    %v466 = vld [vmem:[#allocation2 + $0x70] sm:$0xff]
    %v467 = vld [vmem:[#allocation2 + $0x78] sm:$0xff]
    %v468 = vld [vmem:[#allocation2 + $0x80] sm:$0xff]
    %v469 = vld [vmem:[#allocation2 + $0x88] sm:$0xff]
    %v470 = vld [vmem:[#allocation2 + $0x90] sm:$0xff]
    %v471 = vld [vmem:[#allocation2 + $0x98] sm:$0xff]
    %v472 = vld [vmem:[#allocation2 + $0xa0] sm:$0xff]
    %v473 = vld [vmem:[#allocation2 + $0xa8] sm:$0xff]
    %v474 = vld [vmem:[#allocation2 + $0xb0] sm:$0xff]
    %v475 = vld [vmem:[#allocation2 + $0xb8] sm:$0xff]
    %v476 = vld [vmem:[#allocation2 + $0xc0] sm:$0xff]
    %v477 = vld [vmem:[#allocation2 + $0xc8] sm:$0xff]
    %v478 = vld [vmem:[#allocation2 + $0xd0] sm:$0xff]
    %v479 = vld [vmem:[#allocation2 + $0xd8] sm:$0xff]
    %v480 = vld [vmem:[#allocation2 + $0xe0] sm:$0xff]
    %v481 = vld [vmem:[#allocation2 + $0xe8] sm:$0xff]
    %v482 = vld [vmem:[#allocation2 + $0xf0] sm:$0xff]
    %v483 = vld [vmem:[#allocation2 + $0xf8] sm:$0xff]
    %v484 = vld [vmem:[#allocation2 + $0x100] sm:$0xff]
    %v485 = vld [vmem:[#allocation2 + $0x108] sm:$0xff]
    %v486 = vld [vmem:[#allocation2 + $0x110] sm:$0xff]
    %v487 = vld [vmem:[#allocation2 + $0x118] sm:$0xff]
    %v488 = vld [vmem:[#allocation5] sm:$0xff]
    %v489 = vld [vmem:[#allocation5 + $0x8] sm:$0xff]
    %v490 = vld [vmem:[#allocation5 + $0x10] sm:$0xff]
    %v491 = vld [vmem:[#allocation5 + $0x18] sm:$0xff]
    %v492 = vld [vmem:[#allocation5 + $0x20] sm:$0xff]
    %v493 = vld [vmem:[#allocation5 + $0x28] sm:$0xff]
    %v494 = vld [vmem:[#allocation5 + $0x30] sm:$0xff]
    %v495 = vld [vmem:[#allocation5 + $0x38] sm:$0xff]
    %v496 = vld [vmem:[#allocation5 + $0x40] sm:$0xff]
    %v497 = vld [vmem:[#allocation5 + $0x48] sm:$0xff]
    %v498 = vld [vmem:[#allocation5 + $0x50] sm:$0xff]
    %v499 = vld [vmem:[#allocation5 + $0x58] sm:$0xff]
    %v500 = vld [vmem:[#allocation5 + $0x60] sm:$0xff]
    %v501 = vld [vmem:[#allocation5 + $0x68] sm:$0xff]
    %v502 = vld [vmem:[#allocation5 + $0x70] sm:$0xff]
    %v503 = vld [vmem:[#allocation5 + $0x78] sm:$0xff]
    %v504 = vld [vmem:[#allocation5 + $0x80] sm:$0xff]
    %v505 = vld [vmem:[#allocation5 + $0x88] sm:$0xff]
    %v506 = vld [vmem:[#allocation5 + $0x90] sm:$0xff]
    %v507 = vld [vmem:[#allocation5 + $0x98] sm:$0xff]
    %v508 = vld [vmem:[#allocation5 + $0xa0] sm:$0xff]
    %v509 = vld [vmem:[#allocation5 + $0xa8] sm:$0xff]
    %v510 = vld [vmem:[#allocation5 + $0xb0] sm:$0xff]
    %v511 = vld [vmem:[#allocation5 + $0xb8] sm:$0xff]
    %v512 = vld [vmem:[#allocation5 + $0xc0] sm:$0xff]
    %v513 = vld [vmem:[#allocation5 + $0xc8] sm:$0xff]
    %v514 = vld [vmem:[#allocation5 + $0xd0] sm:$0xff]
    %v515 = vld [vmem:[#allocation5 + $0xd8] sm:$0xff]
    %v516 = vld [vmem:[#allocation5 + $0xe0] sm:$0xff]
    %v517 = vld [vmem:[#allocation5 + $0xe8] sm:$0xff]
    %v518 = vld [vmem:[#allocation5 + $0xf0] sm:$0xff]
    %v519 = vld [vmem:[#allocation5 + $0xf8] sm:$0xff]
    %v520 = vld [vmem:[#allocation5 + $0x100] sm:$0xff]
    %v521 = vld [vmem:[#allocation5 + $0x108] sm:$0xff]
    %v522 = vld [vmem:[#allocation5 + $0x110] sm:$0xff]
    %v523 = vld [vmem:[#allocation5 + $0x118] sm:$0xff]
    %v524 = vld [vmem:[%s4] sm:$0x3]
    %v561 = vlaneseq
    %v562 = vand.u32 %v561, 127
    %v563 = vperm.slane %v200, %v562
    %v564 = vadd.s32 %v562, 4294967288
    %v565 = vperm.slane %v201, %v564
    %vm566 = vcmask 130112
    %v567 = vsel %vm566, %v565, %v563
    %v568 = vadd.s32 %v562, 4294967280
    %v569 = vperm.slane %v202, %v568
    %vm570 = vcmask 195712
    %v571 = vsel %vm570, %v569, %v567
    %v572 = vadd.s32 %v562, 4294967272
    %v573 = vperm.slane %v203, %v572
    %vm574 = vcmask 261312
    %v575 = vsel %vm574, %v573, %v571
    %v576 = vadd.s32 %v562, 4294967264
    %v577 = vperm.slane %v204, %v576
    %vm578 = vcmask 326912
    %v579 = vsel %vm578, %v577, %v575
    %v580 = vadd.s32 %v562, 4294967256
    %v581 = vperm.slane %v205, %v580
    %vm582 = vcmask 392512
    %v583 = vsel %vm582, %v581, %v579
    %v584 = vadd.s32 %v562, 4294967248
    %v585 = vperm.slane %v206, %v584
    %vm586 = vcmask 458112
    %v587 = vsel %vm586, %v585, %v583
    %v588 = vadd.s32 %v562, 4294967240
    %v589 = vperm.slane %v207, %v588
    %vm590 = vcmask 523712
    %v591 = vsel %vm590, %v589, %v587
    %v592 = vadd.s32 %v562, 4294967232
    %v593 = vperm.slane %v208, %v592
    %vm594 = vcmask 589312
    %v595 = vsel %vm594, %v593, %v591
    %v596 = vadd.s32 %v562, 4294967224
    %v597 = vperm.slane %v209, %v596
    %vm598 = vcmask 654912
    %v599 = vsel %vm598, %v597, %v595
    %v600 = vadd.s32 %v562, 4294967216
    %v601 = vperm.slane %v210, %v600
    %vm602 = vcmask 720512
    %v603 = vsel %vm602, %v601, %v599
    %v604 = vadd.s32 %v562, 4294967208
    %v605 = vperm.slane %v211, %v604
    %vm606 = vcmask 786112
    %v607 = vsel %vm606, %v605, %v603
    %v608 = vadd.s32 %v562, 4294967200
    %v609 = vperm.slane %v212, %v608
    %vm610 = vcmask 851712
    %v611 = vsel %vm610, %v609, %v607
    %v612 = vadd.s32 %v562, 4294967192
    %v613 = vperm.slane %v213, %v612
    %vm614 = vcmask 917312
    %v615 = vsel %vm614, %v613, %v611
    %v616 = vadd.s32 %v562, 4294967184
    %v617 = vperm.slane %v214, %v616
    %vm618 = vcmask 982912
    %v619 = vsel %vm618, %v617, %v615
    %v620 = vadd.s32 %v562, 4294967176
    %v621 = vperm.slane %v215, %v620
    %vm622 = vcmask 1048512
    %v623 = vsel %vm622, %v621, %v619
    %v624 = vperm.slane %v216, %v562
    %v625 = vperm.slane %v217, %v564
    %v626 = vsel %vm566, %v625, %v624
    %v627 = vperm.slane %v218, %v562
    %v628 = vperm.slane %v219, %v564
    %v629 = vsel %vm566, %v628, %v627
    %v630 = vperm.slane %v220, %v568
    %v631 = vsel %vm570, %v630, %v629
    %v632 = vperm.slane %v221, %v572
    %v633 = vsel %vm574, %v632, %v631
    %v634 = vperm.slane %v222, %v576
    %v635 = vsel %vm578, %v634, %v633
    %v636 = vperm.slane %v223, %v580
    %v637 = vsel %vm582, %v636, %v635
    %v638 = vperm.slane %v224, %v584
    %v639 = vsel %vm586, %v638, %v637
    %v640 = vperm.slane %v225, %v588
    %v641 = vsel %vm590, %v640, %v639
    %v642 = vperm.slane %v226, %v592
    %v643 = vsel %vm594, %v642, %v641
    %v644 = vperm.slane %v227, %v596
    %v645 = vsel %vm598, %v644, %v643
    %v646 = vperm.slane %v228, %v600
    %v647 = vsel %vm602, %v646, %v645
    %v648 = vperm.slane %v229, %v604
    %v649 = vsel %vm606, %v648, %v647
    %v650 = vperm.slane %v230, %v608
    %v651 = vsel %vm610, %v650, %v649
    %v652 = vperm.slane %v231, %v612
    %v653 = vsel %vm614, %v652, %v651
    %v654 = vperm.slane %v232, %v616
    %v655 = vsel %vm618, %v654, %v653
    %v656 = vperm.slane %v233, %v620
    %v657 = vsel %vm622, %v656, %v655
    %v658 = vperm.slane %v234, %v562
    %v659 = vperm.slane %v235, %v564
    %v660 = vsel %vm566, %v659, %v658
    %vm661 = vcmask 1041409
    %v662 = vsel %vm661, %v657, %v623
    %v663 = vsel %vm661, %v660, %v626
    %vm665 = vcmask 130048
    %v666 = vsel %vm665, %v663, 0
    %668 = vmatpush.msra.mxu0 %v446
    %669 = vmatpush.msra.mxu0 %v444
    %670 = vmatpush.msra.mxu0 %v442
    %671 = vmatpush.msra.mxu0 %v440
    %672 = vmatpush.msra.mxu0 %v438
    %673 = vmatpush.msra.mxu0 %v436
    %674 = vmatpush.msra.mxu0 %v434
    %675 = vmatpush.msra.mxu0 %v432
    %676 = vmatpush.msra.mxu0 %v430
    %677 = vmatpush.msra.mxu0 %v428
    %678 = vmatpush.msra.mxu0 %v426
    %679 = vmatpush.msra.mxu0 %v424
    %680 = vmatpush.msra.mxu0 %v422
    %681 = vmatpush.msra.mxu0 %v420
    %682 = vmatpush.msra.mxu0 %v418
    %683 = vmatpush.msra.mxu0 %v416
    %684 = vmatmul.f32.gmra.mxu0 %v662
    %v685 = vpop.f32.mrf.mxu0
    %v686 = vadd.f32 0.0, %v685
    %687 = vdwg.mxu0
    %688 = vmatpush.msra.mxu0 0.0
    %689 = vmatpush.msra.mxu0 0.0
    %690 = vmatpush.msra.mxu0 0.0
    %691 = vmatpush.msra.mxu0 0.0
    %692 = vmatpush.msra.mxu0 0.0
    %693 = vmatpush.msra.mxu0 0.0
    %694 = vmatpush.msra.mxu0 0.0
    %695 = vmatpush.msra.mxu0 0.0
    %696 = vmatpush.msra.mxu0 0.0
    %697 = vmatpush.msra.mxu0 0.0
    %698 = vmatpush.msra.mxu0 0.0
    %699 = vmatpush.msra.mxu0 0.0
    %700 = vmatpush.msra.mxu0 0.0
    %701 = vmatpush.msra.mxu0 0.0
    %702 = vmatpush.msra.mxu0 %v450
    %703 = vmatpush.msra.mxu0 %v448
    %704 = vmatmul.f32.gmra.mxu0 %v666
    %v705 = vpop.f32.mrf.mxu0
    %v706 = vadd.f32 %v686, %v705
    %707 = vdwg.mxu0
    %708 = vmatpush.msra.mxu0 %v447
    %709 = vmatpush.msra.mxu0 %v445
    %710 = vmatpush.msra.mxu0 %v443
    %711 = vmatpush.msra.mxu0 %v441
    %712 = vmatpush.msra.mxu0 %v439
    %713 = vmatpush.msra.mxu0 %v437
    %714 = vmatpush.msra.mxu0 %v435
    %715 = vmatpush.msra.mxu0 %v433
    %716 = vmatpush.msra.mxu0 %v431
    %717 = vmatpush.msra.mxu0 %v429
    %718 = vmatpush.msra.mxu0 %v427
    %719 = vmatpush.msra.mxu0 %v425
    %720 = vmatpush.msra.mxu0 %v423
    %721 = vmatpush.msra.mxu0 %v421
    %722 = vmatpush.msra.mxu0 %v419
    %723 = vmatpush.msra.mxu0 %v417
    %724 = vmatmul.f32.gmra.mxu0 %v662
    %v725 = vpop.f32.mrf.mxu0
    %v726 = vadd.f32 0.0, %v725
    %727 = vdwg.mxu0
    %728 = vmatpush.msra.mxu0 0.0
    %729 = vmatpush.msra.mxu0 0.0
    %730 = vmatpush.msra.mxu0 0.0
    %731 = vmatpush.msra.mxu0 0.0
    %732 = vmatpush.msra.mxu0 0.0
    %733 = vmatpush.msra.mxu0 0.0
    %734 = vmatpush.msra.mxu0 0.0
    %735 = vmatpush.msra.mxu0 0.0
    %736 = vmatpush.msra.mxu0 0.0
    %737 = vmatpush.msra.mxu0 0.0
    %738 = vmatpush.msra.mxu0 0.0
    %739 = vmatpush.msra.mxu0 0.0
    %740 = vmatpush.msra.mxu0 0.0
    %741 = vmatpush.msra.mxu0 0.0
    %742 = vmatpush.msra.mxu0 %v451
    %743 = vmatpush.msra.mxu0 %v449
    %744 = vmatmul.f32.gmra.mxu0 %v666
    %v745 = vpop.f32.mrf.mxu0
    %v746 = vadd.f32 %v726, %v745
    %747 = vdwg.mxu0
    %v748 = vmul.f32 %v706, 2.0
    %v749 = vmul.f32 %v746, 2.0
    %v751 = vmul.f32 %v748, %v662
    %v752 = vmul.f32 %v749, %v663
    %v755 = vperm.slane %v751, 0
    %v756 = vlaneseq
    %v757 = vshrl.u32 %v756, 7
    %759 = vset.pattern.permute.xlu0 %v757
    %760 = vperm.xlu0 %759, %v755
    %v761 = vpop.permute.xlu0 %760
    %v762 = vlaneseq
    %v763 = vshrl.u32 %v762, 7
    %v764 = vadd.s32 %v763, 8
    %765 = vset.pattern.permute.xlu0 %v764
    %766 = vperm.xlu0 %765, %v755
    %v767 = vpop.permute.xlu0 %766
    %v768 = vlaneseq
    %v769 = vshrl.u32 %v768, 7
    %v770 = vadd.s32 %v769, 16
    %771 = vset.pattern.permute.xlu0 %v770
    %772 = vperm.xlu0 %771, %v755
    %v773 = vpop.permute.xlu0 %772
    %v774 = vlaneseq
    %v775 = vshrl.u32 %v774, 7
    %v776 = vadd.s32 %v775, 24
    %777 = vset.pattern.permute.xlu0 %v776
    %778 = vperm.xlu0 %777, %v755
    %v779 = vpop.permute.xlu0 %778
    %v780 = vlaneseq
    %v781 = vshrl.u32 %v780, 7
    %v782 = vadd.s32 %v781, 32
    %783 = vset.pattern.permute.xlu0 %v782
    %784 = vperm.xlu0 %783, %v755
    %v785 = vpop.permute.xlu0 %784
    %v786 = vlaneseq
    %v787 = vshrl.u32 %v786, 7
    %v788 = vadd.s32 %v787, 40
    %789 = vset.pattern.permute.xlu0 %v788
    %790 = vperm.xlu0 %789, %v755
    %v791 = vpop.permute.xlu0 %790
    %v792 = vlaneseq
    %v793 = vshrl.u32 %v792, 7
    %v794 = vadd.s32 %v793, 48
    %795 = vset.pattern.permute.xlu0 %v794
    %796 = vperm.xlu0 %795, %v755
    %v797 = vpop.permute.xlu0 %796
    %v798 = vlaneseq
    %v799 = vshrl.u32 %v798, 7
    %v800 = vadd.s32 %v799, 56
    %801 = vset.pattern.permute.xlu0 %v800
    %802 = vperm.xlu0 %801, %v755
    %v803 = vpop.permute.xlu0 %802
    %v804 = vlaneseq
    %v805 = vshrl.u32 %v804, 7
    %v806 = vadd.s32 %v805, 64
    %807 = vset.pattern.permute.xlu0 %v806
    %808 = vperm.xlu0 %807, %v755
    %v809 = vpop.permute.xlu0 %808
    %v810 = vlaneseq
    %v811 = vshrl.u32 %v810, 7
    %v812 = vadd.s32 %v811, 72
    %813 = vset.pattern.permute.xlu0 %v812
    %814 = vperm.xlu0 %813, %v755
    %v815 = vpop.permute.xlu0 %814
    %v816 = vlaneseq
    %v817 = vshrl.u32 %v816, 7
    %v818 = vadd.s32 %v817, 80
    %819 = vset.pattern.permute.xlu0 %v818
    %820 = vperm.xlu0 %819, %v755
    %v821 = vpop.permute.xlu0 %820
    %v822 = vlaneseq
    %v823 = vshrl.u32 %v822, 7
    %v824 = vadd.s32 %v823, 88
    %825 = vset.pattern.permute.xlu0 %v824
    %826 = vperm.xlu0 %825, %v755
    %v827 = vpop.permute.xlu0 %826
    %v828 = vlaneseq
    %v829 = vshrl.u32 %v828, 7
    %v830 = vadd.s32 %v829, 96
    %831 = vset.pattern.permute.xlu0 %v830
    %832 = vperm.xlu0 %831, %v755
    %v833 = vpop.permute.xlu0 %832
    %v834 = vlaneseq
    %v835 = vshrl.u32 %v834, 7
    %v836 = vadd.s32 %v835, 104
    %837 = vset.pattern.permute.xlu0 %v836
    %838 = vperm.xlu0 %837, %v755
    %v839 = vpop.permute.xlu0 %838
    %v840 = vlaneseq
    %v841 = vshrl.u32 %v840, 7
    %v842 = vadd.s32 %v841, 112
    %843 = vset.pattern.permute.xlu0 %v842
    %844 = vperm.xlu0 %843, %v755
    %v845 = vpop.permute.xlu0 %844
    %v846 = vlaneseq
    %v847 = vshrl.u32 %v846, 7
    %v848 = vadd.s32 %v847, 120
    %849 = vset.pattern.permute.xlu0 %v848
    %850 = vperm.xlu0 %849, %v755
    %v851 = vpop.permute.xlu0 %850
    %v852 = vperm.slane %v752, 0
    %v853 = vlaneseq
    %v854 = vshrl.u32 %v853, 7
    %856 = vset.pattern.permute.xlu0 %v854
    %857 = vperm.xlu0 %856, %v852
    %v858 = vpop.permute.xlu0 %857
    %v859 = vlaneseq
    %v860 = vshrl.u32 %v859, 7
    %v861 = vadd.s32 %v860, 8
    %862 = vset.pattern.permute.xlu0 %v861
    %863 = vperm.xlu0 %862, %v852
    %v864 = vpop.permute.xlu0 %863
    %v865 = vperm.slane %v751, 1
    %v866 = vlaneseq
    %v867 = vshrl.u32 %v866, 7
    %869 = vset.pattern.permute.xlu0 %v867
    %870 = vperm.xlu0 %869, %v865
    %v871 = vpop.permute.xlu0 %870
    %v872 = vlaneseq
    %v873 = vshrl.u32 %v872, 7
    %v874 = vadd.s32 %v873, 8
    %875 = vset.pattern.permute.xlu0 %v874
    %876 = vperm.xlu0 %875, %v865
    %v877 = vpop.permute.xlu0 %876
    %v878 = vlaneseq
    %v879 = vshrl.u32 %v878, 7
    %v880 = vadd.s32 %v879, 16
    %881 = vset.pattern.permute.xlu0 %v880
    %882 = vperm.xlu0 %881, %v865
    %v883 = vpop.permute.xlu0 %882
    %v884 = vlaneseq
    %v885 = vshrl.u32 %v884, 7
    %v886 = vadd.s32 %v885, 24
    %887 = vset.pattern.permute.xlu0 %v886
    %888 = vperm.xlu0 %887, %v865
    %v889 = vpop.permute.xlu0 %888
    %v890 = vlaneseq
    %v891 = vshrl.u32 %v890, 7
    %v892 = vadd.s32 %v891, 32
    %893 = vset.pattern.permute.xlu0 %v892
    %894 = vperm.xlu0 %893, %v865
    %v895 = vpop.permute.xlu0 %894
    %v896 = vlaneseq
    %v897 = vshrl.u32 %v896, 7
    %v898 = vadd.s32 %v897, 40
    %899 = vset.pattern.permute.xlu0 %v898
    %900 = vperm.xlu0 %899, %v865
    %v901 = vpop.permute.xlu0 %900
    %v902 = vlaneseq
    %v903 = vshrl.u32 %v902, 7
    %v904 = vadd.s32 %v903, 48
    %905 = vset.pattern.permute.xlu0 %v904
    %906 = vperm.xlu0 %905, %v865
    %v907 = vpop.permute.xlu0 %906
    %v908 = vlaneseq
    %v909 = vshrl.u32 %v908, 7
    %v910 = vadd.s32 %v909, 56
    %911 = vset.pattern.permute.xlu0 %v910
    %912 = vperm.xlu0 %911, %v865
    %v913 = vpop.permute.xlu0 %912
    %v914 = vlaneseq
    %v915 = vshrl.u32 %v914, 7
    %v916 = vadd.s32 %v915, 64
    %917 = vset.pattern.permute.xlu0 %v916
    %918 = vperm.xlu0 %917, %v865
    %v919 = vpop.permute.xlu0 %918
    %v920 = vlaneseq
    %v921 = vshrl.u32 %v920, 7
    %v922 = vadd.s32 %v921, 72
    %923 = vset.pattern.permute.xlu0 %v922
    %924 = vperm.xlu0 %923, %v865
    %v925 = vpop.permute.xlu0 %924
    %v926 = vlaneseq
    %v927 = vshrl.u32 %v926, 7
    %v928 = vadd.s32 %v927, 80
    %929 = vset.pattern.permute.xlu0 %v928
    %930 = vperm.xlu0 %929, %v865
    %v931 = vpop.permute.xlu0 %930
    %v932 = vlaneseq
    %v933 = vshrl.u32 %v932, 7
    %v934 = vadd.s32 %v933, 88
    %935 = vset.pattern.permute.xlu0 %v934
    %936 = vperm.xlu0 %935, %v865
    %v937 = vpop.permute.xlu0 %936
    %v938 = vlaneseq
    %v939 = vshrl.u32 %v938, 7
    %v940 = vadd.s32 %v939, 96
    %941 = vset.pattern.permute.xlu0 %v940
    %942 = vperm.xlu0 %941, %v865
    %v943 = vpop.permute.xlu0 %942
    %v944 = vlaneseq
    %v945 = vshrl.u32 %v944, 7
    %v946 = vadd.s32 %v945, 104
    %947 = vset.pattern.permute.xlu0 %v946
    %948 = vperm.xlu0 %947, %v865
    %v949 = vpop.permute.xlu0 %948
    %v950 = vlaneseq
    %v951 = vshrl.u32 %v950, 7
    %v952 = vadd.s32 %v951, 112
    %953 = vset.pattern.permute.xlu0 %v952
    %954 = vperm.xlu0 %953, %v865
    %v955 = vpop.permute.xlu0 %954
    %v956 = vlaneseq
    %v957 = vshrl.u32 %v956, 7
    %v958 = vadd.s32 %v957, 120
    %959 = vset.pattern.permute.xlu0 %v958
    %960 = vperm.xlu0 %959, %v865
    %v961 = vpop.permute.xlu0 %960
    %v962 = vperm.slane %v752, 1
    %v963 = vlaneseq
    %v964 = vshrl.u32 %v963, 7
    %966 = vset.pattern.permute.xlu0 %v964
    %967 = vperm.xlu0 %966, %v962
    %v968 = vpop.permute.xlu0 %967
    %v969 = vlaneseq
    %v970 = vshrl.u32 %v969, 7
    %v971 = vadd.s32 %v970, 8
    %972 = vset.pattern.permute.xlu0 %v971
    %973 = vperm.xlu0 %972, %v962
    %v974 = vpop.permute.xlu0 %973
    %v1011 = vsub.f32 %v380, %v761
    %v1012 = vsub.f32 %v381, %v767
    %v1013 = vsub.f32 %v382, %v773
    %v1014 = vsub.f32 %v383, %v779
    %v1015 = vsub.f32 %v384, %v785
    %v1016 = vsub.f32 %v385, %v791
    %v1017 = vsub.f32 %v386, %v797
    %v1018 = vsub.f32 %v387, %v803
    %v1019 = vsub.f32 %v388, %v809
    %v1020 = vsub.f32 %v389, %v815
    %v1021 = vsub.f32 %v390, %v821
    %v1022 = vsub.f32 %v391, %v827
    %v1023 = vsub.f32 %v392, %v833
    %v1024 = vsub.f32 %v393, %v839
    %v1025 = vsub.f32 %v394, %v845
    %v1026 = vsub.f32 %v395, %v851
    %v1027 = vsub.f32 %v396, %v858
    %v1028 = vsub.f32 %v397, %v864
    %v1029 = vsub.f32 %v398, %v871
    %v1030 = vsub.f32 %v399, %v877
    %v1031 = vsub.f32 %v400, %v883
    %v1032 = vsub.f32 %v401, %v889
    %v1033 = vsub.f32 %v402, %v895
    %v1034 = vsub.f32 %v403, %v901
    %v1035 = vsub.f32 %v404, %v907
    %v1036 = vsub.f32 %v405, %v913
    %v1037 = vsub.f32 %v406, %v919
    %v1038 = vsub.f32 %v407, %v925
    %v1039 = vsub.f32 %v408, %v931
    %v1040 = vsub.f32 %v409, %v937
    %v1041 = vsub.f32 %v410, %v943
    %v1042 = vsub.f32 %v411, %v949
    %v1043 = vsub.f32 %v412, %v955
    %v1044 = vsub.f32 %v413, %v961
    %v1045 = vsub.f32 %v414, %v968
    %v1046 = vsub.f32 %v415, %v974
    %v1047 = vmul.f32 %v706, %v706
    %v1048 = vmul.f32 %v746, %v746
    %v1051 = vperm.slane %v1047, 0
    %v1052 = vlaneseq
    %v1053 = vshrl.u32 %v1052, 7
    %1055 = vset.pattern.permute.xlu0 %v1053
    %1056 = vperm.xlu0 %1055, %v1051
    %v1057 = vpop.permute.xlu0 %1056
    %v1058 = vlaneseq
    %v1059 = vshrl.u32 %v1058, 7
    %v1060 = vadd.s32 %v1059, 8
    %1061 = vset.pattern.permute.xlu0 %v1060
    %1062 = vperm.xlu0 %1061, %v1051
    %v1063 = vpop.permute.xlu0 %1062
    %v1064 = vlaneseq
    %v1065 = vshrl.u32 %v1064, 7
    %v1066 = vadd.s32 %v1065, 16
    %1067 = vset.pattern.permute.xlu0 %v1066
    %1068 = vperm.xlu0 %1067, %v1051
    %v1069 = vpop.permute.xlu0 %1068
    %v1070 = vlaneseq
    %v1071 = vshrl.u32 %v1070, 7
    %v1072 = vadd.s32 %v1071, 24
    %1073 = vset.pattern.permute.xlu0 %v1072
    %1074 = vperm.xlu0 %1073, %v1051
    %v1075 = vpop.permute.xlu0 %1074
    %v1076 = vlaneseq
    %v1077 = vshrl.u32 %v1076, 7
    %v1078 = vadd.s32 %v1077, 32
    %1079 = vset.pattern.permute.xlu0 %v1078
    %1080 = vperm.xlu0 %1079, %v1051
    %v1081 = vpop.permute.xlu0 %1080
    %v1082 = vlaneseq
    %v1083 = vshrl.u32 %v1082, 7
    %v1084 = vadd.s32 %v1083, 40
    %1085 = vset.pattern.permute.xlu0 %v1084
    %1086 = vperm.xlu0 %1085, %v1051
    %v1087 = vpop.permute.xlu0 %1086
    %v1088 = vlaneseq
    %v1089 = vshrl.u32 %v1088, 7
    %v1090 = vadd.s32 %v1089, 48
    %1091 = vset.pattern.permute.xlu0 %v1090
    %1092 = vperm.xlu0 %1091, %v1051
    %v1093 = vpop.permute.xlu0 %1092
    %v1094 = vlaneseq
    %v1095 = vshrl.u32 %v1094, 7
    %v1096 = vadd.s32 %v1095, 56
    %1097 = vset.pattern.permute.xlu0 %v1096
    %1098 = vperm.xlu0 %1097, %v1051
    %v1099 = vpop.permute.xlu0 %1098
    %v1100 = vlaneseq
    %v1101 = vshrl.u32 %v1100, 7
    %v1102 = vadd.s32 %v1101, 64
    %1103 = vset.pattern.permute.xlu0 %v1102
    %1104 = vperm.xlu0 %1103, %v1051
    %v1105 = vpop.permute.xlu0 %1104
    %v1106 = vlaneseq
    %v1107 = vshrl.u32 %v1106, 7
    %v1108 = vadd.s32 %v1107, 72
    %1109 = vset.pattern.permute.xlu0 %v1108
    %1110 = vperm.xlu0 %1109, %v1051
    %v1111 = vpop.permute.xlu0 %1110
    %v1112 = vlaneseq
    %v1113 = vshrl.u32 %v1112, 7
    %v1114 = vadd.s32 %v1113, 80
    %1115 = vset.pattern.permute.xlu0 %v1114
    %1116 = vperm.xlu0 %1115, %v1051
    %v1117 = vpop.permute.xlu0 %1116
    %v1118 = vlaneseq
    %v1119 = vshrl.u32 %v1118, 7
    %v1120 = vadd.s32 %v1119, 88
    %1121 = vset.pattern.permute.xlu0 %v1120
    %1122 = vperm.xlu0 %1121, %v1051
    %v1123 = vpop.permute.xlu0 %1122
    %v1124 = vlaneseq
    %v1125 = vshrl.u32 %v1124, 7
    %v1126 = vadd.s32 %v1125, 96
    %1127 = vset.pattern.permute.xlu0 %v1126
    %1128 = vperm.xlu0 %1127, %v1051
    %v1129 = vpop.permute.xlu0 %1128
    %v1130 = vlaneseq
    %v1131 = vshrl.u32 %v1130, 7
    %v1132 = vadd.s32 %v1131, 104
    %1133 = vset.pattern.permute.xlu0 %v1132
    %1134 = vperm.xlu0 %1133, %v1051
    %v1135 = vpop.permute.xlu0 %1134
    %v1136 = vlaneseq
    %v1137 = vshrl.u32 %v1136, 7
    %v1138 = vadd.s32 %v1137, 112
    %1139 = vset.pattern.permute.xlu0 %v1138
    %1140 = vperm.xlu0 %1139, %v1051
    %v1141 = vpop.permute.xlu0 %1140
    %v1142 = vlaneseq
    %v1143 = vshrl.u32 %v1142, 7
    %v1144 = vadd.s32 %v1143, 120
    %1145 = vset.pattern.permute.xlu0 %v1144
    %1146 = vperm.xlu0 %1145, %v1051
    %v1147 = vpop.permute.xlu0 %1146
    %v1148 = vperm.slane %v1048, 0
    %v1149 = vlaneseq
    %v1150 = vshrl.u32 %v1149, 7
    %1152 = vset.pattern.permute.xlu0 %v1150
    %1153 = vperm.xlu0 %1152, %v1148
    %v1154 = vpop.permute.xlu0 %1153
    %v1155 = vlaneseq
    %v1156 = vshrl.u32 %v1155, 7
    %v1157 = vadd.s32 %v1156, 8
    %1158 = vset.pattern.permute.xlu0 %v1157
    %1159 = vperm.xlu0 %1158, %v1148
    %v1160 = vpop.permute.xlu0 %1159
    %v1161 = vperm.slane %v1047, 1
    %v1162 = vlaneseq
    %v1163 = vshrl.u32 %v1162, 7
    %1165 = vset.pattern.permute.xlu0 %v1163
    %1166 = vperm.xlu0 %1165, %v1161
    %v1167 = vpop.permute.xlu0 %1166
    %v1168 = vlaneseq
    %v1169 = vshrl.u32 %v1168, 7
    %v1170 = vadd.s32 %v1169, 8
    %1171 = vset.pattern.permute.xlu0 %v1170
    %1172 = vperm.xlu0 %1171, %v1161
    %v1173 = vpop.permute.xlu0 %1172
    %v1174 = vlaneseq
    %v1175 = vshrl.u32 %v1174, 7
    %v1176 = vadd.s32 %v1175, 16
    %1177 = vset.pattern.permute.xlu0 %v1176
    %1178 = vperm.xlu0 %1177, %v1161
    %v1179 = vpop.permute.xlu0 %1178
    %v1180 = vlaneseq
    %v1181 = vshrl.u32 %v1180, 7
    %v1182 = vadd.s32 %v1181, 24
    %1183 = vset.pattern.permute.xlu0 %v1182
    %1184 = vperm.xlu0 %1183, %v1161
    %v1185 = vpop.permute.xlu0 %1184
    %v1186 = vlaneseq
    %v1187 = vshrl.u32 %v1186, 7
    %v1188 = vadd.s32 %v1187, 32
    %1189 = vset.pattern.permute.xlu0 %v1188
    %1190 = vperm.xlu0 %1189, %v1161
    %v1191 = vpop.permute.xlu0 %1190
    %v1192 = vlaneseq
    %v1193 = vshrl.u32 %v1192, 7
    %v1194 = vadd.s32 %v1193, 40
    %1195 = vset.pattern.permute.xlu0 %v1194
    %1196 = vperm.xlu0 %1195, %v1161
    %v1197 = vpop.permute.xlu0 %1196
    %v1198 = vlaneseq
    %v1199 = vshrl.u32 %v1198, 7
    %v1200 = vadd.s32 %v1199, 48
    %1201 = vset.pattern.permute.xlu0 %v1200
    %1202 = vperm.xlu0 %1201, %v1161
    %v1203 = vpop.permute.xlu0 %1202
    %v1204 = vlaneseq
    %v1205 = vshrl.u32 %v1204, 7
    %v1206 = vadd.s32 %v1205, 56
    %1207 = vset.pattern.permute.xlu0 %v1206
    %1208 = vperm.xlu0 %1207, %v1161
    %v1209 = vpop.permute.xlu0 %1208
    %v1210 = vlaneseq
    %v1211 = vshrl.u32 %v1210, 7
    %v1212 = vadd.s32 %v1211, 64
    %1213 = vset.pattern.permute.xlu0 %v1212
    %1214 = vperm.xlu0 %1213, %v1161
    %v1215 = vpop.permute.xlu0 %1214
    %v1216 = vlaneseq
    %v1217 = vshrl.u32 %v1216, 7
    %v1218 = vadd.s32 %v1217, 72
    %1219 = vset.pattern.permute.xlu0 %v1218
    %1220 = vperm.xlu0 %1219, %v1161
    %v1221 = vpop.permute.xlu0 %1220
    %v1222 = vlaneseq
    %v1223 = vshrl.u32 %v1222, 7
    %v1224 = vadd.s32 %v1223, 80
    %1225 = vset.pattern.permute.xlu0 %v1224
    %1226 = vperm.xlu0 %1225, %v1161
    %v1227 = vpop.permute.xlu0 %1226
    %v1228 = vlaneseq
    %v1229 = vshrl.u32 %v1228, 7
    %v1230 = vadd.s32 %v1229, 88
    %1231 = vset.pattern.permute.xlu0 %v1230
    %1232 = vperm.xlu0 %1231, %v1161
    %v1233 = vpop.permute.xlu0 %1232
    %v1234 = vlaneseq
    %v1235 = vshrl.u32 %v1234, 7
    %v1236 = vadd.s32 %v1235, 96
    %1237 = vset.pattern.permute.xlu0 %v1236
    %1238 = vperm.xlu0 %1237, %v1161
    %v1239 = vpop.permute.xlu0 %1238
    %v1240 = vlaneseq
    %v1241 = vshrl.u32 %v1240, 7
    %v1242 = vadd.s32 %v1241, 104
    %1243 = vset.pattern.permute.xlu0 %v1242
    %1244 = vperm.xlu0 %1243, %v1161
    %v1245 = vpop.permute.xlu0 %1244
    %v1246 = vlaneseq
    %v1247 = vshrl.u32 %v1246, 7
    %v1248 = vadd.s32 %v1247, 112
    %1249 = vset.pattern.permute.xlu0 %v1248
    %1250 = vperm.xlu0 %1249, %v1161
    %v1251 = vpop.permute.xlu0 %1250
    %v1252 = vlaneseq
    %v1253 = vshrl.u32 %v1252, 7
    %v1254 = vadd.s32 %v1253, 120
    %1255 = vset.pattern.permute.xlu0 %v1254
    %1256 = vperm.xlu0 %1255, %v1161
    %v1257 = vpop.permute.xlu0 %1256
    %v1258 = vperm.slane %v1048, 1
    %v1259 = vlaneseq
    %v1260 = vshrl.u32 %v1259, 7
    %1262 = vset.pattern.permute.xlu0 %v1260
    %1263 = vperm.xlu0 %1262, %v1258
    %v1264 = vpop.permute.xlu0 %1263
    %v1265 = vlaneseq
    %v1266 = vshrl.u32 %v1265, 7
    %v1267 = vadd.s32 %v1266, 8
    %1268 = vset.pattern.permute.xlu0 %v1267
    %1269 = vperm.xlu0 %1268, %v1258
    %v1270 = vpop.permute.xlu0 %1269
    %v1307 = vadd.f32 %v1011, %v1057
    %v1308 = vadd.f32 %v1012, %v1063
    %v1309 = vadd.f32 %v1013, %v1069
    %v1310 = vadd.f32 %v1014, %v1075
    %v1311 = vadd.f32 %v1015, %v1081
    %v1312 = vadd.f32 %v1016, %v1087
    %v1313 = vadd.f32 %v1017, %v1093
    %v1314 = vadd.f32 %v1018, %v1099
    %v1315 = vadd.f32 %v1019, %v1105
    %v1316 = vadd.f32 %v1020, %v1111
    %v1317 = vadd.f32 %v1021, %v1117
    %v1318 = vadd.f32 %v1022, %v1123
    %v1319 = vadd.f32 %v1023, %v1129
    %v1320 = vadd.f32 %v1024, %v1135
    %v1321 = vadd.f32 %v1025, %v1141
    %v1322 = vadd.f32 %v1026, %v1147
    %v1323 = vadd.f32 %v1027, %v1154
    %v1324 = vadd.f32 %v1028, %v1160
    %v1325 = vadd.f32 %v1029, %v1167
    %v1326 = vadd.f32 %v1030, %v1173
    %v1327 = vadd.f32 %v1031, %v1179
    %v1328 = vadd.f32 %v1032, %v1185
    %v1329 = vadd.f32 %v1033, %v1191
    %v1330 = vadd.f32 %v1034, %v1197
    %v1331 = vadd.f32 %v1035, %v1203
    %v1332 = vadd.f32 %v1036, %v1209
    %v1333 = vadd.f32 %v1037, %v1215
    %v1334 = vadd.f32 %v1038, %v1221
    %v1335 = vadd.f32 %v1039, %v1227
    %v1336 = vadd.f32 %v1040, %v1233
    %v1337 = vadd.f32 %v1041, %v1239
    %v1338 = vadd.f32 %v1042, %v1245
    %v1339 = vadd.f32 %v1043, %v1251
    %v1340 = vadd.f32 %v1044, %v1257
    %v1341 = vadd.f32 %v1045, %v1264
    %v1342 = vadd.f32 %v1046, %v1270
    %v1343 = vmax.f32 %v1307, 0.0
    %v1344 = vmax.f32 %v1308, 0.0
    %v1345 = vmax.f32 %v1309, 0.0
    %v1346 = vmax.f32 %v1310, 0.0
    %v1347 = vmax.f32 %v1311, 0.0
    %v1348 = vmax.f32 %v1312, 0.0
    %v1349 = vmax.f32 %v1313, 0.0
    %v1350 = vmax.f32 %v1314, 0.0
    %v1351 = vmax.f32 %v1315, 0.0
    %v1352 = vmax.f32 %v1316, 0.0
    %v1353 = vmax.f32 %v1317, 0.0
    %v1354 = vmax.f32 %v1318, 0.0
    %v1355 = vmax.f32 %v1319, 0.0
    %v1356 = vmax.f32 %v1320, 0.0
    %v1357 = vmax.f32 %v1321, 0.0
    %v1358 = vmax.f32 %v1322, 0.0
    %v1359 = vmax.f32 %v1323, 0.0
    %v1360 = vmax.f32 %v1324, 0.0
    %v1361 = vmax.f32 %v1325, 0.0
    %v1362 = vmax.f32 %v1326, 0.0
    %v1363 = vmax.f32 %v1327, 0.0
    %v1364 = vmax.f32 %v1328, 0.0
    %v1365 = vmax.f32 %v1329, 0.0
    %v1366 = vmax.f32 %v1330, 0.0
    %v1367 = vmax.f32 %v1331, 0.0
    %v1368 = vmax.f32 %v1332, 0.0
    %v1369 = vmax.f32 %v1333, 0.0
    %v1370 = vmax.f32 %v1334, 0.0
    %v1371 = vmax.f32 %v1335, 0.0
    %v1372 = vmax.f32 %v1336, 0.0
    %v1373 = vmax.f32 %v1337, 0.0
    %v1374 = vmax.f32 %v1338, 0.0
    %v1375 = vmax.f32 %v1339, 0.0
    %v1376 = vmax.f32 %v1340, 0.0
    %v1377 = vmax.f32 %v1341, 0.0
    %v1378 = vmax.f32 %v1342, 0.0
    %v1379 = vadd.f32 %v1343, 1e-08
    %v1380 = vadd.f32 %v1344, 1e-08
    %v1381 = vadd.f32 %v1345, 1e-08
    %v1382 = vadd.f32 %v1346, 1e-08
    %v1383 = vadd.f32 %v1347, 1e-08
    %v1384 = vadd.f32 %v1348, 1e-08
    %v1385 = vadd.f32 %v1349, 1e-08
    %v1386 = vadd.f32 %v1350, 1e-08
    %v1387 = vadd.f32 %v1351, 1e-08
    %v1388 = vadd.f32 %v1352, 1e-08
    %v1389 = vadd.f32 %v1353, 1e-08
    %v1390 = vadd.f32 %v1354, 1e-08
    %v1391 = vadd.f32 %v1355, 1e-08
    %v1392 = vadd.f32 %v1356, 1e-08
    %v1393 = vadd.f32 %v1357, 1e-08
    %v1394 = vadd.f32 %v1358, 1e-08
    %v1395 = vadd.f32 %v1359, 1e-08
    %v1396 = vadd.f32 %v1360, 1e-08
    %v1397 = vadd.f32 %v1361, 1e-08
    %v1398 = vadd.f32 %v1362, 1e-08
    %v1399 = vadd.f32 %v1363, 1e-08
    %v1400 = vadd.f32 %v1364, 1e-08
    %v1401 = vadd.f32 %v1365, 1e-08
    %v1402 = vadd.f32 %v1366, 1e-08
    %v1403 = vadd.f32 %v1367, 1e-08
    %v1404 = vadd.f32 %v1368, 1e-08
    %v1405 = vadd.f32 %v1369, 1e-08
    %v1406 = vadd.f32 %v1370, 1e-08
    %v1407 = vadd.f32 %v1371, 1e-08
    %v1408 = vadd.f32 %v1372, 1e-08
    %v1409 = vadd.f32 %v1373, 1e-08
    %v1410 = vadd.f32 %v1374, 1e-08
    %v1411 = vadd.f32 %v1375, 1e-08
    %v1412 = vadd.f32 %v1376, 1e-08
    %v1413 = vadd.f32 %v1377, 1e-08
    %v1414 = vadd.f32 %v1378, 1e-08
    %v1415 = vrsqrt.pop %v1379
    %v1416 = vmul.f32 %v1415, %v1379
    %v1417 = vmul.f32 %v1416, %v1415
    %v1418 = vmul.f32 0.5, %v1417
    %v1419 = vsub.f32 1.5, %v1418
    %v1420 = vmul.f32 %v1415, %v1419
    %v1421 = vmul.f32 %v1379, %v1420
    %vm1422 = vcmp.eq.f32.partialorder %v1379, inf
    %v1423 = vsel %vm1422, %v1379, %v1421
    %vm1424 = vcmp.eq.f32.partialorder %v1379, 0.0
    %v1425 = vand.u32 %v1379, 2147483648
    %v1426 = vsel %vm1424, %v1425, %v1423
    %v1427 = vrsqrt.pop %v1380
    %v1428 = vmul.f32 %v1427, %v1380
    %v1429 = vmul.f32 %v1428, %v1427
    %v1430 = vmul.f32 0.5, %v1429
    %v1431 = vsub.f32 1.5, %v1430
    %v1432 = vmul.f32 %v1427, %v1431
    %v1433 = vmul.f32 %v1380, %v1432
    %vm1434 = vcmp.eq.f32.partialorder %v1380, inf
    %v1435 = vsel %vm1434, %v1380, %v1433
    %vm1436 = vcmp.eq.f32.partialorder %v1380, 0.0
    %v1437 = vand.u32 %v1380, 2147483648
    %v1438 = vsel %vm1436, %v1437, %v1435
    %v1439 = vrsqrt.pop %v1381
    %v1440 = vmul.f32 %v1439, %v1381
    %v1441 = vmul.f32 %v1440, %v1439
    %v1442 = vmul.f32 0.5, %v1441
    %v1443 = vsub.f32 1.5, %v1442
    %v1444 = vmul.f32 %v1439, %v1443
    %v1445 = vmul.f32 %v1381, %v1444
    %vm1446 = vcmp.eq.f32.partialorder %v1381, inf
    %v1447 = vsel %vm1446, %v1381, %v1445
    %vm1448 = vcmp.eq.f32.partialorder %v1381, 0.0
    %v1449 = vand.u32 %v1381, 2147483648
    %v1450 = vsel %vm1448, %v1449, %v1447
    %v1451 = vrsqrt.pop %v1382
    %v1452 = vmul.f32 %v1451, %v1382
    %v1453 = vmul.f32 %v1452, %v1451
    %v1454 = vmul.f32 0.5, %v1453
    %v1455 = vsub.f32 1.5, %v1454
    %v1456 = vmul.f32 %v1451, %v1455
    %v1457 = vmul.f32 %v1382, %v1456
    %vm1458 = vcmp.eq.f32.partialorder %v1382, inf
    %v1459 = vsel %vm1458, %v1382, %v1457
    %vm1460 = vcmp.eq.f32.partialorder %v1382, 0.0
    %v1461 = vand.u32 %v1382, 2147483648
    %v1462 = vsel %vm1460, %v1461, %v1459
    %v1463 = vrsqrt.pop %v1383
    %v1464 = vmul.f32 %v1463, %v1383
    %v1465 = vmul.f32 %v1464, %v1463
    %v1466 = vmul.f32 0.5, %v1465
    %v1467 = vsub.f32 1.5, %v1466
    %v1468 = vmul.f32 %v1463, %v1467
    %v1469 = vmul.f32 %v1383, %v1468
    %vm1470 = vcmp.eq.f32.partialorder %v1383, inf
    %v1471 = vsel %vm1470, %v1383, %v1469
    %vm1472 = vcmp.eq.f32.partialorder %v1383, 0.0
    %v1473 = vand.u32 %v1383, 2147483648
    %v1474 = vsel %vm1472, %v1473, %v1471
    %v1475 = vrsqrt.pop %v1384
    %v1476 = vmul.f32 %v1475, %v1384
    %v1477 = vmul.f32 %v1476, %v1475
    %v1478 = vmul.f32 0.5, %v1477
    %v1479 = vsub.f32 1.5, %v1478
    %v1480 = vmul.f32 %v1475, %v1479
    %v1481 = vmul.f32 %v1384, %v1480
    %vm1482 = vcmp.eq.f32.partialorder %v1384, inf
    %v1483 = vsel %vm1482, %v1384, %v1481
    %vm1484 = vcmp.eq.f32.partialorder %v1384, 0.0
    %v1485 = vand.u32 %v1384, 2147483648
    %v1486 = vsel %vm1484, %v1485, %v1483
    %v1487 = vrsqrt.pop %v1385
    %v1488 = vmul.f32 %v1487, %v1385
    %v1489 = vmul.f32 %v1488, %v1487
    %v1490 = vmul.f32 0.5, %v1489
    %v1491 = vsub.f32 1.5, %v1490
    %v1492 = vmul.f32 %v1487, %v1491
    %v1493 = vmul.f32 %v1385, %v1492
    %vm1494 = vcmp.eq.f32.partialorder %v1385, inf
    %v1495 = vsel %vm1494, %v1385, %v1493
    %vm1496 = vcmp.eq.f32.partialorder %v1385, 0.0
    %v1497 = vand.u32 %v1385, 2147483648
    %v1498 = vsel %vm1496, %v1497, %v1495
    %v1499 = vrsqrt.pop %v1386
    %v1500 = vmul.f32 %v1499, %v1386
    %v1501 = vmul.f32 %v1500, %v1499
    %v1502 = vmul.f32 0.5, %v1501
    %v1503 = vsub.f32 1.5, %v1502
    %v1504 = vmul.f32 %v1499, %v1503
    %v1505 = vmul.f32 %v1386, %v1504
    %vm1506 = vcmp.eq.f32.partialorder %v1386, inf
    %v1507 = vsel %vm1506, %v1386, %v1505
    %vm1508 = vcmp.eq.f32.partialorder %v1386, 0.0
    %v1509 = vand.u32 %v1386, 2147483648
    %v1510 = vsel %vm1508, %v1509, %v1507
    %v1511 = vrsqrt.pop %v1387
    %v1512 = vmul.f32 %v1511, %v1387
    %v1513 = vmul.f32 %v1512, %v1511
    %v1514 = vmul.f32 0.5, %v1513
    %v1515 = vsub.f32 1.5, %v1514
    %v1516 = vmul.f32 %v1511, %v1515
    %v1517 = vmul.f32 %v1387, %v1516
    %vm1518 = vcmp.eq.f32.partialorder %v1387, inf
    %v1519 = vsel %vm1518, %v1387, %v1517
    %vm1520 = vcmp.eq.f32.partialorder %v1387, 0.0
    %v1521 = vand.u32 %v1387, 2147483648
    %v1522 = vsel %vm1520, %v1521, %v1519
    %v1523 = vrsqrt.pop %v1388
    %v1524 = vmul.f32 %v1523, %v1388
    %v1525 = vmul.f32 %v1524, %v1523
    %v1526 = vmul.f32 0.5, %v1525
    %v1527 = vsub.f32 1.5, %v1526
    %v1528 = vmul.f32 %v1523, %v1527
    %v1529 = vmul.f32 %v1388, %v1528
    %vm1530 = vcmp.eq.f32.partialorder %v1388, inf
    %v1531 = vsel %vm1530, %v1388, %v1529
    %vm1532 = vcmp.eq.f32.partialorder %v1388, 0.0
    %v1533 = vand.u32 %v1388, 2147483648
    %v1534 = vsel %vm1532, %v1533, %v1531
    %v1535 = vrsqrt.pop %v1389
    %v1536 = vmul.f32 %v1535, %v1389
    %v1537 = vmul.f32 %v1536, %v1535
    %v1538 = vmul.f32 0.5, %v1537
    %v1539 = vsub.f32 1.5, %v1538
    %v1540 = vmul.f32 %v1535, %v1539
    %v1541 = vmul.f32 %v1389, %v1540
    %vm1542 = vcmp.eq.f32.partialorder %v1389, inf
    %v1543 = vsel %vm1542, %v1389, %v1541
    %vm1544 = vcmp.eq.f32.partialorder %v1389, 0.0
    %v1545 = vand.u32 %v1389, 2147483648
    %v1546 = vsel %vm1544, %v1545, %v1543
    %v1547 = vrsqrt.pop %v1390
    %v1548 = vmul.f32 %v1547, %v1390
    %v1549 = vmul.f32 %v1548, %v1547
    %v1550 = vmul.f32 0.5, %v1549
    %v1551 = vsub.f32 1.5, %v1550
    %v1552 = vmul.f32 %v1547, %v1551
    %v1553 = vmul.f32 %v1390, %v1552
    %vm1554 = vcmp.eq.f32.partialorder %v1390, inf
    %v1555 = vsel %vm1554, %v1390, %v1553
    %vm1556 = vcmp.eq.f32.partialorder %v1390, 0.0
    %v1557 = vand.u32 %v1390, 2147483648
    %v1558 = vsel %vm1556, %v1557, %v1555
    %v1559 = vrsqrt.pop %v1391
    %v1560 = vmul.f32 %v1559, %v1391
    %v1561 = vmul.f32 %v1560, %v1559
    %v1562 = vmul.f32 0.5, %v1561
    %v1563 = vsub.f32 1.5, %v1562
    %v1564 = vmul.f32 %v1559, %v1563
    %v1565 = vmul.f32 %v1391, %v1564
    %vm1566 = vcmp.eq.f32.partialorder %v1391, inf
    %v1567 = vsel %vm1566, %v1391, %v1565
    %vm1568 = vcmp.eq.f32.partialorder %v1391, 0.0
    %v1569 = vand.u32 %v1391, 2147483648
    %v1570 = vsel %vm1568, %v1569, %v1567
    %v1571 = vrsqrt.pop %v1392
    %v1572 = vmul.f32 %v1571, %v1392
    %v1573 = vmul.f32 %v1572, %v1571
    %v1574 = vmul.f32 0.5, %v1573
    %v1575 = vsub.f32 1.5, %v1574
    %v1576 = vmul.f32 %v1571, %v1575
    %v1577 = vmul.f32 %v1392, %v1576
    %vm1578 = vcmp.eq.f32.partialorder %v1392, inf
    %v1579 = vsel %vm1578, %v1392, %v1577
    %vm1580 = vcmp.eq.f32.partialorder %v1392, 0.0
    %v1581 = vand.u32 %v1392, 2147483648
    %v1582 = vsel %vm1580, %v1581, %v1579
    %v1583 = vrsqrt.pop %v1393
    %v1584 = vmul.f32 %v1583, %v1393
    %v1585 = vmul.f32 %v1584, %v1583
    %v1586 = vmul.f32 0.5, %v1585
    %v1587 = vsub.f32 1.5, %v1586
    %v1588 = vmul.f32 %v1583, %v1587
    %v1589 = vmul.f32 %v1393, %v1588
    %vm1590 = vcmp.eq.f32.partialorder %v1393, inf
    %v1591 = vsel %vm1590, %v1393, %v1589
    %vm1592 = vcmp.eq.f32.partialorder %v1393, 0.0
    %v1593 = vand.u32 %v1393, 2147483648
    %v1594 = vsel %vm1592, %v1593, %v1591
    %v1595 = vrsqrt.pop %v1394
    %v1596 = vmul.f32 %v1595, %v1394
    %v1597 = vmul.f32 %v1596, %v1595
    %v1598 = vmul.f32 0.5, %v1597
    %v1599 = vsub.f32 1.5, %v1598
    %v1600 = vmul.f32 %v1595, %v1599
    %v1601 = vmul.f32 %v1394, %v1600
    %vm1602 = vcmp.eq.f32.partialorder %v1394, inf
    %v1603 = vsel %vm1602, %v1394, %v1601
    %vm1604 = vcmp.eq.f32.partialorder %v1394, 0.0
    %v1605 = vand.u32 %v1394, 2147483648
    %v1606 = vsel %vm1604, %v1605, %v1603
    %v1607 = vrsqrt.pop %v1395
    %v1608 = vmul.f32 %v1607, %v1395
    %v1609 = vmul.f32 %v1608, %v1607
    %v1610 = vmul.f32 0.5, %v1609
    %v1611 = vsub.f32 1.5, %v1610
    %v1612 = vmul.f32 %v1607, %v1611
    %v1613 = vmul.f32 %v1395, %v1612
    %vm1614 = vcmp.eq.f32.partialorder %v1395, inf
    %v1615 = vsel %vm1614, %v1395, %v1613
    %vm1616 = vcmp.eq.f32.partialorder %v1395, 0.0
    %v1617 = vand.u32 %v1395, 2147483648
    %v1618 = vsel %vm1616, %v1617, %v1615
    %v1619 = vrsqrt.pop %v1396
    %v1620 = vmul.f32 %v1619, %v1396
    %v1621 = vmul.f32 %v1620, %v1619
    %v1622 = vmul.f32 0.5, %v1621
    %v1623 = vsub.f32 1.5, %v1622
    %v1624 = vmul.f32 %v1619, %v1623
    %v1625 = vmul.f32 %v1396, %v1624
    %vm1626 = vcmp.eq.f32.partialorder %v1396, inf
    %v1627 = vsel %vm1626, %v1396, %v1625
    %vm1628 = vcmp.eq.f32.partialorder %v1396, 0.0
    %v1629 = vand.u32 %v1396, 2147483648
    %v1630 = vsel %vm1628, %v1629, %v1627
    %v1631 = vrsqrt.pop %v1397
    %v1632 = vmul.f32 %v1631, %v1397
    %v1633 = vmul.f32 %v1632, %v1631
    %v1634 = vmul.f32 0.5, %v1633
    %v1635 = vsub.f32 1.5, %v1634
    %v1636 = vmul.f32 %v1631, %v1635
    %v1637 = vmul.f32 %v1397, %v1636
    %vm1638 = vcmp.eq.f32.partialorder %v1397, inf
    %v1639 = vsel %vm1638, %v1397, %v1637
    %vm1640 = vcmp.eq.f32.partialorder %v1397, 0.0
    %v1641 = vand.u32 %v1397, 2147483648
    %v1642 = vsel %vm1640, %v1641, %v1639
    %v1643 = vrsqrt.pop %v1398
    %v1644 = vmul.f32 %v1643, %v1398
    %v1645 = vmul.f32 %v1644, %v1643
    %v1646 = vmul.f32 0.5, %v1645
    %v1647 = vsub.f32 1.5, %v1646
    %v1648 = vmul.f32 %v1643, %v1647
    %v1649 = vmul.f32 %v1398, %v1648
    %vm1650 = vcmp.eq.f32.partialorder %v1398, inf
    %v1651 = vsel %vm1650, %v1398, %v1649
    %vm1652 = vcmp.eq.f32.partialorder %v1398, 0.0
    %v1653 = vand.u32 %v1398, 2147483648
    %v1654 = vsel %vm1652, %v1653, %v1651
    %v1655 = vrsqrt.pop %v1399
    %v1656 = vmul.f32 %v1655, %v1399
    %v1657 = vmul.f32 %v1656, %v1655
    %v1658 = vmul.f32 0.5, %v1657
    %v1659 = vsub.f32 1.5, %v1658
    %v1660 = vmul.f32 %v1655, %v1659
    %v1661 = vmul.f32 %v1399, %v1660
    %vm1662 = vcmp.eq.f32.partialorder %v1399, inf
    %v1663 = vsel %vm1662, %v1399, %v1661
    %vm1664 = vcmp.eq.f32.partialorder %v1399, 0.0
    %v1665 = vand.u32 %v1399, 2147483648
    %v1666 = vsel %vm1664, %v1665, %v1663
    %v1667 = vrsqrt.pop %v1400
    %v1668 = vmul.f32 %v1667, %v1400
    %v1669 = vmul.f32 %v1668, %v1667
    %v1670 = vmul.f32 0.5, %v1669
    %v1671 = vsub.f32 1.5, %v1670
    %v1672 = vmul.f32 %v1667, %v1671
    %v1673 = vmul.f32 %v1400, %v1672
    %vm1674 = vcmp.eq.f32.partialorder %v1400, inf
    %v1675 = vsel %vm1674, %v1400, %v1673
    %vm1676 = vcmp.eq.f32.partialorder %v1400, 0.0
    %v1677 = vand.u32 %v1400, 2147483648
    %v1678 = vsel %vm1676, %v1677, %v1675
    %v1679 = vrsqrt.pop %v1401
    %v1680 = vmul.f32 %v1679, %v1401
    %v1681 = vmul.f32 %v1680, %v1679
    %v1682 = vmul.f32 0.5, %v1681
    %v1683 = vsub.f32 1.5, %v1682
    %v1684 = vmul.f32 %v1679, %v1683
    %v1685 = vmul.f32 %v1401, %v1684
    %vm1686 = vcmp.eq.f32.partialorder %v1401, inf
    %v1687 = vsel %vm1686, %v1401, %v1685
    %vm1688 = vcmp.eq.f32.partialorder %v1401, 0.0
    %v1689 = vand.u32 %v1401, 2147483648
    %v1690 = vsel %vm1688, %v1689, %v1687
    %v1691 = vrsqrt.pop %v1402
    %v1692 = vmul.f32 %v1691, %v1402
    %v1693 = vmul.f32 %v1692, %v1691
    %v1694 = vmul.f32 0.5, %v1693
    %v1695 = vsub.f32 1.5, %v1694
    %v1696 = vmul.f32 %v1691, %v1695
    %v1697 = vmul.f32 %v1402, %v1696
    %vm1698 = vcmp.eq.f32.partialorder %v1402, inf
    %v1699 = vsel %vm1698, %v1402, %v1697
    %vm1700 = vcmp.eq.f32.partialorder %v1402, 0.0
    %v1701 = vand.u32 %v1402, 2147483648
    %v1702 = vsel %vm1700, %v1701, %v1699
    %v1703 = vrsqrt.pop %v1403
    %v1704 = vmul.f32 %v1703, %v1403
    %v1705 = vmul.f32 %v1704, %v1703
    %v1706 = vmul.f32 0.5, %v1705
    %v1707 = vsub.f32 1.5, %v1706
    %v1708 = vmul.f32 %v1703, %v1707
    %v1709 = vmul.f32 %v1403, %v1708
    %vm1710 = vcmp.eq.f32.partialorder %v1403, inf
    %v1711 = vsel %vm1710, %v1403, %v1709
    %vm1712 = vcmp.eq.f32.partialorder %v1403, 0.0
    %v1713 = vand.u32 %v1403, 2147483648
    %v1714 = vsel %vm1712, %v1713, %v1711
    %v1715 = vrsqrt.pop %v1404
    %v1716 = vmul.f32 %v1715, %v1404
    %v1717 = vmul.f32 %v1716, %v1715
    %v1718 = vmul.f32 0.5, %v1717
    %v1719 = vsub.f32 1.5, %v1718
    %v1720 = vmul.f32 %v1715, %v1719
    %v1721 = vmul.f32 %v1404, %v1720
    %vm1722 = vcmp.eq.f32.partialorder %v1404, inf
    %v1723 = vsel %vm1722, %v1404, %v1721
    %vm1724 = vcmp.eq.f32.partialorder %v1404, 0.0
    %v1725 = vand.u32 %v1404, 2147483648
    %v1726 = vsel %vm1724, %v1725, %v1723
    %v1727 = vrsqrt.pop %v1405
    %v1728 = vmul.f32 %v1727, %v1405
    %v1729 = vmul.f32 %v1728, %v1727
    %v1730 = vmul.f32 0.5, %v1729
    %v1731 = vsub.f32 1.5, %v1730
    %v1732 = vmul.f32 %v1727, %v1731
    %v1733 = vmul.f32 %v1405, %v1732
    %vm1734 = vcmp.eq.f32.partialorder %v1405, inf
    %v1735 = vsel %vm1734, %v1405, %v1733
    %vm1736 = vcmp.eq.f32.partialorder %v1405, 0.0
    %v1737 = vand.u32 %v1405, 2147483648
    %v1738 = vsel %vm1736, %v1737, %v1735
    %v1739 = vrsqrt.pop %v1406
    %v1740 = vmul.f32 %v1739, %v1406
    %v1741 = vmul.f32 %v1740, %v1739
    %v1742 = vmul.f32 0.5, %v1741
    %v1743 = vsub.f32 1.5, %v1742
    %v1744 = vmul.f32 %v1739, %v1743
    %v1745 = vmul.f32 %v1406, %v1744
    %vm1746 = vcmp.eq.f32.partialorder %v1406, inf
    %v1747 = vsel %vm1746, %v1406, %v1745
    %vm1748 = vcmp.eq.f32.partialorder %v1406, 0.0
    %v1749 = vand.u32 %v1406, 2147483648
    %v1750 = vsel %vm1748, %v1749, %v1747
    %v1751 = vrsqrt.pop %v1407
    %v1752 = vmul.f32 %v1751, %v1407
    %v1753 = vmul.f32 %v1752, %v1751
    %v1754 = vmul.f32 0.5, %v1753
    %v1755 = vsub.f32 1.5, %v1754
    %v1756 = vmul.f32 %v1751, %v1755
    %v1757 = vmul.f32 %v1407, %v1756
    %vm1758 = vcmp.eq.f32.partialorder %v1407, inf
    %v1759 = vsel %vm1758, %v1407, %v1757
    %vm1760 = vcmp.eq.f32.partialorder %v1407, 0.0
    %v1761 = vand.u32 %v1407, 2147483648
    %v1762 = vsel %vm1760, %v1761, %v1759
    %v1763 = vrsqrt.pop %v1408
    %v1764 = vmul.f32 %v1763, %v1408
    %v1765 = vmul.f32 %v1764, %v1763
    %v1766 = vmul.f32 0.5, %v1765
    %v1767 = vsub.f32 1.5, %v1766
    %v1768 = vmul.f32 %v1763, %v1767
    %v1769 = vmul.f32 %v1408, %v1768
    %vm1770 = vcmp.eq.f32.partialorder %v1408, inf
    %v1771 = vsel %vm1770, %v1408, %v1769
    %vm1772 = vcmp.eq.f32.partialorder %v1408, 0.0
    %v1773 = vand.u32 %v1408, 2147483648
    %v1774 = vsel %vm1772, %v1773, %v1771
    %v1775 = vrsqrt.pop %v1409
    %v1776 = vmul.f32 %v1775, %v1409
    %v1777 = vmul.f32 %v1776, %v1775
    %v1778 = vmul.f32 0.5, %v1777
    %v1779 = vsub.f32 1.5, %v1778
    %v1780 = vmul.f32 %v1775, %v1779
    %v1781 = vmul.f32 %v1409, %v1780
    %vm1782 = vcmp.eq.f32.partialorder %v1409, inf
    %v1783 = vsel %vm1782, %v1409, %v1781
    %vm1784 = vcmp.eq.f32.partialorder %v1409, 0.0
    %v1785 = vand.u32 %v1409, 2147483648
    %v1786 = vsel %vm1784, %v1785, %v1783
    %v1787 = vrsqrt.pop %v1410
    %v1788 = vmul.f32 %v1787, %v1410
    %v1789 = vmul.f32 %v1788, %v1787
    %v1790 = vmul.f32 0.5, %v1789
    %v1791 = vsub.f32 1.5, %v1790
    %v1792 = vmul.f32 %v1787, %v1791
    %v1793 = vmul.f32 %v1410, %v1792
    %vm1794 = vcmp.eq.f32.partialorder %v1410, inf
    %v1795 = vsel %vm1794, %v1410, %v1793
    %vm1796 = vcmp.eq.f32.partialorder %v1410, 0.0
    %v1797 = vand.u32 %v1410, 2147483648
    %v1798 = vsel %vm1796, %v1797, %v1795
    %v1799 = vrsqrt.pop %v1411
    %v1800 = vmul.f32 %v1799, %v1411
    %v1801 = vmul.f32 %v1800, %v1799
    %v1802 = vmul.f32 0.5, %v1801
    %v1803 = vsub.f32 1.5, %v1802
    %v1804 = vmul.f32 %v1799, %v1803
    %v1805 = vmul.f32 %v1411, %v1804
    %vm1806 = vcmp.eq.f32.partialorder %v1411, inf
    %v1807 = vsel %vm1806, %v1411, %v1805
    %vm1808 = vcmp.eq.f32.partialorder %v1411, 0.0
    %v1809 = vand.u32 %v1411, 2147483648
    %v1810 = vsel %vm1808, %v1809, %v1807
    %v1811 = vrsqrt.pop %v1412
    %v1812 = vmul.f32 %v1811, %v1412
    %v1813 = vmul.f32 %v1812, %v1811
    %v1814 = vmul.f32 0.5, %v1813
    %v1815 = vsub.f32 1.5, %v1814
    %v1816 = vmul.f32 %v1811, %v1815
    %v1817 = vmul.f32 %v1412, %v1816
    %vm1818 = vcmp.eq.f32.partialorder %v1412, inf
    %v1819 = vsel %vm1818, %v1412, %v1817
    %vm1820 = vcmp.eq.f32.partialorder %v1412, 0.0
    %v1821 = vand.u32 %v1412, 2147483648
    %v1822 = vsel %vm1820, %v1821, %v1819
    %v1823 = vrsqrt.pop %v1413
    %v1824 = vmul.f32 %v1823, %v1413
    %v1825 = vmul.f32 %v1824, %v1823
    %v1826 = vmul.f32 0.5, %v1825
    %v1827 = vsub.f32 1.5, %v1826
    %v1828 = vmul.f32 %v1823, %v1827
    %v1829 = vmul.f32 %v1413, %v1828
    %vm1830 = vcmp.eq.f32.partialorder %v1413, inf
    %v1831 = vsel %vm1830, %v1413, %v1829
    %vm1832 = vcmp.eq.f32.partialorder %v1413, 0.0
    %v1833 = vand.u32 %v1413, 2147483648
    %v1834 = vsel %vm1832, %v1833, %v1831
    %v1835 = vrsqrt.pop %v1414
    %v1836 = vmul.f32 %v1835, %v1414
    %v1837 = vmul.f32 %v1836, %v1835
    %v1838 = vmul.f32 0.5, %v1837
    %v1839 = vsub.f32 1.5, %v1838
    %v1840 = vmul.f32 %v1835, %v1839
    %v1841 = vmul.f32 %v1414, %v1840
    %vm1842 = vcmp.eq.f32.partialorder %v1414, inf
    %v1843 = vsel %vm1842, %v1414, %v1841
    %vm1844 = vcmp.eq.f32.partialorder %v1414, 0.0
    %v1845 = vand.u32 %v1414, 2147483648
    %v1846 = vsel %vm1844, %v1845, %v1843
    %1883 = vset.pattern.permute.xlu0 0
    %1884 = vperm.xlu0 %1883, %v1426
    %v1885 = vpop.permute.xlu0 %1884
    %1886 = vset.pattern.permute.xlu0 0
    %1887 = vperm.xlu0 %1886, %v1438
    %v1888 = vpop.permute.xlu0 %1887
    %1889 = vset.pattern.permute.xlu0 0
    %1890 = vperm.xlu0 %1889, %v1450
    %v1891 = vpop.permute.xlu0 %1890
    %1892 = vset.pattern.permute.xlu0 0
    %1893 = vperm.xlu0 %1892, %v1462
    %v1894 = vpop.permute.xlu0 %1893
    %1895 = vset.pattern.permute.xlu0 0
    %1896 = vperm.xlu0 %1895, %v1474
    %v1897 = vpop.permute.xlu0 %1896
    %1898 = vset.pattern.permute.xlu0 0
    %1899 = vperm.xlu0 %1898, %v1486
    %v1900 = vpop.permute.xlu0 %1899
    %1901 = vset.pattern.permute.xlu0 0
    %1902 = vperm.xlu0 %1901, %v1498
    %v1903 = vpop.permute.xlu0 %1902
    %1904 = vset.pattern.permute.xlu0 0
    %1905 = vperm.xlu0 %1904, %v1510
    %v1906 = vpop.permute.xlu0 %1905
    %1907 = vset.pattern.permute.xlu0 0
    %1908 = vperm.xlu0 %1907, %v1522
    %v1909 = vpop.permute.xlu0 %1908
    %1910 = vset.pattern.permute.xlu0 0
    %1911 = vperm.xlu0 %1910, %v1534
    %v1912 = vpop.permute.xlu0 %1911
    %1913 = vset.pattern.permute.xlu0 0
    %1914 = vperm.xlu0 %1913, %v1546
    %v1915 = vpop.permute.xlu0 %1914
    %1916 = vset.pattern.permute.xlu0 0
    %1917 = vperm.xlu0 %1916, %v1558
    %v1918 = vpop.permute.xlu0 %1917
    %1919 = vset.pattern.permute.xlu0 0
    %1920 = vperm.xlu0 %1919, %v1570
    %v1921 = vpop.permute.xlu0 %1920
    %1922 = vset.pattern.permute.xlu0 0
    %1923 = vperm.xlu0 %1922, %v1582
    %v1924 = vpop.permute.xlu0 %1923
    %1925 = vset.pattern.permute.xlu0 0
    %1926 = vperm.xlu0 %1925, %v1594
    %v1927 = vpop.permute.xlu0 %1926
    %1928 = vset.pattern.permute.xlu0 0
    %1929 = vperm.xlu0 %1928, %v1606
    %v1930 = vpop.permute.xlu0 %1929
    %1931 = vset.pattern.permute.xlu0 0
    %1932 = vperm.xlu0 %1931, %v1618
    %v1933 = vpop.permute.xlu0 %1932
    %1934 = vset.pattern.permute.xlu0 0
    %1935 = vperm.xlu0 %1934, %v1630
    %v1936 = vpop.permute.xlu0 %1935
    %1937 = vset.pattern.permute.xlu0 0
    %1938 = vperm.xlu0 %1937, %v1642
    %v1939 = vpop.permute.xlu0 %1938
    %1940 = vset.pattern.permute.xlu0 0
    %1941 = vperm.xlu0 %1940, %v1654
    %v1942 = vpop.permute.xlu0 %1941
    %1943 = vset.pattern.permute.xlu0 0
    %1944 = vperm.xlu0 %1943, %v1666
    %v1945 = vpop.permute.xlu0 %1944
    %1946 = vset.pattern.permute.xlu0 0
    %1947 = vperm.xlu0 %1946, %v1678
    %v1948 = vpop.permute.xlu0 %1947
    %1949 = vset.pattern.permute.xlu0 0
    %1950 = vperm.xlu0 %1949, %v1690
    %v1951 = vpop.permute.xlu0 %1950
    %1952 = vset.pattern.permute.xlu0 0
    %1953 = vperm.xlu0 %1952, %v1702
    %v1954 = vpop.permute.xlu0 %1953
    %1955 = vset.pattern.permute.xlu0 0
    %1956 = vperm.xlu0 %1955, %v1714
    %v1957 = vpop.permute.xlu0 %1956
    %1958 = vset.pattern.permute.xlu0 0
    %1959 = vperm.xlu0 %1958, %v1726
    %v1960 = vpop.permute.xlu0 %1959
    %1961 = vset.pattern.permute.xlu0 0
    %1962 = vperm.xlu0 %1961, %v1738
    %v1963 = vpop.permute.xlu0 %1962
    %1964 = vset.pattern.permute.xlu0 0
    %1965 = vperm.xlu0 %1964, %v1750
    %v1966 = vpop.permute.xlu0 %1965
    %1967 = vset.pattern.permute.xlu0 0
    %1968 = vperm.xlu0 %1967, %v1762
    %v1969 = vpop.permute.xlu0 %1968
    %1970 = vset.pattern.permute.xlu0 0
    %1971 = vperm.xlu0 %1970, %v1774
    %v1972 = vpop.permute.xlu0 %1971
    %1973 = vset.pattern.permute.xlu0 0
    %1974 = vperm.xlu0 %1973, %v1786
    %v1975 = vpop.permute.xlu0 %1974
    %1976 = vset.pattern.permute.xlu0 0
    %1977 = vperm.xlu0 %1976, %v1798
    %v1978 = vpop.permute.xlu0 %1977
    %1979 = vset.pattern.permute.xlu0 0
    %1980 = vperm.xlu0 %1979, %v1810
    %v1981 = vpop.permute.xlu0 %1980
    %1982 = vset.pattern.permute.xlu0 0
    %1983 = vperm.xlu0 %1982, %v1822
    %v1984 = vpop.permute.xlu0 %1983
    %1985 = vset.pattern.permute.xlu0 0
    %1986 = vperm.xlu0 %1985, %v1834
    %v1987 = vpop.permute.xlu0 %1986
    %1988 = vset.pattern.permute.xlu0 0
    %1989 = vperm.xlu0 %1988, %v1846
    %v1990 = vpop.permute.xlu0 %1989
    %v1991 = vperm.slane %v1885, %v562
    %v1992 = vperm.slane %v1888, %v564
    %v1993 = vsel %vm566, %v1992, %v1991
    %v1994 = vperm.slane %v1891, %v568
    %v1995 = vsel %vm570, %v1994, %v1993
    %v1996 = vperm.slane %v1894, %v572
    %v1997 = vsel %vm574, %v1996, %v1995
    %v1998 = vperm.slane %v1897, %v576
    %v1999 = vsel %vm578, %v1998, %v1997
    %v2000 = vperm.slane %v1900, %v580
    %v2001 = vsel %vm582, %v2000, %v1999
    %v2002 = vperm.slane %v1903, %v584
    %v2003 = vsel %vm586, %v2002, %v2001
    %v2004 = vperm.slane %v1906, %v588
    %v2005 = vsel %vm590, %v2004, %v2003
    %v2006 = vperm.slane %v1909, %v592
    %v2007 = vsel %vm594, %v2006, %v2005
    %v2008 = vperm.slane %v1912, %v596
    %v2009 = vsel %vm598, %v2008, %v2007
    %v2010 = vperm.slane %v1915, %v600
    %v2011 = vsel %vm602, %v2010, %v2009
    %v2012 = vperm.slane %v1918, %v604
    %v2013 = vsel %vm606, %v2012, %v2011
    %v2014 = vperm.slane %v1921, %v608
    %v2015 = vsel %vm610, %v2014, %v2013
    %v2016 = vperm.slane %v1924, %v612
    %v2017 = vsel %vm614, %v2016, %v2015
    %v2018 = vperm.slane %v1927, %v616
    %v2019 = vsel %vm618, %v2018, %v2017
    %v2020 = vperm.slane %v1930, %v620
    %v2021 = vsel %vm622, %v2020, %v2019
    %v2022 = vperm.slane %v1933, %v562
    %v2023 = vperm.slane %v1936, %v564
    %v2024 = vsel %vm566, %v2023, %v2022
    %v2025 = vperm.slane %v1939, %v562
    %v2026 = vperm.slane %v1942, %v564
    %v2027 = vsel %vm566, %v2026, %v2025
    %v2028 = vperm.slane %v1945, %v568
    %v2029 = vsel %vm570, %v2028, %v2027
    %v2030 = vperm.slane %v1948, %v572
    %v2031 = vsel %vm574, %v2030, %v2029
    %v2032 = vperm.slane %v1951, %v576
    %v2033 = vsel %vm578, %v2032, %v2031
    %v2034 = vperm.slane %v1954, %v580
    %v2035 = vsel %vm582, %v2034, %v2033
    %v2036 = vperm.slane %v1957, %v584
    %v2037 = vsel %vm586, %v2036, %v2035
    %v2038 = vperm.slane %v1960, %v588
    %v2039 = vsel %vm590, %v2038, %v2037
    %v2040 = vperm.slane %v1963, %v592
    %v2041 = vsel %vm594, %v2040, %v2039
    %v2042 = vperm.slane %v1966, %v596
    %v2043 = vsel %vm598, %v2042, %v2041
    %v2044 = vperm.slane %v1969, %v600
    %v2045 = vsel %vm602, %v2044, %v2043
    %v2046 = vperm.slane %v1972, %v604
    %v2047 = vsel %vm606, %v2046, %v2045
    %v2048 = vperm.slane %v1975, %v608
    %v2049 = vsel %vm610, %v2048, %v2047
    %v2050 = vperm.slane %v1978, %v612
    %v2051 = vsel %vm614, %v2050, %v2049
    %v2052 = vperm.slane %v1981, %v616
    %v2053 = vsel %vm618, %v2052, %v2051
    %v2054 = vperm.slane %v1984, %v620
    %v2055 = vsel %vm622, %v2054, %v2053
    %v2056 = vperm.slane %v1987, %v562
    %v2057 = vperm.slane %v1990, %v564
    %v2058 = vsel %vm566, %v2057, %v2056
    %v2059 = vsel %vm661, %v2055, %v2021
    %v2060 = vsel %vm661, %v2058, %v2024
    %v2062 = vsel %vm665, %v2060, 0
    %2064 = vmatpush.msra.mxu0 %v482
    %2065 = vmatpush.msra.mxu0 %v480
    %2066 = vmatpush.msra.mxu0 %v478
    %2067 = vmatpush.msra.mxu0 %v476
    %2068 = vmatpush.msra.mxu0 %v474
    %2069 = vmatpush.msra.mxu0 %v472
    %2070 = vmatpush.msra.mxu0 %v470
    %2071 = vmatpush.msra.mxu0 %v468
    %2072 = vmatpush.msra.mxu0 %v466
    %2073 = vmatpush.msra.mxu0 %v464
    %2074 = vmatpush.msra.mxu0 %v462
    %2075 = vmatpush.msra.mxu0 %v460
    %2076 = vmatpush.msra.mxu0 %v458
    %2077 = vmatpush.msra.mxu0 %v456
    %2078 = vmatpush.msra.mxu0 %v454
    %2079 = vmatpush.msra.mxu0 %v452
    %2080 = vmatmul.f32.gmra.mxu0 %v2059
    %v2081 = vpop.f32.mrf.mxu0
    %v2082 = vadd.f32 0.0, %v2081
    %2083 = vdwg.mxu0
    %2084 = vmatpush.msra.mxu0 0.0
    %2085 = vmatpush.msra.mxu0 0.0
    %2086 = vmatpush.msra.mxu0 0.0
    %2087 = vmatpush.msra.mxu0 0.0
    %2088 = vmatpush.msra.mxu0 0.0
    %2089 = vmatpush.msra.mxu0 0.0
    %2090 = vmatpush.msra.mxu0 0.0
    %2091 = vmatpush.msra.mxu0 0.0
    %2092 = vmatpush.msra.mxu0 0.0
    %2093 = vmatpush.msra.mxu0 0.0
    %2094 = vmatpush.msra.mxu0 0.0
    %2095 = vmatpush.msra.mxu0 0.0
    %2096 = vmatpush.msra.mxu0 0.0
    %2097 = vmatpush.msra.mxu0 0.0
    %2098 = vmatpush.msra.mxu0 %v486
    %2099 = vmatpush.msra.mxu0 %v484
    %2100 = vmatmul.f32.gmra.mxu0 %v2062
    %v2101 = vpop.f32.mrf.mxu0
    %v2102 = vadd.f32 %v2082, %v2101
    %2103 = vdwg.mxu0
    %2104 = vmatpush.msra.mxu0 %v483
    %2105 = vmatpush.msra.mxu0 %v481
    %2106 = vmatpush.msra.mxu0 %v479
    %2107 = vmatpush.msra.mxu0 %v477
    %2108 = vmatpush.msra.mxu0 %v475
    %2109 = vmatpush.msra.mxu0 %v473
    %2110 = vmatpush.msra.mxu0 %v471
    %2111 = vmatpush.msra.mxu0 %v469
    %2112 = vmatpush.msra.mxu0 %v467
    %2113 = vmatpush.msra.mxu0 %v465
    %2114 = vmatpush.msra.mxu0 %v463
    %2115 = vmatpush.msra.mxu0 %v461
    %2116 = vmatpush.msra.mxu0 %v459
    %2117 = vmatpush.msra.mxu0 %v457
    %2118 = vmatpush.msra.mxu0 %v455
    %2119 = vmatpush.msra.mxu0 %v453
    %2120 = vmatmul.f32.gmra.mxu0 %v2059
    %v2121 = vpop.f32.mrf.mxu0
    %v2122 = vadd.f32 0.0, %v2121
    %2123 = vdwg.mxu0
    %2124 = vmatpush.msra.mxu0 0.0
    %2125 = vmatpush.msra.mxu0 0.0
    %2126 = vmatpush.msra.mxu0 0.0
    %2127 = vmatpush.msra.mxu0 0.0
    %2128 = vmatpush.msra.mxu0 0.0
    %2129 = vmatpush.msra.mxu0 0.0
    %2130 = vmatpush.msra.mxu0 0.0
    %2131 = vmatpush.msra.mxu0 0.0
    %2132 = vmatpush.msra.mxu0 0.0
    %2133 = vmatpush.msra.mxu0 0.0
    %2134 = vmatpush.msra.mxu0 0.0
    %2135 = vmatpush.msra.mxu0 0.0
    %2136 = vmatpush.msra.mxu0 0.0
    %2137 = vmatpush.msra.mxu0 0.0
    %2138 = vmatpush.msra.mxu0 %v487
    %2139 = vmatpush.msra.mxu0 %v485
    %2140 = vmatmul.f32.gmra.mxu0 %v2062
    %v2141 = vpop.f32.mrf.mxu0
    %v2142 = vadd.f32 %v2122, %v2141
    %2143 = vdwg.mxu0
    %vm2144 = vcmp.le.f32.partialorder %v2102, 1e-08
    %vm2145 = vcmp.le.f32.partialorder %v2142, 1e-08
    %v2146 = vsel %vm2144, 1.0, %v2102
    %v2147 = vsel %vm2145, 1.0, %v2142
    %v2148 = vrcp.pop %v2146
    %v2149 = vmul.f32 %v2146, %v2148
    %v2150 = vsub.f32 1.0, %v2149
    %v2151 = vmul.f32 %v2148, %v2150
    %v2152 = vadd.f32 %v2148, %v2151
    %vm2153 = vweird.f32 %v2146
    %vm2154 = vweird.f32 %v2148
    %vm2155 = vmor %vm2153, %vm2154
    %v2156 = vsel %vm2155, %v2148, %v2152
    %v2157 = vand.u32 2147483647, %v2146
    %vm2158 = vcmp.eq.f32.partialorder %v2157, 8.507059e+37
    %v2159 = vand.u32 %v2146, 2147483648
    %v2160 = vor.u32 1.1754944e-38, %v2159
    %v2161 = vsel %vm2158, %v2160, %v2156
    %v2162 = vrcp.pop %v2147
    %v2163 = vmul.f32 %v2147, %v2162
    %v2164 = vsub.f32 1.0, %v2163
    %v2165 = vmul.f32 %v2162, %v2164
    %v2166 = vadd.f32 %v2162, %v2165
    %vm2167 = vweird.f32 %v2147
    %vm2168 = vweird.f32 %v2162
    %vm2169 = vmor %vm2167, %vm2168
    %v2170 = vsel %vm2169, %v2162, %v2166
    %v2171 = vand.u32 2147483647, %v2147
    %vm2172 = vcmp.eq.f32.partialorder %v2171, 8.507059e+37
    %v2173 = vand.u32 %v2147, 2147483648
    %v2174 = vor.u32 1.1754944e-38, %v2173
    %v2175 = vsel %vm2172, %v2174, %v2170
    %v2178 = vperm.slane %v706, 0
    %v2179 = vlaneseq
    %v2180 = vshrl.u32 %v2179, 7
    %2182 = vset.pattern.permute.xlu0 %v2180
    %2183 = vperm.xlu0 %2182, %v2178
    %v2184 = vpop.permute.xlu0 %2183
    %v2185 = vlaneseq
    %v2186 = vshrl.u32 %v2185, 7
    %v2187 = vadd.s32 %v2186, 8
    %2188 = vset.pattern.permute.xlu0 %v2187
    %2189 = vperm.xlu0 %2188, %v2178
    %v2190 = vpop.permute.xlu0 %2189
    %v2191 = vlaneseq
    %v2192 = vshrl.u32 %v2191, 7
    %v2193 = vadd.s32 %v2192, 16
    %2194 = vset.pattern.permute.xlu0 %v2193
    %2195 = vperm.xlu0 %2194, %v2178
    %v2196 = vpop.permute.xlu0 %2195
    %v2197 = vlaneseq
    %v2198 = vshrl.u32 %v2197, 7
    %v2199 = vadd.s32 %v2198, 24
    %2200 = vset.pattern.permute.xlu0 %v2199
    %2201 = vperm.xlu0 %2200, %v2178
    %v2202 = vpop.permute.xlu0 %2201
    %v2203 = vlaneseq
    %v2204 = vshrl.u32 %v2203, 7
    %v2205 = vadd.s32 %v2204, 32
    %2206 = vset.pattern.permute.xlu0 %v2205
    %2207 = vperm.xlu0 %2206, %v2178
    %v2208 = vpop.permute.xlu0 %2207
    %v2209 = vlaneseq
    %v2210 = vshrl.u32 %v2209, 7
    %v2211 = vadd.s32 %v2210, 40
    %2212 = vset.pattern.permute.xlu0 %v2211
    %2213 = vperm.xlu0 %2212, %v2178
    %v2214 = vpop.permute.xlu0 %2213
    %v2215 = vlaneseq
    %v2216 = vshrl.u32 %v2215, 7
    %v2217 = vadd.s32 %v2216, 48
    %2218 = vset.pattern.permute.xlu0 %v2217
    %2219 = vperm.xlu0 %2218, %v2178
    %v2220 = vpop.permute.xlu0 %2219
    %v2221 = vlaneseq
    %v2222 = vshrl.u32 %v2221, 7
    %v2223 = vadd.s32 %v2222, 56
    %2224 = vset.pattern.permute.xlu0 %v2223
    %2225 = vperm.xlu0 %2224, %v2178
    %v2226 = vpop.permute.xlu0 %2225
    %v2227 = vlaneseq
    %v2228 = vshrl.u32 %v2227, 7
    %v2229 = vadd.s32 %v2228, 64
    %2230 = vset.pattern.permute.xlu0 %v2229
    %2231 = vperm.xlu0 %2230, %v2178
    %v2232 = vpop.permute.xlu0 %2231
    %v2233 = vlaneseq
    %v2234 = vshrl.u32 %v2233, 7
    %v2235 = vadd.s32 %v2234, 72
    %2236 = vset.pattern.permute.xlu0 %v2235
    %2237 = vperm.xlu0 %2236, %v2178
    %v2238 = vpop.permute.xlu0 %2237
    %v2239 = vlaneseq
    %v2240 = vshrl.u32 %v2239, 7
    %v2241 = vadd.s32 %v2240, 80
    %2242 = vset.pattern.permute.xlu0 %v2241
    %2243 = vperm.xlu0 %2242, %v2178
    %v2244 = vpop.permute.xlu0 %2243
    %v2245 = vlaneseq
    %v2246 = vshrl.u32 %v2245, 7
    %v2247 = vadd.s32 %v2246, 88
    %2248 = vset.pattern.permute.xlu0 %v2247
    %2249 = vperm.xlu0 %2248, %v2178
    %v2250 = vpop.permute.xlu0 %2249
    %v2251 = vlaneseq
    %v2252 = vshrl.u32 %v2251, 7
    %v2253 = vadd.s32 %v2252, 96
    %2254 = vset.pattern.permute.xlu0 %v2253
    %2255 = vperm.xlu0 %2254, %v2178
    %v2256 = vpop.permute.xlu0 %2255
    %v2257 = vlaneseq
    %v2258 = vshrl.u32 %v2257, 7
    %v2259 = vadd.s32 %v2258, 104
    %2260 = vset.pattern.permute.xlu0 %v2259
    %2261 = vperm.xlu0 %2260, %v2178
    %v2262 = vpop.permute.xlu0 %2261
    %v2263 = vlaneseq
    %v2264 = vshrl.u32 %v2263, 7
    %v2265 = vadd.s32 %v2264, 112
    %2266 = vset.pattern.permute.xlu0 %v2265
    %2267 = vperm.xlu0 %2266, %v2178
    %v2268 = vpop.permute.xlu0 %2267
    %v2269 = vlaneseq
    %v2270 = vshrl.u32 %v2269, 7
    %v2271 = vadd.s32 %v2270, 120
    %2272 = vset.pattern.permute.xlu0 %v2271
    %2273 = vperm.xlu0 %2272, %v2178
    %v2274 = vpop.permute.xlu0 %2273
    %v2275 = vperm.slane %v746, 0
    %v2276 = vlaneseq
    %v2277 = vshrl.u32 %v2276, 7
    %2279 = vset.pattern.permute.xlu0 %v2277
    %2280 = vperm.xlu0 %2279, %v2275
    %v2281 = vpop.permute.xlu0 %2280
    %v2282 = vlaneseq
    %v2283 = vshrl.u32 %v2282, 7
    %v2284 = vadd.s32 %v2283, 8
    %2285 = vset.pattern.permute.xlu0 %v2284
    %2286 = vperm.xlu0 %2285, %v2275
    %v2287 = vpop.permute.xlu0 %2286
    %v2288 = vperm.slane %v706, 1
    %v2289 = vlaneseq
    %v2290 = vshrl.u32 %v2289, 7
    %2292 = vset.pattern.permute.xlu0 %v2290
    %2293 = vperm.xlu0 %2292, %v2288
    %v2294 = vpop.permute.xlu0 %2293
    %v2295 = vlaneseq
    %v2296 = vshrl.u32 %v2295, 7
    %v2297 = vadd.s32 %v2296, 8
    %2298 = vset.pattern.permute.xlu0 %v2297
    %2299 = vperm.xlu0 %2298, %v2288
    %v2300 = vpop.permute.xlu0 %2299
    %v2301 = vlaneseq
    %v2302 = vshrl.u32 %v2301, 7
    %v2303 = vadd.s32 %v2302, 16
    %2304 = vset.pattern.permute.xlu0 %v2303
    %2305 = vperm.xlu0 %2304, %v2288
    %v2306 = vpop.permute.xlu0 %2305
    %v2307 = vlaneseq
    %v2308 = vshrl.u32 %v2307, 7
    %v2309 = vadd.s32 %v2308, 24
    %2310 = vset.pattern.permute.xlu0 %v2309
    %2311 = vperm.xlu0 %2310, %v2288
    %v2312 = vpop.permute.xlu0 %2311
    %v2313 = vlaneseq
    %v2314 = vshrl.u32 %v2313, 7
    %v2315 = vadd.s32 %v2314, 32
    %2316 = vset.pattern.permute.xlu0 %v2315
    %2317 = vperm.xlu0 %2316, %v2288
    %v2318 = vpop.permute.xlu0 %2317
    %v2319 = vlaneseq
    %v2320 = vshrl.u32 %v2319, 7
    %v2321 = vadd.s32 %v2320, 40
    %2322 = vset.pattern.permute.xlu0 %v2321
    %2323 = vperm.xlu0 %2322, %v2288
    %v2324 = vpop.permute.xlu0 %2323
    %v2325 = vlaneseq
    %v2326 = vshrl.u32 %v2325, 7
    %v2327 = vadd.s32 %v2326, 48
    %2328 = vset.pattern.permute.xlu0 %v2327
    %2329 = vperm.xlu0 %2328, %v2288
    %v2330 = vpop.permute.xlu0 %2329
    %v2331 = vlaneseq
    %v2332 = vshrl.u32 %v2331, 7
    %v2333 = vadd.s32 %v2332, 56
    %2334 = vset.pattern.permute.xlu0 %v2333
    %2335 = vperm.xlu0 %2334, %v2288
    %v2336 = vpop.permute.xlu0 %2335
    %v2337 = vlaneseq
    %v2338 = vshrl.u32 %v2337, 7
    %v2339 = vadd.s32 %v2338, 64
    %2340 = vset.pattern.permute.xlu0 %v2339
    %2341 = vperm.xlu0 %2340, %v2288
    %v2342 = vpop.permute.xlu0 %2341
    %v2343 = vlaneseq
    %v2344 = vshrl.u32 %v2343, 7
    %v2345 = vadd.s32 %v2344, 72
    %2346 = vset.pattern.permute.xlu0 %v2345
    %2347 = vperm.xlu0 %2346, %v2288
    %v2348 = vpop.permute.xlu0 %2347
    %v2349 = vlaneseq
    %v2350 = vshrl.u32 %v2349, 7
    %v2351 = vadd.s32 %v2350, 80
    %2352 = vset.pattern.permute.xlu0 %v2351
    %2353 = vperm.xlu0 %2352, %v2288
    %v2354 = vpop.permute.xlu0 %2353
    %v2355 = vlaneseq
    %v2356 = vshrl.u32 %v2355, 7
    %v2357 = vadd.s32 %v2356, 88
    %2358 = vset.pattern.permute.xlu0 %v2357
    %2359 = vperm.xlu0 %2358, %v2288
    %v2360 = vpop.permute.xlu0 %2359
    %v2361 = vlaneseq
    %v2362 = vshrl.u32 %v2361, 7
    %v2363 = vadd.s32 %v2362, 96
    %2364 = vset.pattern.permute.xlu0 %v2363
    %2365 = vperm.xlu0 %2364, %v2288
    %v2366 = vpop.permute.xlu0 %2365
    %v2367 = vlaneseq
    %v2368 = vshrl.u32 %v2367, 7
    %v2369 = vadd.s32 %v2368, 104
    %2370 = vset.pattern.permute.xlu0 %v2369
    %2371 = vperm.xlu0 %2370, %v2288
    %v2372 = vpop.permute.xlu0 %2371
    %v2373 = vlaneseq
    %v2374 = vshrl.u32 %v2373, 7
    %v2375 = vadd.s32 %v2374, 112
    %2376 = vset.pattern.permute.xlu0 %v2375
    %2377 = vperm.xlu0 %2376, %v2288
    %v2378 = vpop.permute.xlu0 %2377
    %v2379 = vlaneseq
    %v2380 = vshrl.u32 %v2379, 7
    %v2381 = vadd.s32 %v2380, 120
    %2382 = vset.pattern.permute.xlu0 %v2381
    %2383 = vperm.xlu0 %2382, %v2288
    %v2384 = vpop.permute.xlu0 %2383
    %v2385 = vperm.slane %v746, 1
    %v2386 = vlaneseq
    %v2387 = vshrl.u32 %v2386, 7
    %2389 = vset.pattern.permute.xlu0 %v2387
    %2390 = vperm.xlu0 %2389, %v2385
    %v2391 = vpop.permute.xlu0 %2390
    %v2392 = vlaneseq
    %v2393 = vshrl.u32 %v2392, 7
    %v2394 = vadd.s32 %v2393, 8
    %2395 = vset.pattern.permute.xlu0 %v2394
    %2396 = vperm.xlu0 %2395, %v2385
    %v2397 = vpop.permute.xlu0 %2396
    %v2434 = vsub.f32 %v200, %v2184
    %v2435 = vsub.f32 %v201, %v2190
    %v2436 = vsub.f32 %v202, %v2196
    %v2437 = vsub.f32 %v203, %v2202
    %v2438 = vsub.f32 %v204, %v2208
    %v2439 = vsub.f32 %v205, %v2214
    %v2440 = vsub.f32 %v206, %v2220
    %v2441 = vsub.f32 %v207, %v2226
    %v2442 = vsub.f32 %v208, %v2232
    %v2443 = vsub.f32 %v209, %v2238
    %v2444 = vsub.f32 %v210, %v2244
    %v2445 = vsub.f32 %v211, %v2250
    %v2446 = vsub.f32 %v212, %v2256
    %v2447 = vsub.f32 %v213, %v2262
    %v2448 = vsub.f32 %v214, %v2268
    %v2449 = vsub.f32 %v215, %v2274
    %v2450 = vsub.f32 %v216, %v2281
    %v2451 = vsub.f32 %v217, %v2287
    %v2452 = vsub.f32 %v218, %v2294
    %v2453 = vsub.f32 %v219, %v2300
    %v2454 = vsub.f32 %v220, %v2306
    %v2455 = vsub.f32 %v221, %v2312
    %v2456 = vsub.f32 %v222, %v2318
    %v2457 = vsub.f32 %v223, %v2324
    %v2458 = vsub.f32 %v224, %v2330
    %v2459 = vsub.f32 %v225, %v2336
    %v2460 = vsub.f32 %v226, %v2342
    %v2461 = vsub.f32 %v227, %v2348
    %v2462 = vsub.f32 %v228, %v2354
    %v2463 = vsub.f32 %v229, %v2360
    %v2464 = vsub.f32 %v230, %v2366
    %v2465 = vsub.f32 %v231, %v2372
    %v2466 = vsub.f32 %v232, %v2378
    %v2467 = vsub.f32 %v233, %v2384
    %v2468 = vsub.f32 %v234, %v2391
    %v2469 = vsub.f32 %v235, %v2397
    %v2472 = vperm.slane %v2161, 0
    %v2473 = vlaneseq
    %v2474 = vshrl.u32 %v2473, 7
    %2476 = vset.pattern.permute.xlu0 %v2474
    %2477 = vperm.xlu0 %2476, %v2472
    %v2478 = vpop.permute.xlu0 %2477
    %v2479 = vlaneseq
    %v2480 = vshrl.u32 %v2479, 7
    %v2481 = vadd.s32 %v2480, 8
    %2482 = vset.pattern.permute.xlu0 %v2481
    %2483 = vperm.xlu0 %2482, %v2472
    %v2484 = vpop.permute.xlu0 %2483
    %v2485 = vlaneseq
    %v2486 = vshrl.u32 %v2485, 7
    %v2487 = vadd.s32 %v2486, 16
    %2488 = vset.pattern.permute.xlu0 %v2487
    %2489 = vperm.xlu0 %2488, %v2472
    %v2490 = vpop.permute.xlu0 %2489
    %v2491 = vlaneseq
    %v2492 = vshrl.u32 %v2491, 7
    %v2493 = vadd.s32 %v2492, 24
    %2494 = vset.pattern.permute.xlu0 %v2493
    %2495 = vperm.xlu0 %2494, %v2472
    %v2496 = vpop.permute.xlu0 %2495
    %v2497 = vlaneseq
    %v2498 = vshrl.u32 %v2497, 7
    %v2499 = vadd.s32 %v2498, 32
    %2500 = vset.pattern.permute.xlu0 %v2499
    %2501 = vperm.xlu0 %2500, %v2472
    %v2502 = vpop.permute.xlu0 %2501
    %v2503 = vlaneseq
    %v2504 = vshrl.u32 %v2503, 7
    %v2505 = vadd.s32 %v2504, 40
    %2506 = vset.pattern.permute.xlu0 %v2505
    %2507 = vperm.xlu0 %2506, %v2472
    %v2508 = vpop.permute.xlu0 %2507
    %v2509 = vlaneseq
    %v2510 = vshrl.u32 %v2509, 7
    %v2511 = vadd.s32 %v2510, 48
    %2512 = vset.pattern.permute.xlu0 %v2511
    %2513 = vperm.xlu0 %2512, %v2472
    %v2514 = vpop.permute.xlu0 %2513
    %v2515 = vlaneseq
    %v2516 = vshrl.u32 %v2515, 7
    %v2517 = vadd.s32 %v2516, 56
    %2518 = vset.pattern.permute.xlu0 %v2517
    %2519 = vperm.xlu0 %2518, %v2472
    %v2520 = vpop.permute.xlu0 %2519
    %v2521 = vlaneseq
    %v2522 = vshrl.u32 %v2521, 7
    %v2523 = vadd.s32 %v2522, 64
    %2524 = vset.pattern.permute.xlu0 %v2523
    %2525 = vperm.xlu0 %2524, %v2472
    %v2526 = vpop.permute.xlu0 %2525
    %v2527 = vlaneseq
    %v2528 = vshrl.u32 %v2527, 7
    %v2529 = vadd.s32 %v2528, 72
    %2530 = vset.pattern.permute.xlu0 %v2529
    %2531 = vperm.xlu0 %2530, %v2472
    %v2532 = vpop.permute.xlu0 %2531
    %v2533 = vlaneseq
    %v2534 = vshrl.u32 %v2533, 7
    %v2535 = vadd.s32 %v2534, 80
    %2536 = vset.pattern.permute.xlu0 %v2535
    %2537 = vperm.xlu0 %2536, %v2472
    %v2538 = vpop.permute.xlu0 %2537
    %v2539 = vlaneseq
    %v2540 = vshrl.u32 %v2539, 7
    %v2541 = vadd.s32 %v2540, 88
    %2542 = vset.pattern.permute.xlu0 %v2541
    %2543 = vperm.xlu0 %2542, %v2472
    %v2544 = vpop.permute.xlu0 %2543
    %v2545 = vlaneseq
    %v2546 = vshrl.u32 %v2545, 7
    %v2547 = vadd.s32 %v2546, 96
    %2548 = vset.pattern.permute.xlu0 %v2547
    %2549 = vperm.xlu0 %2548, %v2472
    %v2550 = vpop.permute.xlu0 %2549
    %v2551 = vlaneseq
    %v2552 = vshrl.u32 %v2551, 7
    %v2553 = vadd.s32 %v2552, 104
    %2554 = vset.pattern.permute.xlu0 %v2553
    %2555 = vperm.xlu0 %2554, %v2472
    %v2556 = vpop.permute.xlu0 %2555
    %v2557 = vlaneseq
    %v2558 = vshrl.u32 %v2557, 7
    %v2559 = vadd.s32 %v2558, 112
    %2560 = vset.pattern.permute.xlu0 %v2559
    %2561 = vperm.xlu0 %2560, %v2472
    %v2562 = vpop.permute.xlu0 %2561
    %v2563 = vlaneseq
    %v2564 = vshrl.u32 %v2563, 7
    %v2565 = vadd.s32 %v2564, 120
    %2566 = vset.pattern.permute.xlu0 %v2565
    %2567 = vperm.xlu0 %2566, %v2472
    %v2568 = vpop.permute.xlu0 %2567
    %v2569 = vperm.slane %v2175, 0
    %v2570 = vlaneseq
    %v2571 = vshrl.u32 %v2570, 7
    %2573 = vset.pattern.permute.xlu0 %v2571
    %2574 = vperm.xlu0 %2573, %v2569
    %v2575 = vpop.permute.xlu0 %2574
    %v2576 = vlaneseq
    %v2577 = vshrl.u32 %v2576, 7
    %v2578 = vadd.s32 %v2577, 8
    %2579 = vset.pattern.permute.xlu0 %v2578
    %2580 = vperm.xlu0 %2579, %v2569
    %v2581 = vpop.permute.xlu0 %2580
    %v2582 = vperm.slane %v2161, 1
    %v2583 = vlaneseq
    %v2584 = vshrl.u32 %v2583, 7
    %2586 = vset.pattern.permute.xlu0 %v2584
    %2587 = vperm.xlu0 %2586, %v2582
    %v2588 = vpop.permute.xlu0 %2587
    %v2589 = vlaneseq
    %v2590 = vshrl.u32 %v2589, 7
    %v2591 = vadd.s32 %v2590, 8
    %2592 = vset.pattern.permute.xlu0 %v2591
    %2593 = vperm.xlu0 %2592, %v2582
    %v2594 = vpop.permute.xlu0 %2593
    %v2595 = vlaneseq
    %v2596 = vshrl.u32 %v2595, 7
    %v2597 = vadd.s32 %v2596, 16
    %2598 = vset.pattern.permute.xlu0 %v2597
    %2599 = vperm.xlu0 %2598, %v2582
    %v2600 = vpop.permute.xlu0 %2599
    %v2601 = vlaneseq
    %v2602 = vshrl.u32 %v2601, 7
    %v2603 = vadd.s32 %v2602, 24
    %2604 = vset.pattern.permute.xlu0 %v2603
    %2605 = vperm.xlu0 %2604, %v2582
    %v2606 = vpop.permute.xlu0 %2605
    %v2607 = vlaneseq
    %v2608 = vshrl.u32 %v2607, 7
    %v2609 = vadd.s32 %v2608, 32
    %2610 = vset.pattern.permute.xlu0 %v2609
    %2611 = vperm.xlu0 %2610, %v2582
    %v2612 = vpop.permute.xlu0 %2611
    %v2613 = vlaneseq
    %v2614 = vshrl.u32 %v2613, 7
    %v2615 = vadd.s32 %v2614, 40
    %2616 = vset.pattern.permute.xlu0 %v2615
    %2617 = vperm.xlu0 %2616, %v2582
    %v2618 = vpop.permute.xlu0 %2617
    %v2619 = vlaneseq
    %v2620 = vshrl.u32 %v2619, 7
    %v2621 = vadd.s32 %v2620, 48
    %2622 = vset.pattern.permute.xlu0 %v2621
    %2623 = vperm.xlu0 %2622, %v2582
    %v2624 = vpop.permute.xlu0 %2623
    %v2625 = vlaneseq
    %v2626 = vshrl.u32 %v2625, 7
    %v2627 = vadd.s32 %v2626, 56
    %2628 = vset.pattern.permute.xlu0 %v2627
    %2629 = vperm.xlu0 %2628, %v2582
    %v2630 = vpop.permute.xlu0 %2629
    %v2631 = vlaneseq
    %v2632 = vshrl.u32 %v2631, 7
    %v2633 = vadd.s32 %v2632, 64
    %2634 = vset.pattern.permute.xlu0 %v2633
    %2635 = vperm.xlu0 %2634, %v2582
    %v2636 = vpop.permute.xlu0 %2635
    %v2637 = vlaneseq
    %v2638 = vshrl.u32 %v2637, 7
    %v2639 = vadd.s32 %v2638, 72
    %2640 = vset.pattern.permute.xlu0 %v2639
    %2641 = vperm.xlu0 %2640, %v2582
    %v2642 = vpop.permute.xlu0 %2641
    %v2643 = vlaneseq
    %v2644 = vshrl.u32 %v2643, 7
    %v2645 = vadd.s32 %v2644, 80
    %2646 = vset.pattern.permute.xlu0 %v2645
    %2647 = vperm.xlu0 %2646, %v2582
    %v2648 = vpop.permute.xlu0 %2647
    %v2649 = vlaneseq
    %v2650 = vshrl.u32 %v2649, 7
    %v2651 = vadd.s32 %v2650, 88
    %2652 = vset.pattern.permute.xlu0 %v2651
    %2653 = vperm.xlu0 %2652, %v2582
    %v2654 = vpop.permute.xlu0 %2653
    %v2655 = vlaneseq
    %v2656 = vshrl.u32 %v2655, 7
    %v2657 = vadd.s32 %v2656, 96
    %2658 = vset.pattern.permute.xlu0 %v2657
    %2659 = vperm.xlu0 %2658, %v2582
    %v2660 = vpop.permute.xlu0 %2659
    %v2661 = vlaneseq
    %v2662 = vshrl.u32 %v2661, 7
    %v2663 = vadd.s32 %v2662, 104
    %2664 = vset.pattern.permute.xlu0 %v2663
    %2665 = vperm.xlu0 %2664, %v2582
    %v2666 = vpop.permute.xlu0 %2665
    %v2667 = vlaneseq
    %v2668 = vshrl.u32 %v2667, 7
    %v2669 = vadd.s32 %v2668, 112
    %2670 = vset.pattern.permute.xlu0 %v2669
    %2671 = vperm.xlu0 %2670, %v2582
    %v2672 = vpop.permute.xlu0 %2671
    %v2673 = vlaneseq
    %v2674 = vshrl.u32 %v2673, 7
    %v2675 = vadd.s32 %v2674, 120
    %2676 = vset.pattern.permute.xlu0 %v2675
    %2677 = vperm.xlu0 %2676, %v2582
    %v2678 = vpop.permute.xlu0 %2677
    %v2679 = vperm.slane %v2175, 1
    %v2680 = vlaneseq
    %v2681 = vshrl.u32 %v2680, 7
    %2683 = vset.pattern.permute.xlu0 %v2681
    %2684 = vperm.xlu0 %2683, %v2679
    %v2685 = vpop.permute.xlu0 %2684
    %v2686 = vlaneseq
    %v2687 = vshrl.u32 %v2686, 7
    %v2688 = vadd.s32 %v2687, 8
    %2689 = vset.pattern.permute.xlu0 %v2688
    %2690 = vperm.xlu0 %2689, %v2679
    %v2691 = vpop.permute.xlu0 %2690
    %v2728 = vmul.f32 %v2434, %v2478
    %v2729 = vmul.f32 %v2435, %v2484
    %v2730 = vmul.f32 %v2436, %v2490
    %v2731 = vmul.f32 %v2437, %v2496
    %v2732 = vmul.f32 %v2438, %v2502
    %v2733 = vmul.f32 %v2439, %v2508
    %v2734 = vmul.f32 %v2440, %v2514
    %v2735 = vmul.f32 %v2441, %v2520
    %v2736 = vmul.f32 %v2442, %v2526
    %v2737 = vmul.f32 %v2443, %v2532
    %v2738 = vmul.f32 %v2444, %v2538
    %v2739 = vmul.f32 %v2445, %v2544
    %v2740 = vmul.f32 %v2446, %v2550
    %v2741 = vmul.f32 %v2447, %v2556
    %v2742 = vmul.f32 %v2448, %v2562
    %v2743 = vmul.f32 %v2449, %v2568
    %v2744 = vmul.f32 %v2450, %v2575
    %v2745 = vmul.f32 %v2451, %v2581
    %v2746 = vmul.f32 %v2452, %v2588
    %v2747 = vmul.f32 %v2453, %v2594
    %v2748 = vmul.f32 %v2454, %v2600
    %v2749 = vmul.f32 %v2455, %v2606
    %v2750 = vmul.f32 %v2456, %v2612
    %v2751 = vmul.f32 %v2457, %v2618
    %v2752 = vmul.f32 %v2458, %v2624
    %v2753 = vmul.f32 %v2459, %v2630
    %v2754 = vmul.f32 %v2460, %v2636
    %v2755 = vmul.f32 %v2461, %v2642
    %v2756 = vmul.f32 %v2462, %v2648
    %v2757 = vmul.f32 %v2463, %v2654
    %v2758 = vmul.f32 %v2464, %v2660
    %v2759 = vmul.f32 %v2465, %v2666
    %v2760 = vmul.f32 %v2466, %v2672
    %v2761 = vmul.f32 %v2467, %v2678
    %v2762 = vmul.f32 %v2468, %v2685
    %v2763 = vmul.f32 %v2469, %v2691
    %v2765 = vperm.slane %v524, 0
    %v2766 = vperm.slane %v524, 1
    %2805 = vset.pattern.permute.xlu0 0
    %2806 = vperm.xlu0 %2805, %v2728
    %v2807 = vpop.permute.xlu0 %2806
    %2808 = vset.pattern.permute.xlu0 0
    %2809 = vperm.xlu0 %2808, %v2729
    %v2810 = vpop.permute.xlu0 %2809
    %2811 = vset.pattern.permute.xlu0 0
    %2812 = vperm.xlu0 %2811, %v2730
    %v2813 = vpop.permute.xlu0 %2812
    %2814 = vset.pattern.permute.xlu0 0
    %2815 = vperm.xlu0 %2814, %v2731
    %v2816 = vpop.permute.xlu0 %2815
    %2817 = vset.pattern.permute.xlu0 0
    %2818 = vperm.xlu0 %2817, %v2732
    %v2819 = vpop.permute.xlu0 %2818
    %2820 = vset.pattern.permute.xlu0 0
    %2821 = vperm.xlu0 %2820, %v2733
    %v2822 = vpop.permute.xlu0 %2821
    %2823 = vset.pattern.permute.xlu0 0
    %2824 = vperm.xlu0 %2823, %v2734
    %v2825 = vpop.permute.xlu0 %2824
    %2826 = vset.pattern.permute.xlu0 0
    %2827 = vperm.xlu0 %2826, %v2735
    %v2828 = vpop.permute.xlu0 %2827
    %2829 = vset.pattern.permute.xlu0 0
    %2830 = vperm.xlu0 %2829, %v2736
    %v2831 = vpop.permute.xlu0 %2830
    %2832 = vset.pattern.permute.xlu0 0
    %2833 = vperm.xlu0 %2832, %v2737
    %v2834 = vpop.permute.xlu0 %2833
    %2835 = vset.pattern.permute.xlu0 0
    %2836 = vperm.xlu0 %2835, %v2738
    %v2837 = vpop.permute.xlu0 %2836
    %2838 = vset.pattern.permute.xlu0 0
    %2839 = vperm.xlu0 %2838, %v2739
    %v2840 = vpop.permute.xlu0 %2839
    %2841 = vset.pattern.permute.xlu0 0
    %2842 = vperm.xlu0 %2841, %v2740
    %v2843 = vpop.permute.xlu0 %2842
    %2844 = vset.pattern.permute.xlu0 0
    %2845 = vperm.xlu0 %2844, %v2741
    %v2846 = vpop.permute.xlu0 %2845
    %2847 = vset.pattern.permute.xlu0 0
    %2848 = vperm.xlu0 %2847, %v2742
    %v2849 = vpop.permute.xlu0 %2848
    %2850 = vset.pattern.permute.xlu0 0
    %2851 = vperm.xlu0 %2850, %v2743
    %v2852 = vpop.permute.xlu0 %2851
    %2853 = vset.pattern.permute.xlu0 0
    %2854 = vperm.xlu0 %2853, %v2744
    %v2855 = vpop.permute.xlu0 %2854
    %2856 = vset.pattern.permute.xlu0 0
    %2857 = vperm.xlu0 %2856, %v2745
    %v2858 = vpop.permute.xlu0 %2857
    %2859 = vset.pattern.permute.xlu0 0
    %2860 = vperm.xlu0 %2859, %v2746
    %v2861 = vpop.permute.xlu0 %2860
    %2862 = vset.pattern.permute.xlu0 0
    %2863 = vperm.xlu0 %2862, %v2747
    %v2864 = vpop.permute.xlu0 %2863
    %2865 = vset.pattern.permute.xlu0 0
    %2866 = vperm.xlu0 %2865, %v2748
    %v2867 = vpop.permute.xlu0 %2866
    %2868 = vset.pattern.permute.xlu0 0
    %2869 = vperm.xlu0 %2868, %v2749
    %v2870 = vpop.permute.xlu0 %2869
    %2871 = vset.pattern.permute.xlu0 0
    %2872 = vperm.xlu0 %2871, %v2750
    %v2873 = vpop.permute.xlu0 %2872
    %2874 = vset.pattern.permute.xlu0 0
    %2875 = vperm.xlu0 %2874, %v2751
    %v2876 = vpop.permute.xlu0 %2875
    %2877 = vset.pattern.permute.xlu0 0
    %2878 = vperm.xlu0 %2877, %v2752
    %v2879 = vpop.permute.xlu0 %2878
    %2880 = vset.pattern.permute.xlu0 0
    %2881 = vperm.xlu0 %2880, %v2753
    %v2882 = vpop.permute.xlu0 %2881
    %2883 = vset.pattern.permute.xlu0 0
    %2884 = vperm.xlu0 %2883, %v2754
    %v2885 = vpop.permute.xlu0 %2884
    %2886 = vset.pattern.permute.xlu0 0
    %2887 = vperm.xlu0 %2886, %v2755
    %v2888 = vpop.permute.xlu0 %2887
    %2889 = vset.pattern.permute.xlu0 0
    %2890 = vperm.xlu0 %2889, %v2756
    %v2891 = vpop.permute.xlu0 %2890
    %2892 = vset.pattern.permute.xlu0 0
    %2893 = vperm.xlu0 %2892, %v2757
    %v2894 = vpop.permute.xlu0 %2893
    %2895 = vset.pattern.permute.xlu0 0
    %2896 = vperm.xlu0 %2895, %v2758
    %v2897 = vpop.permute.xlu0 %2896
    %2898 = vset.pattern.permute.xlu0 0
    %2899 = vperm.xlu0 %2898, %v2759
    %v2900 = vpop.permute.xlu0 %2899
    %2901 = vset.pattern.permute.xlu0 0
    %2902 = vperm.xlu0 %2901, %v2760
    %v2903 = vpop.permute.xlu0 %2902
    %2904 = vset.pattern.permute.xlu0 0
    %2905 = vperm.xlu0 %2904, %v2761
    %v2906 = vpop.permute.xlu0 %2905
    %2907 = vset.pattern.permute.xlu0 0
    %2908 = vperm.xlu0 %2907, %v2762
    %v2909 = vpop.permute.xlu0 %2908
    %2910 = vset.pattern.permute.xlu0 0
    %2911 = vperm.xlu0 %2910, %v2763
    %v2912 = vpop.permute.xlu0 %2911
    %v2913 = vperm.slane %v2807, %v562
    %v2914 = vperm.slane %v2810, %v564
    %v2915 = vsel %vm566, %v2914, %v2913
    %v2916 = vperm.slane %v2813, %v568
    %v2917 = vsel %vm570, %v2916, %v2915
    %v2918 = vperm.slane %v2816, %v572
    %v2919 = vsel %vm574, %v2918, %v2917
    %v2920 = vperm.slane %v2819, %v576
    %v2921 = vsel %vm578, %v2920, %v2919
    %v2922 = vperm.slane %v2822, %v580
    %v2923 = vsel %vm582, %v2922, %v2921
    %v2924 = vperm.slane %v2825, %v584
    %v2925 = vsel %vm586, %v2924, %v2923
    %v2926 = vperm.slane %v2828, %v588
    %v2927 = vsel %vm590, %v2926, %v2925
    %v2928 = vperm.slane %v2831, %v592
    %v2929 = vsel %vm594, %v2928, %v2927
    %v2930 = vperm.slane %v2834, %v596
    %v2931 = vsel %vm598, %v2930, %v2929
    %v2932 = vperm.slane %v2837, %v600
    %v2933 = vsel %vm602, %v2932, %v2931
    %v2934 = vperm.slane %v2840, %v604
    %v2935 = vsel %vm606, %v2934, %v2933
    %v2936 = vperm.slane %v2843, %v608
    %v2937 = vsel %vm610, %v2936, %v2935
    %v2938 = vperm.slane %v2846, %v612
    %v2939 = vsel %vm614, %v2938, %v2937
    %v2940 = vperm.slane %v2849, %v616
    %v2941 = vsel %vm618, %v2940, %v2939
    %v2942 = vperm.slane %v2852, %v620
    %v2943 = vsel %vm622, %v2942, %v2941
    %v2944 = vperm.slane %v2855, %v562
    %v2945 = vperm.slane %v2858, %v564
    %v2946 = vsel %vm566, %v2945, %v2944
    %v2947 = vperm.slane %v2861, %v562
    %v2948 = vperm.slane %v2864, %v564
    %v2949 = vsel %vm566, %v2948, %v2947
    %v2950 = vperm.slane %v2867, %v568
    %v2951 = vsel %vm570, %v2950, %v2949
    %v2952 = vperm.slane %v2870, %v572
    %v2953 = vsel %vm574, %v2952, %v2951
    %v2954 = vperm.slane %v2873, %v576
    %v2955 = vsel %vm578, %v2954, %v2953
    %v2956 = vperm.slane %v2876, %v580
    %v2957 = vsel %vm582, %v2956, %v2955
    %v2958 = vperm.slane %v2879, %v584
    %v2959 = vsel %vm586, %v2958, %v2957
    %v2960 = vperm.slane %v2882, %v588
    %v2961 = vsel %vm590, %v2960, %v2959
    %v2962 = vperm.slane %v2885, %v592
    %v2963 = vsel %vm594, %v2962, %v2961
    %v2964 = vperm.slane %v2888, %v596
    %v2965 = vsel %vm598, %v2964, %v2963
    %v2966 = vperm.slane %v2891, %v600
    %v2967 = vsel %vm602, %v2966, %v2965
    %v2968 = vperm.slane %v2894, %v604
    %v2969 = vsel %vm606, %v2968, %v2967
    %v2970 = vperm.slane %v2897, %v608
    %v2971 = vsel %vm610, %v2970, %v2969
    %v2972 = vperm.slane %v2900, %v612
    %v2973 = vsel %vm614, %v2972, %v2971
    %v2974 = vperm.slane %v2903, %v616
    %v2975 = vsel %vm618, %v2974, %v2973
    %v2976 = vperm.slane %v2906, %v620
    %v2977 = vsel %vm622, %v2976, %v2975
    %v2978 = vperm.slane %v2909, %v562
    %v2979 = vperm.slane %v2912, %v564
    %v2980 = vsel %vm566, %v2979, %v2978
    %v2981 = vsel %vm661, %v2977, %v2943
    %v2982 = vsel %vm661, %v2980, %v2946
    %v2984 = vsel %vm665, %v2982, 0
    %2986 = vmatpush.msra.mxu0 %v518
    %2987 = vmatpush.msra.mxu0 %v516
    %2988 = vmatpush.msra.mxu0 %v514
    %2989 = vmatpush.msra.mxu0 %v512
    %2990 = vmatpush.msra.mxu0 %v510
    %2991 = vmatpush.msra.mxu0 %v508
    %2992 = vmatpush.msra.mxu0 %v506
    %2993 = vmatpush.msra.mxu0 %v504
    %2994 = vmatpush.msra.mxu0 %v502
    %2995 = vmatpush.msra.mxu0 %v500
    %2996 = vmatpush.msra.mxu0 %v498
    %2997 = vmatpush.msra.mxu0 %v496
    %2998 = vmatpush.msra.mxu0 %v494
    %2999 = vmatpush.msra.mxu0 %v492
    %3000 = vmatpush.msra.mxu0 %v490
    %3001 = vmatpush.msra.mxu0 %v488
    %3002 = vmatmul.f32.gmra.mxu0 %v2981
    %v3003 = vpop.f32.mrf.mxu0
    %v3004 = vadd.f32 %v2765, %v3003
    %3005 = vdwg.mxu0
    %3006 = vmatpush.msra.mxu0 0.0
    %3007 = vmatpush.msra.mxu0 0.0
    %3008 = vmatpush.msra.mxu0 0.0
    %3009 = vmatpush.msra.mxu0 0.0
    %3010 = vmatpush.msra.mxu0 0.0
    %3011 = vmatpush.msra.mxu0 0.0
    %3012 = vmatpush.msra.mxu0 0.0
    %3013 = vmatpush.msra.mxu0 0.0
    %3014 = vmatpush.msra.mxu0 0.0
    %3015 = vmatpush.msra.mxu0 0.0
    %3016 = vmatpush.msra.mxu0 0.0
    %3017 = vmatpush.msra.mxu0 0.0
    %3018 = vmatpush.msra.mxu0 0.0
    %3019 = vmatpush.msra.mxu0 0.0
    %3020 = vmatpush.msra.mxu0 %v522
    %3021 = vmatpush.msra.mxu0 %v520
    %3022 = vmatmul.f32.gmra.mxu0 %v2984
    %v3023 = vpop.f32.mrf.mxu0
    %v3024 = vadd.f32 %v3004, %v3023
    %3025 = vdwg.mxu0
    %3026 = vmatpush.msra.mxu0 %v519
    %3027 = vmatpush.msra.mxu0 %v517
    %3028 = vmatpush.msra.mxu0 %v515
    %3029 = vmatpush.msra.mxu0 %v513
    %3030 = vmatpush.msra.mxu0 %v511
    %3031 = vmatpush.msra.mxu0 %v509
    %3032 = vmatpush.msra.mxu0 %v507
    %3033 = vmatpush.msra.mxu0 %v505
    %3034 = vmatpush.msra.mxu0 %v503
    %3035 = vmatpush.msra.mxu0 %v501
    %3036 = vmatpush.msra.mxu0 %v499
    %3037 = vmatpush.msra.mxu0 %v497
    %3038 = vmatpush.msra.mxu0 %v495
    %3039 = vmatpush.msra.mxu0 %v493
    %3040 = vmatpush.msra.mxu0 %v491
    %3041 = vmatpush.msra.mxu0 %v489
    %3042 = vmatmul.f32.gmra.mxu0 %v2981
    %v3043 = vpop.f32.mrf.mxu0
    %v3044 = vadd.f32 %v2766, %v3043
    %3045 = vdwg.mxu0
    %3046 = vmatpush.msra.mxu0 0.0
    %3047 = vmatpush.msra.mxu0 0.0
    %3048 = vmatpush.msra.mxu0 0.0
    %3049 = vmatpush.msra.mxu0 0.0
    %3050 = vmatpush.msra.mxu0 0.0
    %3051 = vmatpush.msra.mxu0 0.0
    %3052 = vmatpush.msra.mxu0 0.0
    %3053 = vmatpush.msra.mxu0 0.0
    %3054 = vmatpush.msra.mxu0 0.0
    %3055 = vmatpush.msra.mxu0 0.0
    %3056 = vmatpush.msra.mxu0 0.0
    %3057 = vmatpush.msra.mxu0 0.0
    %3058 = vmatpush.msra.mxu0 0.0
    %3059 = vmatpush.msra.mxu0 0.0
    %3060 = vmatpush.msra.mxu0 %v523
    %3061 = vmatpush.msra.mxu0 %v521
    %3062 = vmatmul.f32.gmra.mxu0 %v2984
    %v3063 = vpop.f32.mrf.mxu0
    %v3064 = vadd.f32 %v3044, %v3063
    %3065 = vdwg.mxu0
    %v3066 = vxor.u32 %v3024, 2147483648
    %v3067 = vxor.u32 %v3064, 2147483648
    %v3068 = vmul.f32 %v3066, 1.442695
    %v3069 = vpow.pop %v3068
    %v3070 = vmul.f32 %v3067, 1.442695
    %v3071 = vpow.pop %v3070
    %v3072 = vadd.f32 %v3069, 1.0
    %v3073 = vadd.f32 %v3071, 1.0
    %v3074 = vrcp.pop %v3072
    %v3075 = vmul.f32 %v3072, %v3074
    %v3076 = vsub.f32 1.0, %v3075
    %v3077 = vmul.f32 %v3074, %v3076
    %v3078 = vadd.f32 %v3074, %v3077
    %vm3079 = vweird.f32 %v3072
    %vm3080 = vweird.f32 %v3074
    %vm3081 = vmor %vm3079, %vm3080
    %v3082 = vsel %vm3081, %v3074, %v3078
    %v3083 = vand.u32 2147483647, %v3072
    %vm3084 = vcmp.eq.f32.partialorder %v3083, 8.507059e+37
    %v3085 = vand.u32 %v3072, 2147483648
    %v3086 = vor.u32 1.1754944e-38, %v3085
    %v3087 = vsel %vm3084, %v3086, %v3082
    %v3088 = vmul.f32 1.0, %v3087
    %v3089 = vrcp.pop %v3073
    %v3090 = vmul.f32 %v3073, %v3089
    %v3091 = vsub.f32 1.0, %v3090
    %v3092 = vmul.f32 %v3089, %v3091
    %v3093 = vadd.f32 %v3089, %v3092
    %vm3094 = vweird.f32 %v3073
    %vm3095 = vweird.f32 %v3089
    %vm3096 = vmor %vm3094, %vm3095
    %v3097 = vsel %vm3096, %v3089, %v3093
    %v3098 = vand.u32 2147483647, %v3073
    %vm3099 = vcmp.eq.f32.partialorder %v3098, 8.507059e+37
    %v3100 = vand.u32 %v3073, 2147483648
    %v3101 = vor.u32 1.1754944e-38, %v3100
    %v3102 = vsel %vm3099, %v3101, %v3097
    %v3103 = vmul.f32 1.0, %v3102
    %v3104 = vmul.f32 %v2161, %v3088
    %v3105 = vmul.f32 %v2175, %v3103
    %v3106 = vmul.f32 %v706, %v3104
    %v3107 = vmul.f32 %v746, %v3105
    %v3108 = vperm.slane %v3104, 0
    %v3109 = vlaneseq
    %v3110 = vshrl.u32 %v3109, 7
    %3112 = vset.pattern.permute.xlu0 %v3110
    %3113 = vperm.xlu0 %3112, %v3108
    %v3114 = vpop.permute.xlu0 %3113
    %v3115 = vlaneseq
    %v3116 = vshrl.u32 %v3115, 7
    %v3117 = vadd.s32 %v3116, 8
    %3118 = vset.pattern.permute.xlu0 %v3117
    %3119 = vperm.xlu0 %3118, %v3108
    %v3120 = vpop.permute.xlu0 %3119
    %v3121 = vlaneseq
    %v3122 = vshrl.u32 %v3121, 7
    %v3123 = vadd.s32 %v3122, 16
    %3124 = vset.pattern.permute.xlu0 %v3123
    %3125 = vperm.xlu0 %3124, %v3108
    %v3126 = vpop.permute.xlu0 %3125
    %v3127 = vlaneseq
    %v3128 = vshrl.u32 %v3127, 7
    %v3129 = vadd.s32 %v3128, 24
    %3130 = vset.pattern.permute.xlu0 %v3129
    %3131 = vperm.xlu0 %3130, %v3108
    %v3132 = vpop.permute.xlu0 %3131
    %v3133 = vlaneseq
    %v3134 = vshrl.u32 %v3133, 7
    %v3135 = vadd.s32 %v3134, 32
    %3136 = vset.pattern.permute.xlu0 %v3135
    %3137 = vperm.xlu0 %3136, %v3108
    %v3138 = vpop.permute.xlu0 %3137
    %v3139 = vlaneseq
    %v3140 = vshrl.u32 %v3139, 7
    %v3141 = vadd.s32 %v3140, 40
    %3142 = vset.pattern.permute.xlu0 %v3141
    %3143 = vperm.xlu0 %3142, %v3108
    %v3144 = vpop.permute.xlu0 %3143
    %v3145 = vlaneseq
    %v3146 = vshrl.u32 %v3145, 7
    %v3147 = vadd.s32 %v3146, 48
    %3148 = vset.pattern.permute.xlu0 %v3147
    %3149 = vperm.xlu0 %3148, %v3108
    %v3150 = vpop.permute.xlu0 %3149
    %v3151 = vlaneseq
    %v3152 = vshrl.u32 %v3151, 7
    %v3153 = vadd.s32 %v3152, 56
    %3154 = vset.pattern.permute.xlu0 %v3153
    %3155 = vperm.xlu0 %3154, %v3108
    %v3156 = vpop.permute.xlu0 %3155
    %v3157 = vlaneseq
    %v3158 = vshrl.u32 %v3157, 7
    %v3159 = vadd.s32 %v3158, 64
    %3160 = vset.pattern.permute.xlu0 %v3159
    %3161 = vperm.xlu0 %3160, %v3108
    %v3162 = vpop.permute.xlu0 %3161
    %v3163 = vlaneseq
    %v3164 = vshrl.u32 %v3163, 7
    %v3165 = vadd.s32 %v3164, 72
    %3166 = vset.pattern.permute.xlu0 %v3165
    %3167 = vperm.xlu0 %3166, %v3108
    %v3168 = vpop.permute.xlu0 %3167
    %v3169 = vlaneseq
    %v3170 = vshrl.u32 %v3169, 7
    %v3171 = vadd.s32 %v3170, 80
    %3172 = vset.pattern.permute.xlu0 %v3171
    %3173 = vperm.xlu0 %3172, %v3108
    %v3174 = vpop.permute.xlu0 %3173
    %v3175 = vlaneseq
    %v3176 = vshrl.u32 %v3175, 7
    %v3177 = vadd.s32 %v3176, 88
    %3178 = vset.pattern.permute.xlu0 %v3177
    %3179 = vperm.xlu0 %3178, %v3108
    %v3180 = vpop.permute.xlu0 %3179
    %v3181 = vlaneseq
    %v3182 = vshrl.u32 %v3181, 7
    %v3183 = vadd.s32 %v3182, 96
    %3184 = vset.pattern.permute.xlu0 %v3183
    %3185 = vperm.xlu0 %3184, %v3108
    %v3186 = vpop.permute.xlu0 %3185
    %v3187 = vlaneseq
    %v3188 = vshrl.u32 %v3187, 7
    %v3189 = vadd.s32 %v3188, 104
    %3190 = vset.pattern.permute.xlu0 %v3189
    %3191 = vperm.xlu0 %3190, %v3108
    %v3192 = vpop.permute.xlu0 %3191
    %v3193 = vlaneseq
    %v3194 = vshrl.u32 %v3193, 7
    %v3195 = vadd.s32 %v3194, 112
    %3196 = vset.pattern.permute.xlu0 %v3195
    %3197 = vperm.xlu0 %3196, %v3108
    %v3198 = vpop.permute.xlu0 %3197
    %v3199 = vlaneseq
    %v3200 = vshrl.u32 %v3199, 7
    %v3201 = vadd.s32 %v3200, 120
    %3202 = vset.pattern.permute.xlu0 %v3201
    %3203 = vperm.xlu0 %3202, %v3108
    %v3204 = vpop.permute.xlu0 %3203
    %v3205 = vperm.slane %v3105, 0
    %v3206 = vlaneseq
    %v3207 = vshrl.u32 %v3206, 7
    %3209 = vset.pattern.permute.xlu0 %v3207
    %3210 = vperm.xlu0 %3209, %v3205
    %v3211 = vpop.permute.xlu0 %3210
    %v3212 = vlaneseq
    %v3213 = vshrl.u32 %v3212, 7
    %v3214 = vadd.s32 %v3213, 8
    %3215 = vset.pattern.permute.xlu0 %v3214
    %3216 = vperm.xlu0 %3215, %v3205
    %v3217 = vpop.permute.xlu0 %3216
    %v3218 = vperm.slane %v3104, 1
    %v3219 = vlaneseq
    %v3220 = vshrl.u32 %v3219, 7
    %3222 = vset.pattern.permute.xlu0 %v3220
    %3223 = vperm.xlu0 %3222, %v3218
    %v3224 = vpop.permute.xlu0 %3223
    %v3225 = vlaneseq
    %v3226 = vshrl.u32 %v3225, 7
    %v3227 = vadd.s32 %v3226, 8
    %3228 = vset.pattern.permute.xlu0 %v3227
    %3229 = vperm.xlu0 %3228, %v3218
    %v3230 = vpop.permute.xlu0 %3229
    %v3231 = vlaneseq
    %v3232 = vshrl.u32 %v3231, 7
    %v3233 = vadd.s32 %v3232, 16
    %3234 = vset.pattern.permute.xlu0 %v3233
    %3235 = vperm.xlu0 %3234, %v3218
    %v3236 = vpop.permute.xlu0 %3235
    %v3237 = vlaneseq
    %v3238 = vshrl.u32 %v3237, 7
    %v3239 = vadd.s32 %v3238, 24
    %3240 = vset.pattern.permute.xlu0 %v3239
    %3241 = vperm.xlu0 %3240, %v3218
    %v3242 = vpop.permute.xlu0 %3241
    %v3243 = vlaneseq
    %v3244 = vshrl.u32 %v3243, 7
    %v3245 = vadd.s32 %v3244, 32
    %3246 = vset.pattern.permute.xlu0 %v3245
    %3247 = vperm.xlu0 %3246, %v3218
    %v3248 = vpop.permute.xlu0 %3247
    %v3249 = vlaneseq
    %v3250 = vshrl.u32 %v3249, 7
    %v3251 = vadd.s32 %v3250, 40
    %3252 = vset.pattern.permute.xlu0 %v3251
    %3253 = vperm.xlu0 %3252, %v3218
    %v3254 = vpop.permute.xlu0 %3253
    %v3255 = vlaneseq
    %v3256 = vshrl.u32 %v3255, 7
    %v3257 = vadd.s32 %v3256, 48
    %3258 = vset.pattern.permute.xlu0 %v3257
    %3259 = vperm.xlu0 %3258, %v3218
    %v3260 = vpop.permute.xlu0 %3259
    %v3261 = vlaneseq
    %v3262 = vshrl.u32 %v3261, 7
    %v3263 = vadd.s32 %v3262, 56
    %3264 = vset.pattern.permute.xlu0 %v3263
    %3265 = vperm.xlu0 %3264, %v3218
    %v3266 = vpop.permute.xlu0 %3265
    %v3267 = vlaneseq
    %v3268 = vshrl.u32 %v3267, 7
    %v3269 = vadd.s32 %v3268, 64
    %3270 = vset.pattern.permute.xlu0 %v3269
    %3271 = vperm.xlu0 %3270, %v3218
    %v3272 = vpop.permute.xlu0 %3271
    %v3273 = vlaneseq
    %v3274 = vshrl.u32 %v3273, 7
    %v3275 = vadd.s32 %v3274, 72
    %3276 = vset.pattern.permute.xlu0 %v3275
    %3277 = vperm.xlu0 %3276, %v3218
    %v3278 = vpop.permute.xlu0 %3277
    %v3279 = vlaneseq
    %v3280 = vshrl.u32 %v3279, 7
    %v3281 = vadd.s32 %v3280, 80
    %3282 = vset.pattern.permute.xlu0 %v3281
    %3283 = vperm.xlu0 %3282, %v3218
    %v3284 = vpop.permute.xlu0 %3283
    %v3285 = vlaneseq
    %v3286 = vshrl.u32 %v3285, 7
    %v3287 = vadd.s32 %v3286, 88
    %3288 = vset.pattern.permute.xlu0 %v3287
    %3289 = vperm.xlu0 %3288, %v3218
    %v3290 = vpop.permute.xlu0 %3289
    %v3291 = vlaneseq
    %v3292 = vshrl.u32 %v3291, 7
    %v3293 = vadd.s32 %v3292, 96
    %3294 = vset.pattern.permute.xlu0 %v3293
    %3295 = vperm.xlu0 %3294, %v3218
    %v3296 = vpop.permute.xlu0 %3295
    %v3297 = vlaneseq
    %v3298 = vshrl.u32 %v3297, 7
    %v3299 = vadd.s32 %v3298, 104
    %3300 = vset.pattern.permute.xlu0 %v3299
    %3301 = vperm.xlu0 %3300, %v3218
    %v3302 = vpop.permute.xlu0 %3301
    %v3303 = vlaneseq
    %v3304 = vshrl.u32 %v3303, 7
    %v3305 = vadd.s32 %v3304, 112
    %3306 = vset.pattern.permute.xlu0 %v3305
    %3307 = vperm.xlu0 %3306, %v3218
    %v3308 = vpop.permute.xlu0 %3307
    %v3309 = vlaneseq
    %v3310 = vshrl.u32 %v3309, 7
    %v3311 = vadd.s32 %v3310, 120
    %3312 = vset.pattern.permute.xlu0 %v3311
    %3313 = vperm.xlu0 %3312, %v3218
    %v3314 = vpop.permute.xlu0 %3313
    %v3315 = vperm.slane %v3105, 1
    %v3316 = vlaneseq
    %v3317 = vshrl.u32 %v3316, 7
    %3319 = vset.pattern.permute.xlu0 %v3317
    %3320 = vperm.xlu0 %3319, %v3315
    %v3321 = vpop.permute.xlu0 %3320
    %v3322 = vlaneseq
    %v3323 = vshrl.u32 %v3322, 7
    %v3324 = vadd.s32 %v3323, 8
    %3325 = vset.pattern.permute.xlu0 %v3324
    %3326 = vperm.xlu0 %3325, %v3315
    %v3327 = vpop.permute.xlu0 %3326
    %v3328 = vmul.f32 %v55, %v3114
    %v3329 = vmul.f32 %v56, %v3120
    %v3330 = vmul.f32 %v57, %v3126
    %v3331 = vmul.f32 %v58, %v3132
    %v3332 = vmul.f32 %v59, %v3138
    %v3333 = vmul.f32 %v60, %v3144
    %v3334 = vmul.f32 %v61, %v3150
    %v3335 = vmul.f32 %v62, %v3156
    %v3336 = vmul.f32 %v63, %v3162
    %v3337 = vmul.f32 %v64, %v3168
    %v3338 = vmul.f32 %v65, %v3174
    %v3339 = vmul.f32 %v66, %v3180
    %v3340 = vmul.f32 %v67, %v3186
    %v3341 = vmul.f32 %v68, %v3192
    %v3342 = vmul.f32 %v69, %v3198
    %v3343 = vmul.f32 %v70, %v3204
    %v3344 = vmul.f32 %v71, %v3211
    %v3345 = vmul.f32 %v72, %v3217
    %v3346 = vmul.f32 %v73, %v3224
    %v3347 = vmul.f32 %v74, %v3230
    %v3348 = vmul.f32 %v75, %v3236
    %v3349 = vmul.f32 %v76, %v3242
    %v3350 = vmul.f32 %v77, %v3248
    %v3351 = vmul.f32 %v78, %v3254
    %v3352 = vmul.f32 %v79, %v3260
    %v3353 = vmul.f32 %v80, %v3266
    %v3354 = vmul.f32 %v81, %v3272
    %v3355 = vmul.f32 %v82, %v3278
    %v3356 = vmul.f32 %v83, %v3284
    %v3357 = vmul.f32 %v84, %v3290
    %v3358 = vmul.f32 %v85, %v3296
    %v3359 = vmul.f32 %v86, %v3302
    %v3360 = vmul.f32 %v87, %v3308
    %v3361 = vmul.f32 %v88, %v3314
    %v3362 = vmul.f32 %v89, %v3321
    %v3363 = vmul.f32 %v90, %v3327
    %v3364 = vperm.slane %v3106, 0
    %v3365 = vlaneseq
    %v3366 = vshrl.u32 %v3365, 7
    %3368 = vset.pattern.permute.xlu0 %v3366
    %3369 = vperm.xlu0 %3368, %v3364
    %v3370 = vpop.permute.xlu0 %3369
    %v3371 = vlaneseq
    %v3372 = vshrl.u32 %v3371, 7
    %v3373 = vadd.s32 %v3372, 8
    %3374 = vset.pattern.permute.xlu0 %v3373
    %3375 = vperm.xlu0 %3374, %v3364
    %v3376 = vpop.permute.xlu0 %3375
    %v3377 = vlaneseq
    %v3378 = vshrl.u32 %v3377, 7
    %v3379 = vadd.s32 %v3378, 16
    %3380 = vset.pattern.permute.xlu0 %v3379
    %3381 = vperm.xlu0 %3380, %v3364
    %v3382 = vpop.permute.xlu0 %3381
    %v3383 = vlaneseq
    %v3384 = vshrl.u32 %v3383, 7
    %v3385 = vadd.s32 %v3384, 24
    %3386 = vset.pattern.permute.xlu0 %v3385
    %3387 = vperm.xlu0 %3386, %v3364
    %v3388 = vpop.permute.xlu0 %3387
    %v3389 = vlaneseq
    %v3390 = vshrl.u32 %v3389, 7
    %v3391 = vadd.s32 %v3390, 32
    %3392 = vset.pattern.permute.xlu0 %v3391
    %3393 = vperm.xlu0 %3392, %v3364
    %v3394 = vpop.permute.xlu0 %3393
    %v3395 = vlaneseq
    %v3396 = vshrl.u32 %v3395, 7
    %v3397 = vadd.s32 %v3396, 40
    %3398 = vset.pattern.permute.xlu0 %v3397
    %3399 = vperm.xlu0 %3398, %v3364
    %v3400 = vpop.permute.xlu0 %3399
    %v3401 = vlaneseq
    %v3402 = vshrl.u32 %v3401, 7
    %v3403 = vadd.s32 %v3402, 48
    %3404 = vset.pattern.permute.xlu0 %v3403
    %3405 = vperm.xlu0 %3404, %v3364
    %v3406 = vpop.permute.xlu0 %3405
    %v3407 = vlaneseq
    %v3408 = vshrl.u32 %v3407, 7
    %v3409 = vadd.s32 %v3408, 56
    %3410 = vset.pattern.permute.xlu0 %v3409
    %3411 = vperm.xlu0 %3410, %v3364
    %v3412 = vpop.permute.xlu0 %3411
    %v3413 = vlaneseq
    %v3414 = vshrl.u32 %v3413, 7
    %v3415 = vadd.s32 %v3414, 64
    %3416 = vset.pattern.permute.xlu0 %v3415
    %3417 = vperm.xlu0 %3416, %v3364
    %v3418 = vpop.permute.xlu0 %3417
    %v3419 = vlaneseq
    %v3420 = vshrl.u32 %v3419, 7
    %v3421 = vadd.s32 %v3420, 72
    %3422 = vset.pattern.permute.xlu0 %v3421
    %3423 = vperm.xlu0 %3422, %v3364
    %v3424 = vpop.permute.xlu0 %3423
    %v3425 = vlaneseq
    %v3426 = vshrl.u32 %v3425, 7
    %v3427 = vadd.s32 %v3426, 80
    %3428 = vset.pattern.permute.xlu0 %v3427
    %3429 = vperm.xlu0 %3428, %v3364
    %v3430 = vpop.permute.xlu0 %3429
    %v3431 = vlaneseq
    %v3432 = vshrl.u32 %v3431, 7
    %v3433 = vadd.s32 %v3432, 88
    %3434 = vset.pattern.permute.xlu0 %v3433
    %3435 = vperm.xlu0 %3434, %v3364
    %v3436 = vpop.permute.xlu0 %3435
    %v3437 = vlaneseq
    %v3438 = vshrl.u32 %v3437, 7
    %v3439 = vadd.s32 %v3438, 96
    %3440 = vset.pattern.permute.xlu0 %v3439
    %3441 = vperm.xlu0 %3440, %v3364
    %v3442 = vpop.permute.xlu0 %3441
    %v3443 = vlaneseq
    %v3444 = vshrl.u32 %v3443, 7
    %v3445 = vadd.s32 %v3444, 104
    %3446 = vset.pattern.permute.xlu0 %v3445
    %3447 = vperm.xlu0 %3446, %v3364
    %v3448 = vpop.permute.xlu0 %3447
    %v3449 = vlaneseq
    %v3450 = vshrl.u32 %v3449, 7
    %v3451 = vadd.s32 %v3450, 112
    %3452 = vset.pattern.permute.xlu0 %v3451
    %3453 = vperm.xlu0 %3452, %v3364
    %v3454 = vpop.permute.xlu0 %3453
    %v3455 = vlaneseq
    %v3456 = vshrl.u32 %v3455, 7
    %v3457 = vadd.s32 %v3456, 120
    %3458 = vset.pattern.permute.xlu0 %v3457
    %3459 = vperm.xlu0 %3458, %v3364
    %v3460 = vpop.permute.xlu0 %3459
    %v3461 = vperm.slane %v3107, 0
    %v3462 = vlaneseq
    %v3463 = vshrl.u32 %v3462, 7
    %3465 = vset.pattern.permute.xlu0 %v3463
    %3466 = vperm.xlu0 %3465, %v3461
    %v3467 = vpop.permute.xlu0 %3466
    %v3468 = vlaneseq
    %v3469 = vshrl.u32 %v3468, 7
    %v3470 = vadd.s32 %v3469, 8
    %3471 = vset.pattern.permute.xlu0 %v3470
    %3472 = vperm.xlu0 %3471, %v3461
    %v3473 = vpop.permute.xlu0 %3472
    %v3474 = vperm.slane %v3106, 1
    %v3475 = vlaneseq
    %v3476 = vshrl.u32 %v3475, 7
    %3478 = vset.pattern.permute.xlu0 %v3476
    %3479 = vperm.xlu0 %3478, %v3474
    %v3480 = vpop.permute.xlu0 %3479
    %v3481 = vlaneseq
    %v3482 = vshrl.u32 %v3481, 7
    %v3483 = vadd.s32 %v3482, 8
    %3484 = vset.pattern.permute.xlu0 %v3483
    %3485 = vperm.xlu0 %3484, %v3474
    %v3486 = vpop.permute.xlu0 %3485
    %v3487 = vlaneseq
    %v3488 = vshrl.u32 %v3487, 7
    %v3489 = vadd.s32 %v3488, 16
    %3490 = vset.pattern.permute.xlu0 %v3489
    %3491 = vperm.xlu0 %3490, %v3474
    %v3492 = vpop.permute.xlu0 %3491
    %v3493 = vlaneseq
    %v3494 = vshrl.u32 %v3493, 7
    %v3495 = vadd.s32 %v3494, 24
    %3496 = vset.pattern.permute.xlu0 %v3495
    %3497 = vperm.xlu0 %3496, %v3474
    %v3498 = vpop.permute.xlu0 %3497
    %v3499 = vlaneseq
    %v3500 = vshrl.u32 %v3499, 7
    %v3501 = vadd.s32 %v3500, 32
    %3502 = vset.pattern.permute.xlu0 %v3501
    %3503 = vperm.xlu0 %3502, %v3474
    %v3504 = vpop.permute.xlu0 %3503
    %v3505 = vlaneseq
    %v3506 = vshrl.u32 %v3505, 7
    %v3507 = vadd.s32 %v3506, 40
    %3508 = vset.pattern.permute.xlu0 %v3507
    %3509 = vperm.xlu0 %3508, %v3474
    %v3510 = vpop.permute.xlu0 %3509
    %v3511 = vlaneseq
    %v3512 = vshrl.u32 %v3511, 7
    %v3513 = vadd.s32 %v3512, 48
    %3514 = vset.pattern.permute.xlu0 %v3513
    %3515 = vperm.xlu0 %3514, %v3474
    %v3516 = vpop.permute.xlu0 %3515
    %v3517 = vlaneseq
    %v3518 = vshrl.u32 %v3517, 7
    %v3519 = vadd.s32 %v3518, 56
    %3520 = vset.pattern.permute.xlu0 %v3519
    %3521 = vperm.xlu0 %3520, %v3474
    %v3522 = vpop.permute.xlu0 %3521
    %v3523 = vlaneseq
    %v3524 = vshrl.u32 %v3523, 7
    %v3525 = vadd.s32 %v3524, 64
    %3526 = vset.pattern.permute.xlu0 %v3525
    %3527 = vperm.xlu0 %3526, %v3474
    %v3528 = vpop.permute.xlu0 %3527
    %v3529 = vlaneseq
    %v3530 = vshrl.u32 %v3529, 7
    %v3531 = vadd.s32 %v3530, 72
    %3532 = vset.pattern.permute.xlu0 %v3531
    %3533 = vperm.xlu0 %3532, %v3474
    %v3534 = vpop.permute.xlu0 %3533
    %v3535 = vlaneseq
    %v3536 = vshrl.u32 %v3535, 7
    %v3537 = vadd.s32 %v3536, 80
    %3538 = vset.pattern.permute.xlu0 %v3537
    %3539 = vperm.xlu0 %3538, %v3474
    %v3540 = vpop.permute.xlu0 %3539
    %v3541 = vlaneseq
    %v3542 = vshrl.u32 %v3541, 7
    %v3543 = vadd.s32 %v3542, 88
    %3544 = vset.pattern.permute.xlu0 %v3543
    %3545 = vperm.xlu0 %3544, %v3474
    %v3546 = vpop.permute.xlu0 %3545
    %v3547 = vlaneseq
    %v3548 = vshrl.u32 %v3547, 7
    %v3549 = vadd.s32 %v3548, 96
    %3550 = vset.pattern.permute.xlu0 %v3549
    %3551 = vperm.xlu0 %3550, %v3474
    %v3552 = vpop.permute.xlu0 %3551
    %v3553 = vlaneseq
    %v3554 = vshrl.u32 %v3553, 7
    %v3555 = vadd.s32 %v3554, 104
    %3556 = vset.pattern.permute.xlu0 %v3555
    %3557 = vperm.xlu0 %3556, %v3474
    %v3558 = vpop.permute.xlu0 %3557
    %v3559 = vlaneseq
    %v3560 = vshrl.u32 %v3559, 7
    %v3561 = vadd.s32 %v3560, 112
    %3562 = vset.pattern.permute.xlu0 %v3561
    %3563 = vperm.xlu0 %3562, %v3474
    %v3564 = vpop.permute.xlu0 %3563
    %v3565 = vlaneseq
    %v3566 = vshrl.u32 %v3565, 7
    %v3567 = vadd.s32 %v3566, 120
    %3568 = vset.pattern.permute.xlu0 %v3567
    %3569 = vperm.xlu0 %3568, %v3474
    %v3570 = vpop.permute.xlu0 %3569
    %v3571 = vperm.slane %v3107, 1
    %v3572 = vlaneseq
    %v3573 = vshrl.u32 %v3572, 7
    %3575 = vset.pattern.permute.xlu0 %v3573
    %3576 = vperm.xlu0 %3575, %v3571
    %v3577 = vpop.permute.xlu0 %3576
    %v3578 = vlaneseq
    %v3579 = vshrl.u32 %v3578, 7
    %v3580 = vadd.s32 %v3579, 8
    %3581 = vset.pattern.permute.xlu0 %v3580
    %3582 = vperm.xlu0 %3581, %v3571
    %v3583 = vpop.permute.xlu0 %3582
    %v3584 = vsub.f32 %v3328, %v3370
    %v3585 = vsub.f32 %v3329, %v3376
    %v3586 = vsub.f32 %v3330, %v3382
    %v3587 = vsub.f32 %v3331, %v3388
    %v3588 = vsub.f32 %v3332, %v3394
    %v3589 = vsub.f32 %v3333, %v3400
    %v3590 = vsub.f32 %v3334, %v3406
    %v3591 = vsub.f32 %v3335, %v3412
    %v3592 = vsub.f32 %v3336, %v3418
    %v3593 = vsub.f32 %v3337, %v3424
    %v3594 = vsub.f32 %v3338, %v3430
    %v3595 = vsub.f32 %v3339, %v3436
    %v3596 = vsub.f32 %v3340, %v3442
    %v3597 = vsub.f32 %v3341, %v3448
    %v3598 = vsub.f32 %v3342, %v3454
    %v3599 = vsub.f32 %v3343, %v3460
    %v3600 = vsub.f32 %v3344, %v3467
    %v3601 = vsub.f32 %v3345, %v3473
    %v3602 = vsub.f32 %v3346, %v3480
    %v3603 = vsub.f32 %v3347, %v3486
    %v3604 = vsub.f32 %v3348, %v3492
    %v3605 = vsub.f32 %v3349, %v3498
    %v3606 = vsub.f32 %v3350, %v3504
    %v3607 = vsub.f32 %v3351, %v3510
    %v3608 = vsub.f32 %v3352, %v3516
    %v3609 = vsub.f32 %v3353, %v3522
    %v3610 = vsub.f32 %v3354, %v3528
    %v3611 = vsub.f32 %v3355, %v3534
    %v3612 = vsub.f32 %v3356, %v3540
    %v3613 = vsub.f32 %v3357, %v3546
    %v3614 = vsub.f32 %v3358, %v3552
    %v3615 = vsub.f32 %v3359, %v3558
    %v3616 = vsub.f32 %v3360, %v3564
    %v3617 = vsub.f32 %v3361, %v3570
    %v3618 = vsub.f32 %v3362, %v3577
    %v3619 = vsub.f32 %v3363, %v3583
    %3620 = vst.msk [vmem:[%s5] sm:$0xff] %vm91, %v3584
    %3621 = vst.msk [vmem:[%s5 + $0x8] sm:$0xff] %vm91, %v3585
    %3622 = vst.msk [vmem:[%s5 + $0x10] sm:$0xff] %vm91, %v3586
    %3623 = vst.msk [vmem:[%s5 + $0x18] sm:$0xff] %vm91, %v3587
    %3624 = vst.msk [vmem:[%s5 + $0x20] sm:$0xff] %vm91, %v3588
    %3625 = vst.msk [vmem:[%s5 + $0x28] sm:$0xff] %vm91, %v3589
    %3626 = vst.msk [vmem:[%s5 + $0x30] sm:$0xff] %vm91, %v3590
    %3627 = vst.msk [vmem:[%s5 + $0x38] sm:$0xff] %vm91, %v3591
    %3628 = vst.msk [vmem:[%s5 + $0x40] sm:$0xff] %vm91, %v3592
    %3629 = vst.msk [vmem:[%s5 + $0x48] sm:$0xff] %vm91, %v3593
    %3630 = vst.msk [vmem:[%s5 + $0x50] sm:$0xff] %vm91, %v3594
    %3631 = vst.msk [vmem:[%s5 + $0x58] sm:$0xff] %vm91, %v3595
    %3632 = vst.msk [vmem:[%s5 + $0x60] sm:$0xff] %vm91, %v3596
    %3633 = vst.msk [vmem:[%s5 + $0x68] sm:$0xff] %vm91, %v3597
    %3634 = vst.msk [vmem:[%s5 + $0x70] sm:$0xff] %vm91, %v3598
    %3635 = vst.msk [vmem:[%s5 + $0x78] sm:$0xff] %vm91, %v3599
    %3636 = vst.msk [vmem:[%s5 + $0x80] sm:$0xff] %vm91, %v3600
    %3637 = vst.msk [vmem:[%s5 + $0x88] sm:$0xff] %vm91, %v3601
    %3638 = vst.msk [vmem:[%s5 + $0x90] sm:$0xff] %vm91, %v3602
    %3639 = vst.msk [vmem:[%s5 + $0x98] sm:$0xff] %vm91, %v3603
    %3640 = vst.msk [vmem:[%s5 + $0xa0] sm:$0xff] %vm91, %v3604
    %3641 = vst.msk [vmem:[%s5 + $0xa8] sm:$0xff] %vm91, %v3605
    %3642 = vst.msk [vmem:[%s5 + $0xb0] sm:$0xff] %vm91, %v3606
    %3643 = vst.msk [vmem:[%s5 + $0xb8] sm:$0xff] %vm91, %v3607
    %3644 = vst.msk [vmem:[%s5 + $0xc0] sm:$0xff] %vm91, %v3608
    %3645 = vst.msk [vmem:[%s5 + $0xc8] sm:$0xff] %vm91, %v3609
    %3646 = vst.msk [vmem:[%s5 + $0xd0] sm:$0xff] %vm91, %v3610
    %3647 = vst.msk [vmem:[%s5 + $0xd8] sm:$0xff] %vm91, %v3611
    %3648 = vst.msk [vmem:[%s5 + $0xe0] sm:$0xff] %vm91, %v3612
    %3649 = vst.msk [vmem:[%s5 + $0xe8] sm:$0xff] %vm91, %v3613
    %3650 = vst.msk [vmem:[%s5 + $0xf0] sm:$0xff] %vm91, %v3614
    %3651 = vst.msk [vmem:[%s5 + $0xf8] sm:$0xff] %vm91, %v3615
    %3652 = vst.msk [vmem:[%s5 + $0x100] sm:$0xff] %vm91, %v3616
    %3653 = vst.msk [vmem:[%s5 + $0x108] sm:$0xff] %vm91, %v3617
    %3654 = vst.msk [vmem:[%s5 + $0x110] sm:$0xff] %vm91, %v3618
    %3655 = vst.msk [vmem:[%s5 + $0x118] sm:$0xff] %vm91, %v3619
    %v3658 = vrot.slane %v3103, 6
    %vm3659 = vcmask 1041408
    %v3660 = vsel %vm3659, %v3088, %v3658
    %vm3662 = vcmask 125954
    %vm3663 = vmor %vm3662, %vm3659
    %3664 = vst.msk [vmem:[#allocation7] sm:$0xf] %vm3663, %v3660
    // Predicated region
    $region30: #{tpu_custom_call.1} parent=1 // pred_check
      _
    $region31: #{tpu_custom_call.1} parent=1 // pred_check_branch
      %3666 = sbr.rel (0) target = $region33
    $region32: #{tpu_custom_call.1} parent=1 // pred_region
      _
    $region33: #{tpu_custom_call.1} parent=1 // pred_fallthru
      _
    // Predicated region
    $region34: #{tpu_custom_call.1} parent=1 // pred_check
      _
    $region35: #{tpu_custom_call.1} parent=1 // pred_check_branch
      %3668 = sbr.rel (0) target = $region37
    $region36: #{tpu_custom_call.1} parent=1 // pred_region
      %3670 = vsyncadd [#allocation4], 0
      %s3672 = sshll.u32 [#allocation7], 4
      %s3673 = int_to_ptr.vmem [resolvable:$true] %s3672
      %s3674 = sshll.u32 %s6, 4
      %s3675 = int_to_ptr.hbm [resolvable:$true] %s3674
      %3677 = dma.vmem_to_hbm [thread:$0]  %s3673, 64, %s3675, [#allocation4]
    $region37: #{tpu_custom_call.1} parent=1 // pred_fallthru
      _
    // Predicated region
    $region38: #{tpu_custom_call.1} parent=1 // pred_check
      _
    $region39: #{tpu_custom_call.1} parent=1 // pred_check_branch
      %3679 = sbr.rel (0) target = $region41
    $region40: #{tpu_custom_call.1} parent=1 // pred_region
      _
    $region41: #{tpu_custom_call.1} parent=1 // pred_fallthru
      _
    // Predicated region
    $region42: #{tpu_custom_call.1} parent=1 // pred_check
      _
    $region43: #{tpu_custom_call.1} parent=1 // pred_check_branch
      %3681 = sbr.rel (0) target = $region45
    $region44: #{tpu_custom_call.1} parent=1 // pred_region
      %3683 = dma.done [#allocation4], 64
    $region45: #{tpu_custom_call.1} parent=1 // pred_fallthru
      _
    %3684 = vsyncpa [#allocation3], 1
    %3685 = vsyncpa [#allocation6], 1
    %3686 = vsyncpa [#allocation4], 1

</llo_original>
